<compile_context>
chip_gen: v7x
topology: tpu7x:2x2x1
jax: 0.10.0
libtpu: 0.0.40
codegen_flags: <defaults>
</compile_context>

<pallas_src>
import functools

import numpy as np
import jax
import jax.numpy as jnp
from jax.experimental import pallas as pl
from jax.experimental.pallas import tpu as pltpu


H_OUT, W_OUT = 9, 16   # reconstructed heatmap size (mirrors encoder stand-in)
C1 = 32                # channels produced by the ConvTranspose1d stage


def _round_up(x, m):
    return ((x + m - 1) // m) * m


# ----------------------------------------------------------------------------
# Fused decoder kernel: 4 matmul+bias+activation stages, everything in VMEM.
# ----------------------------------------------------------------------------
def _decoder_kernel(x_ref, w1_ref, b1_ref, w2_ref, b2_ref, w3_ref, b3_ref,
                    w4_ref, b4_ref, o_ref, h_scr, *, T, Bp):
    x = x_ref[...]                                               # (Bp, Cin) bf16

    # Layer 1 (ConvTranspose1d, length 1 -> T): ONE matmul for all T frames.
    # w1 columns are ordered (t, co).
    h1 = jnp.dot(x, w1_ref[...], preferred_element_type=jnp.float32)
    h1 = jnp.maximum(h1 + b1_ref[...], 0.0).astype(jnp.bfloat16)  # (Bp, T*C1)

    # Fold T into the matmul M dim: (Bp, T*C1) -> (T*Bp, C1), t-major rows.
    for t in range(T):                     # static; T tiny lane-slice copies
        h_scr[pl.ds(t * Bp, Bp), :] = h1[:, t * C1:(t + 1) * C1]
    h = h_scr[...]                                               # (T*Bp, C1) bf16

    # Layers 2-4: a single M = T*Bp matmul each (was T small M=Bp matmuls).
    h = jnp.dot(h, w2_ref[...], preferred_element_type=jnp.float32) + b2_ref[...]
    h = jnp.maximum(h, 0.0).astype(jnp.bfloat16)                 # (T*Bp, 288)
    h = jnp.dot(h, w3_ref[...], preferred_element_type=jnp.float32) + b3_ref[...]
    h = jnp.maximum(h, 0.0).astype(jnp.bfloat16)                 # (T*Bp, 784)
    h = jnp.dot(h, w4_ref[...], preferred_element_type=jnp.float32) + b4_ref[...]

    # Sigmoid epilogue: exp and approx reciprocal both ride the EUP slot.
    y = pl.reciprocal(1.0 + jnp.exp(-h), approx=True)            # (T*Bp, 144) f32
    o_ref[...] = jnp.minimum(y, 1.0)     # clamp approx overshoot; single store


# ----------------------------------------------------------------------------
# Init-time weight layout (NOT in the per-forward path).
# ----------------------------------------------------------------------------
def _init_tconv(key, cin, cout, ks):
    """PyTorch ConvTranspose{1,2}d raw weight (Cin, Cout, *ks) + bias (Cout,)."""
    fan_in = cin
    for k in ks:
        fan_in *= k
    bound = 1.0 / (fan_in ** 0.5)
    kw_, kb_ = jax.random.split(key)
    w = jax.random.uniform(kw_, (cin, cout, *ks), jnp.float32, -bound, bound)
    b = jax.random.uniform(kb_, (cout,), jnp.float32, -bound, bound)
    return w, b


def _unroll_tconv2d(w, in_hw, stride, out_hw):
    """Unroll a ConvTranspose2d into a dense (Cin*iH*iW, Cout*oH*oW) matrix.

    Row order (ci, iy, ix), col order (co, oy, ox) — matches the flat
    activation layout inside the kernel. Built once at init (host numpy).
    """
    w = np.asarray(w, np.float32)                    # (Cin, Cout, kh, kw)
    cin, cout, kh, kw = w.shape
    iH, iW = in_hw
    sH, sW = stride
    oH, oW = out_hw
    M = np.zeros((cin, iH, iW, cout, oH, oW), np.float32)
    for iy in range(iH):
        for ix in range(iW):
            for ky in range(kh):
                for kx in range(kw):
                    oy, ox = iy * sH + ky, ix * sW + kx
                    if oy < oH and ox < oW:
                        M[:, iy, ix, :, oy, ox] += w[:, :, ky, kx]
    return jnp.asarray(M.reshape(cin * iH * iW, cout * oH * oW))


def init_params(key, input_size, T=8):
    k1, k2, k3, k4 = jax.random.split(key, 4)
    w1, b1 = _init_tconv(k1, input_size, C1, (T,))   # ConvTranspose1d, 1 -> T
    w2, b2 = _init_tconv(k2, C1, 16, (3, 6))         # 1x1  -> 3x6
    w3, b3 = _init_tconv(k3, 16, 8, (3, 3))          # 3x6  -> 7x14 (s=2, op=(0,1))
    w4, b4 = _init_tconv(k4, 8, 1, (3, 3))           # 7x14 -> 9x16

    p = {}
    # layer 1: single (Cin, T*C1) matrix, columns ordered (t, co):
    #   w1_flat[ci, t*C1 + co] = w1[ci, co, t]
    p["w1"] = jnp.transpose(w1, (0, 2, 1)).reshape(input_size, T * C1).astype(jnp.bfloat16)
    p["b1"] = jnp.tile(b1, T).reshape(1, -1).astype(jnp.float32)          # (1, T*C1)
    # layer 2: 1x1 input -> pure linear map to (co, oy, ox) flat output
    p["w2"] = w2.reshape(C1, 16 * 3 * 6).astype(jnp.bfloat16)             # (32, 288)
    p["b2"] = jnp.repeat(b2, 3 * 6).reshape(1, -1).astype(jnp.float32)
    # layer 3 / 4: transposed convs unrolled once into dense matrices
    p["w3"] = _unroll_tconv2d(w3, (3, 6), (2, 2), (7, 14)).astype(jnp.bfloat16)   # (288, 784)
    p["b3"] = jnp.repeat(b3, 7 * 14).reshape(1, -1).astype(jnp.float32)
    p["w4"] = _unroll_tconv2d(w4, (7, 14), (1, 1), (H_OUT, W_OUT)).astype(jnp.bfloat16)  # (784, 144)
    p["b4"] = jnp.repeat(b4, H_OUT * W_OUT).reshape(1, -1).astype(jnp.float32)
    return p


# ----------------------------------------------------------------------------
# Forward: mirrors CNN_2D_1D_Decoder.forward (unsqueeze -> decoder -> sigmoid)
# ----------------------------------------------------------------------------
def cnn_2d_1d_decoder_forward(params, x):
    """x: (B, input_size) latent. Returns (B, T, 9, 16) in (0, 1)."""
    B, cin = x.shape
    cin_w, tc1 = params["w1"].shape
    assert cin == cin_w
    T = tc1 // C1
    n2 = params["w2"].shape[1]
    n3 = params["w3"].shape[1]
    n4 = params["w4"].shape[1]

    # Pad the (tiny) batch once to a bf16-friendly sublane multiple; cast to
    # bf16 here so the kernel ships half the latent bytes and skips a convert.
    Bp = max(16, _round_up(B, 16))
    x_p = jnp.zeros((Bp, cin), jnp.bfloat16).at[:B, :].set(x.astype(jnp.bfloat16))

    M = T * Bp
    flops = 2 * (Bp * cin * tc1 + M * (C1 * n2 + n2 * n3 + n3 * n4))
    transcendentals = 2 * M * n4
    bytes_accessed = (
        int(x_p.size) * 2
        + sum(int(params[k].size) * 2 for k in ("w1", "w2", "w3", "w4"))
        + sum(int(params[k].size) * 4 for k in ("b1", "b2", "b3", "b4"))
        + M * n4 * 4
    )

    out = pl.pallas_call(
        functools.partial(_decoder_kernel, T=T, Bp=Bp),
        out_shape=jax.ShapeDtypeStruct((M, n4), jnp.float32),
        in_specs=[
            pl.BlockSpec((Bp, cin), lambda: (0, 0)),
            pl.BlockSpec(params["w1"].shape, lambda: (0, 0)),
            pl.BlockSpec(params["b1"].shape, lambda: (0, 0)),
            pl.BlockSpec(params["w2"].shape, lambda: (0, 0)),
            pl.BlockSpec(params["b2"].shape, lambda: (0, 0)),
            pl.BlockSpec(params["w3"].shape, lambda: (0, 0)),
            pl.BlockSpec(params["b3"].shape, lambda: (0, 0)),
            pl.BlockSpec(params["w4"].shape, lambda: (0, 0)),
            pl.BlockSpec(params["b4"].shape, lambda: (0, 0)),
        ],
        out_specs=pl.BlockSpec((M, n4), lambda: (0, 0)),
        scratch_shapes=[pltpu.VMEM((M, C1), jnp.bfloat16)],
        compiler_params=pltpu.CompilerParams(vmem_limit_bytes=8 << 20),
        cost_estimate=pl.CostEstimate(
            flops=flops,
            transcendentals=transcendentals,
            bytes_accessed=bytes_accessed),
    )(x_p, params["w1"], params["b1"], params["w2"], params["b2"],
      params["w3"], params["b3"], params["w4"], params["b4"])

    # Rows are t-major: row = t*Bp + b. Reassemble (B, T, 9, 16) once here.
    out = out.reshape(T, Bp, n4)[:, :B]                    # (T, B, H*W)
    return out.transpose(1, 0, 2).reshape(B, T, H_OUT, W_OUT)


# ----------------------------------------------------------------------------
# Pure-JAX reference (same bf16/f32 numerics) for a one-time correctness check.
# ----------------------------------------------------------------------------
def _reference_forward(params, x):
    B = x.shape[0]
    T = params["w1"].shape[1] // C1
    xb = x.astype(jnp.bfloat16)
    h = jnp.dot(xb, params["w1"], preferred_element_type=jnp.float32) + params["b1"]
    h = jnp.maximum(h, 0.0).astype(jnp.bfloat16)           # (B, T*C1), cols (t, co)
    h = h.reshape(B * T, C1)                                # rows b-major (b, t)
    h = jnp.dot(h, params["w2"], preferred_element_type=jnp.float32) + params["b2"]
    h = jnp.maximum(h, 0.0).astype(jnp.bfloat16)
    h = jnp.dot(h, params["w3"], preferred_element_type=jnp.float32) + params["b3"]
    h = jnp.maximum(h, 0.0).astype(jnp.bfloat16)
    h = jnp.dot(h, params["w4"], preferred_element_type=jnp.float32) + params["b4"]
    y = 1.0 / (1.0 + jnp.exp(-h))
    return y.reshape(B, T, H_OUT, W_OUT)


if __name__ == "__main__":
    B = 2
    input_size = 32       # latent dim fed to the decoder
    T = 8                 # decoded sequence length

    key = jax.random.PRNGKey(0)
    k_params, k_x = jax.random.split(key)
    params = init_params(k_params, input_size, T=T)
    x = jax.random.normal(k_x, (B, input_size), jnp.float32)

    out = jax.jit(cnn_2d_1d_decoder_forward)(params, x)
    out = jax.block_until_ready(out)

    assert out.shape == (B, T, H_OUT, W_OUT), out.shape
    assert bool(jnp.all(jnp.isfinite(out)))
    assert bool(jnp.all((out >= 0.0) & (out <= 1.0)))       # sigmoid range

    ref = _reference_forward(params, x)
    max_err = float(jnp.max(jnp.abs(out - ref)))
    assert max_err <= 2e-2, max_err                         # approx-recip tolerance

    print("KERNEL_OK")
</pallas_src>

<mosaic_0001>
module attributes {stable_mosaic.version = 11 : i64} {
  func.func @_decoder_kernel(%arg0: memref<16x32xbf16, #tpu.memory_space<vmem>>, %arg1: memref<32x256xbf16, #tpu.memory_space<vmem>>, %arg2: memref<1x256xf32, #tpu.memory_space<vmem>>, %arg3: memref<32x288xbf16, #tpu.memory_space<vmem>>, %arg4: memref<1x288xf32, #tpu.memory_space<vmem>>, %arg5: memref<288x784xbf16, #tpu.memory_space<vmem>>, %arg6: memref<1x784xf32, #tpu.memory_space<vmem>>, %arg7: memref<784x144xbf16, #tpu.memory_space<vmem>>, %arg8: memref<1x144xf32, #tpu.memory_space<vmem>>, %arg9: memref<128x144xf32, #tpu.memory_space<vmem>>, %arg10: memref<128x32xbf16, #tpu.memory_space<vmem>>) attributes {dimension_semantics = [], scalar_prefetch = 0 : i64, scratch_operands = 1 : i64, tpu.core_type = #tpu.core_type<tc>} {
    %c0 = arith.constant 0 : index
    %c0_0 = arith.constant 0 : index
    %0 = vector.load %arg0[%c0, %c0_0] : memref<16x32xbf16, #tpu.memory_space<vmem>>, vector<16x32xbf16>
    %c0_1 = arith.constant 0 : index
    %c0_2 = arith.constant 0 : index
    %1 = vector.load %arg1[%c0_1, %c0_2] : memref<32x256xbf16, #tpu.memory_space<vmem>>, vector<32x256xbf16>
    %cst = arith.constant dense<0.000000e+00> : vector<16x256xf32>
    %2 = tpu.matmul %0, %1, %cst {dimension_numbers = #tpu.dot_dimension_numbers<[1], [0], [0], [1], [0, 0, 1, 1], [], []>} : vector<16x32xbf16>, vector<32x256xbf16>, vector<16x256xf32> -> vector<16x256xf32>
    %c0_3 = arith.constant 0 : index
    %c0_4 = arith.constant 0 : index
    %3 = vector.load %arg2[%c0_3, %c0_4] : memref<1x256xf32, #tpu.memory_space<vmem>>, vector<1x256xf32>
    %4 = vector.broadcast %3 : vector<1x256xf32> to vector<16x256xf32>
    %5 = arith.addf %2, %4 : vector<16x256xf32>
    %cst_5 = arith.constant 0.000000e+00 : f32
    %6 = vector.broadcast %cst_5 : f32 to vector<16x256xf32>
    %7 = arith.maximumf %5, %6 : vector<16x256xf32>
    %8 = arith.truncf %7 : vector<16x256xf32> to vector<16x256xbf16>
    %9 = vector.extract_strided_slice %8 {offsets = [0, 0], sizes = [16, 32], strides = [1, 1]} : vector<16x256xbf16> to vector<16x32xbf16>
    %c0_6 = arith.constant 0 : index
    %c0_7 = arith.constant 0 : index
    %10 = vector.load %arg10[%c0_6, %c0_7] : memref<128x32xbf16, #tpu.memory_space<vmem>>, vector<16x32xbf16>
    tpu.vector_store %arg10[%c0_6, %c0_7], %9 {strides = array<i32>} : memref<128x32xbf16, #tpu.memory_space<vmem>>, vector<16x32xbf16>,
    %11 = vector.extract_strided_slice %8 {offsets = [0, 32], sizes = [16, 32], strides = [1, 1]} : vector<16x256xbf16> to vector<16x32xbf16>
    %c16 = arith.constant 16 : index
    %c0_8 = arith.constant 0 : index
    %12 = vector.load %arg10[%c16, %c0_8] : memref<128x32xbf16, #tpu.memory_space<vmem>>, vector<16x32xbf16>
    tpu.vector_store %arg10[%c16, %c0_8], %11 {strides = array<i32>} : memref<128x32xbf16, #tpu.memory_space<vmem>>, vector<16x32xbf16>,
    %13 = vector.extract_strided_slice %8 {offsets = [0, 64], sizes = [16, 32], strides = [1, 1]} : vector<16x256xbf16> to vector<16x32xbf16>
    %c32 = arith.constant 32 : index
    %c0_9 = arith.constant 0 : index
    %14 = vector.load %arg10[%c32, %c0_9] : memref<128x32xbf16, #tpu.memory_space<vmem>>, vector<16x32xbf16>
    tpu.vector_store %arg10[%c32, %c0_9], %13 {strides = array<i32>} : memref<128x32xbf16, #tpu.memory_space<vmem>>, vector<16x32xbf16>,
    %15 = vector.extract_strided_slice %8 {offsets = [0, 96], sizes = [16, 32], strides = [1, 1]} : vector<16x256xbf16> to vector<16x32xbf16>
    %c48 = arith.constant 48 : index
    %c0_10 = arith.constant 0 : index
    %16 = vector.load %arg10[%c48, %c0_10] : memref<128x32xbf16, #tpu.memory_space<vmem>>, vector<16x32xbf16>
    tpu.vector_store %arg10[%c48, %c0_10], %15 {strides = array<i32>} : memref<128x32xbf16, #tpu.memory_space<vmem>>, vector<16x32xbf16>,
    %17 = vector.extract_strided_slice %8 {offsets = [0, 128], sizes = [16, 32], strides = [1, 1]} : vector<16x256xbf16> to vector<16x32xbf16>
    %c64 = arith.constant 64 : index
    %c0_11 = arith.constant 0 : index
    %18 = vector.load %arg10[%c64, %c0_11] : memref<128x32xbf16, #tpu.memory_space<vmem>>, vector<16x32xbf16>
    tpu.vector_store %arg10[%c64, %c0_11], %17 {strides = array<i32>} : memref<128x32xbf16, #tpu.memory_space<vmem>>, vector<16x32xbf16>,
    %19 = vector.extract_strided_slice %8 {offsets = [0, 160], sizes = [16, 32], strides = [1, 1]} : vector<16x256xbf16> to vector<16x32xbf16>
    %c80 = arith.constant 80 : index
    %c0_12 = arith.constant 0 : index
    %20 = vector.load %arg10[%c80, %c0_12] : memref<128x32xbf16, #tpu.memory_space<vmem>>, vector<16x32xbf16>
    tpu.vector_store %arg10[%c80, %c0_12], %19 {strides = array<i32>} : memref<128x32xbf16, #tpu.memory_space<vmem>>, vector<16x32xbf16>,
    %21 = vector.extract_strided_slice %8 {offsets = [0, 192], sizes = [16, 32], strides = [1, 1]} : vector<16x256xbf16> to vector<16x32xbf16>
    %c96 = arith.constant 96 : index
    %c0_13 = arith.constant 0 : index
    %22 = vector.load %arg10[%c96, %c0_13] : memref<128x32xbf16, #tpu.memory_space<vmem>>, vector<16x32xbf16>
    tpu.vector_store %arg10[%c96, %c0_13], %21 {strides = array<i32>} : memref<128x32xbf16, #tpu.memory_space<vmem>>, vector<16x32xbf16>,
    %23 = vector.extract_strided_slice %8 {offsets = [0, 224], sizes = [16, 32], strides = [1, 1]} : vector<16x256xbf16> to vector<16x32xbf16>
    %c112 = arith.constant 112 : index
    %c0_14 = arith.constant 0 : index
    %24 = vector.load %arg10[%c112, %c0_14] : memref<128x32xbf16, #tpu.memory_space<vmem>>, vector<16x32xbf16>
    tpu.vector_store %arg10[%c112, %c0_14], %23 {strides = array<i32>} : memref<128x32xbf16, #tpu.memory_space<vmem>>, vector<16x32xbf16>,
    %c0_15 = arith.constant 0 : index
    %c0_16 = arith.constant 0 : index
    %25 = vector.load %arg10[%c0_15, %c0_16] : memref<128x32xbf16, #tpu.memory_space<vmem>>, vector<128x32xbf16>
    %c0_17 = arith.constant 0 : index
    %c0_18 = arith.constant 0 : index
    %26 = vector.load %arg3[%c0_17, %c0_18] : memref<32x288xbf16, #tpu.memory_space<vmem>>, vector<32x288xbf16>
    %cst_19 = arith.constant dense<0.000000e+00> : vector<128x288xf32>
    %27 = tpu.matmul %25, %26, %cst_19 {dimension_numbers = #tpu.dot_dimension_numbers<[1], [0], [0], [1], [0, 0, 1, 1], [], []>} : vector<128x32xbf16>, vector<32x288xbf16>, vector<128x288xf32> -> vector<128x288xf32>
    %c0_20 = arith.constant 0 : index
    %c0_21 = arith.constant 0 : index
    %28 = vector.load %arg4[%c0_20, %c0_21] : memref<1x288xf32, #tpu.memory_space<vmem>>, vector<1x288xf32>
    %29 = vector.broadcast %28 : vector<1x288xf32> to vector<128x288xf32>
    %30 = arith.addf %27, %29 : vector<128x288xf32>
    %cst_22 = arith.constant 0.000000e+00 : f32
    %31 = vector.broadcast %cst_22 : f32 to vector<128x288xf32>
    %32 = arith.maximumf %30, %31 : vector<128x288xf32>
    %33 = arith.truncf %32 : vector<128x288xf32> to vector<128x288xbf16>
    %c0_23 = arith.constant 0 : index
    %c0_24 = arith.constant 0 : index
    %34 = vector.load %arg5[%c0_23, %c0_24] : memref<288x784xbf16, #tpu.memory_space<vmem>>, vector<288x784xbf16>
    %cst_25 = arith.constant dense<0.000000e+00> : vector<128x784xf32>
    %35 = tpu.matmul %33, %34, %cst_25 {dimension_numbers = #tpu.dot_dimension_numbers<[1], [0], [0], [1], [0, 0, 1, 1], [], []>} : vector<128x288xbf16>, vector<288x784xbf16>, vector<128x784xf32> -> vector<128x784xf32>
    %c0_26 = arith.constant 0 : index
    %c0_27 = arith.constant 0 : index
    %36 = vector.load %arg6[%c0_26, %c0_27] : memref<1x784xf32, #tpu.memory_space<vmem>>, vector<1x784xf32>
    %37 = vector.broadcast %36 : vector<1x784xf32> to vector<128x784xf32>
    %38 = arith.addf %35, %37 : vector<128x784xf32>
    %cst_28 = arith.constant 0.000000e+00 : f32
    %39 = vector.broadcast %cst_28 : f32 to vector<128x784xf32>
    %40 = arith.maximumf %38, %39 : vector<128x784xf32>
    %41 = arith.truncf %40 : vector<128x784xf32> to vector<128x784xbf16>
    %c0_29 = arith.constant 0 : index
    %c0_30 = arith.constant 0 : index
    %42 = vector.load %arg7[%c0_29, %c0_30] : memref<784x144xbf16, #tpu.memory_space<vmem>>, vector<784x144xbf16>
    %cst_31 = arith.constant dense<0.000000e+00> : vector<128x144xf32>
    %43 = tpu.matmul %41, %42, %cst_31 {dimension_numbers = #tpu.dot_dimension_numbers<[1], [0], [0], [1], [0, 0, 1, 1], [], []>} : vector<128x784xbf16>, vector<784x144xbf16>, vector<128x144xf32> -> vector<128x144xf32>
    %c0_32 = arith.constant 0 : index
    %c0_33 = arith.constant 0 : index
    %44 = vector.load %arg8[%c0_32, %c0_33] : memref<1x144xf32, #tpu.memory_space<vmem>>, vector<1x144xf32>
    %45 = vector.broadcast %44 : vector<1x144xf32> to vector<128x144xf32>
    %46 = arith.addf %43, %45 : vector<128x144xf32>
    %cst_34 = arith.constant 0.000000e+00 : f32
    %47 = vector.broadcast %cst_34 : f32 to vector<128x144xf32>
    %48 = arith.subf %47, %46 : vector<128x144xf32>
    %49 = math.exp %48 : vector<128x144xf32>
    %cst_35 = arith.constant 1.000000e+00 : f32
    %50 = vector.broadcast %cst_35 : f32 to vector<128x144xf32>
    %51 = arith.addf %50, %49 : vector<128x144xf32>
    %52 = tpu.reciprocal %51 {approx = true} : vector<128x144xf32> -> vector<128x144xf32>
    %cst_36 = arith.constant 1.000000e+00 : f32
    %53 = vector.broadcast %cst_36 : f32 to vector<128x144xf32>
    %54 = arith.minimumf %52, %53 : vector<128x144xf32>
    %c0_37 = arith.constant 0 : index
    %c0_38 = arith.constant 0 : index
    %55 = vector.load %arg9[%c0_37, %c0_38] : memref<128x144xf32, #tpu.memory_space<vmem>>, vector<128x144xf32>
    tpu.vector_store %arg9[%c0_37, %c0_38], %54 {strides = array<i32>} : memref<128x144xf32, #tpu.memory_space<vmem>>, vector<128x144xf32>,
    return
  }
}

</mosaic_0001>

<llo_original>
// kernel: cnn_2d_1d_decoder_forward.1
$region0: #{cnn_2d_1d_decoder_forward.1}
  #allocation0 [shape = 'u32[]', space=smem, size = 0x4, offset = 0x4, fixed_abs, tag = 'smem constant byte address 0x4 - core index']
  #allocation1 [shape = 'u32[144,128]{1,0:T(1,128)}', space=vmem, size = 0x12000, scoped, tag = 'internal scratch']
  #allocation2 [shape = 'bf16[128,32]{1,0:T(16,128)(2,1)}', space=vmem, size = 0x8000, scoped, tag = 'scratch operand']
  %s0 = inlined_call_operand.vmem [shape: bf16[16,32], index: 0, kind: input, shape index: {}]
  %s1 = inlined_call_operand.vmem [shape: bf16[32,256], index: 1, kind: input, shape index: {}]
  %s2 = inlined_call_operand.vmem [shape: f32[1,256], index: 2, kind: input, shape index: {}]
  %s3 = inlined_call_operand.vmem [shape: bf16[32,288], index: 3, kind: input, shape index: {}]
  %s4 = inlined_call_operand.vmem [shape: f32[1,288], index: 4, kind: input, shape index: {}]
  %s5 = inlined_call_operand.vmem [shape: bf16[288,784], index: 5, kind: input, shape index: {}]
  %s6 = inlined_call_operand.vmem [shape: f32[1,784], index: 6, kind: input, shape index: {}]
  %s7 = inlined_call_operand.vmem [shape: bf16[784,144], index: 7, kind: input, shape index: {}]
  %s8 = inlined_call_operand.vmem [shape: f32[1,144], index: 8, kind: input, shape index: {}]
  %s9 = inlined_call_operand.vmem [shape: f32[128,144], index: 9, kind: output, shape index: {}]
  %s10 = sld [smem:[#allocation0]]
  $region46: #{cnn_2d_1d_decoder_forward.1} parent=0
    _
  %s12 = ssub.s32 1, %s10
  %s13 = scalar_select 0, %s12, %s10
  // Predicated region
  $region2: #{cnn_2d_1d_decoder_forward.1} parent=0 // pred_check
    _
  $region3: #{cnn_2d_1d_decoder_forward.1} parent=0 // pred_check_branch
    %15 = sbr.rel (0) target = $region5
  $region4: #{cnn_2d_1d_decoder_forward.1} parent=0 // pred_region
    _
  $region5: #{cnn_2d_1d_decoder_forward.1} parent=0 // pred_fallthru
    _
  // Predicated region
  $region6: #{cnn_2d_1d_decoder_forward.1} parent=0 // pred_check
    _
  $region7: #{cnn_2d_1d_decoder_forward.1} parent=0 // pred_check_branch
    %17 = sbr.rel (0) target = $region9
  $region8: #{cnn_2d_1d_decoder_forward.1} parent=0 // pred_region
    _
  $region9: #{cnn_2d_1d_decoder_forward.1} parent=0 // pred_fallthru
    _
  // Predicated region
  $region10: #{cnn_2d_1d_decoder_forward.1} parent=0 // pred_check
    _
  $region11: #{cnn_2d_1d_decoder_forward.1} parent=0 // pred_check_branch
    %19 = sbr.rel (0) target = $region13
  $region12: #{cnn_2d_1d_decoder_forward.1} parent=0 // pred_region
    _
  $region13: #{cnn_2d_1d_decoder_forward.1} parent=0 // pred_fallthru
    _
  // Predicated region
  $region14: #{cnn_2d_1d_decoder_forward.1} parent=0 // pred_check
    _
  $region15: #{cnn_2d_1d_decoder_forward.1} parent=0 // pred_check_branch
    %21 = sbr.rel (0) target = $region17
  $region16: #{cnn_2d_1d_decoder_forward.1} parent=0 // pred_region
    _
  $region17: #{cnn_2d_1d_decoder_forward.1} parent=0 // pred_fallthru
    _
  // Predicated region
  $region18: #{cnn_2d_1d_decoder_forward.1} parent=0 // pred_check
    _
  $region19: #{cnn_2d_1d_decoder_forward.1} parent=0 // pred_check_branch
    %23 = sbr.rel (0) target = $region21
  $region20: #{cnn_2d_1d_decoder_forward.1} parent=0 // pred_region
    _
  $region21: #{cnn_2d_1d_decoder_forward.1} parent=0 // pred_fallthru
    _
  // Predicated region
  $region22: #{cnn_2d_1d_decoder_forward.1} parent=0 // pred_check
    _
  $region23: #{cnn_2d_1d_decoder_forward.1} parent=0 // pred_check_branch
    %25 = sbr.rel (0) target = $region25
  $region24: #{cnn_2d_1d_decoder_forward.1} parent=0 // pred_region
    _
  $region25: #{cnn_2d_1d_decoder_forward.1} parent=0 // pred_fallthru
    _
  // Predicated region
  $region26: #{cnn_2d_1d_decoder_forward.1} parent=0 // pred_check
    _
  $region27: #{cnn_2d_1d_decoder_forward.1} parent=0 // pred_check_branch
    %27 = sbr.rel (0) target = $region29
  $region28: #{cnn_2d_1d_decoder_forward.1} parent=0 // pred_region
    _
  $region29: #{cnn_2d_1d_decoder_forward.1} parent=0 // pred_fallthru
    _
  // Predicated region
  $region30: #{cnn_2d_1d_decoder_forward.1} parent=0 // pred_check
    _
  $region31: #{cnn_2d_1d_decoder_forward.1} parent=0 // pred_check_branch
    %29 = sbr.rel (0) target = $region33
  $region32: #{cnn_2d_1d_decoder_forward.1} parent=0 // pred_region
    _
  $region33: #{cnn_2d_1d_decoder_forward.1} parent=0 // pred_fallthru
    _
  // Predicated region
  $region34: #{cnn_2d_1d_decoder_forward.1} parent=0 // pred_check
    _
  $region35: #{cnn_2d_1d_decoder_forward.1} parent=0 // pred_check_branch
    %31 = sbr.rel (0) target = $region37
  $region36: #{cnn_2d_1d_decoder_forward.1} parent=0 // pred_region
    _
  $region37: #{cnn_2d_1d_decoder_forward.1} parent=0 // pred_fallthru
    _
  %v33 = vld [vmem:[%s0] sm:$0xf]
  %v34 = vld [vmem:[%s0 + $0x4] sm:$0xf]
  %v35 = vld [vmem:[%s1] sm:$0xff]
  %v36 = vld [vmem:[%s1 + $0x8] sm:$0xff]
  %v37 = vld [vmem:[%s1 + $0x10] sm:$0xff]
  %v38 = vld [vmem:[%s1 + $0x18] sm:$0xff]
  %v39 = vld [vmem:[%s2] sm:$0x3]
  %v41 = vlaneseq
  %v42 = vshrl.u32 %v41, 7
  %v43 = vsub.s32 0, %v42
  %v44 = vrot.slane %v39, %v43
  %v45 = vlaneseq
  %v46 = vshrl.u32 %v45, 7
  %v47 = vsub.s32 1, %v46
  %v48 = vrot.slane %v39, %v47
  %v53 = vunpack.c.l.b16 %v33
  %v54 = vunpack.c.l.b16 %v34
  %v55 = vpack.c.b16 %v54, %v53
  %v60 = vunpack.c.l.b16 %v35
  %v61 = vunpack.c.h.b16 %v35
  %v62 = vunpack.c.l.b16 %v36
  %v63 = vunpack.c.h.b16 %v36
  %v64 = vunpack.c.l.b16 %v37
  %v65 = vunpack.c.h.b16 %v37
  %v66 = vunpack.c.l.b16 %v38
  %v67 = vunpack.c.h.b16 %v38
  %v68 = vpack.c.b16 %v62, %v60
  %v69 = vpack.c.b16 %v63, %v61
  %v70 = vpack.c.b16 %v66, %v64
  %v71 = vpack.c.b16 %v67, %v65
  %vm76 = vcmask 261120
  %v78 = vsel %vm76, %v55, 0
  %80 = vmatprep.subr.bf16.mxu0 %v69
  %81 = vmatpush1.bf16.msra.mxu0 %v68
  %82 = vmatprep.subr.bf16.mxu0 %v71
  %83 = vmatpush1.bf16.msra.mxu0 %v70
  %84 = vmatprep.subr.bf16.mxu0 0
  %85 = vmatpush1.bf16.msra.mxu0 0
  %86 = vmatprep.subr.bf16.mxu0 0
  %87 = vmatpush1.bf16.msra.mxu0 0
  %88 = vmatprep.subr.bf16.mxu0 0
  %89 = vmatpush1.bf16.msra.mxu0 0
  %90 = vmatprep.subr.bf16.mxu0 0
  %91 = vmatpush1.bf16.msra.mxu0 0
  %92 = vmatprep.subr.bf16.mxu0 0
  %93 = vmatpush1.bf16.msra.mxu0 0
  %94 = vmatprep.subr.bf16.mxu0 0
  %95 = vmatpush1.bf16.msra.mxu0 0
  %96 = vmatprep.subr.bf16.mxu0 0
  %97 = vmatpush1.bf16.msra.mxu0 0
  %98 = vmatprep.subr.bf16.mxu0 0
  %99 = vmatpush1.bf16.msra.mxu0 0
  %100 = vmatprep.subr.bf16.mxu0 0
  %101 = vmatpush1.bf16.msra.mxu0 0
  %102 = vmatprep.subr.bf16.mxu0 0
  %103 = vmatpush1.bf16.msra.mxu0 0
  %104 = vmatprep.subr.bf16.mxu0 0
  %105 = vmatpush1.bf16.msra.mxu0 0
  %106 = vmatprep.subr.bf16.mxu0 0
  %107 = vmatpush1.bf16.msra.mxu0 0
  %108 = vmatprep.subr.bf16.mxu0 0
  %109 = vmatpush1.bf16.msra.mxu0 0
  %110 = vmatprep.subr.bf16.mxu0 0
  %111 = vmatpush1.bf16.msra.mxu0 0
  %112 = vmatprep.mubr.bf16.mxu0 0
  %113 = vmatmul.mubr.bf16.gmra.mrb[0].mxu0 %v78
  %v114 = vpop.f32.mrb[0].mxu0
  %v115 = vadd.f32 %v44, %v114
  %v116 = vpop.f32.mrb[0].mxu0
  %v117 = vadd.f32 %v48, %v116
  %v118 = vpop.f32.mrb[0].mxu0
  %v119 = vadd.f32 %v44, %v118
  %v120 = vpop.f32.mrb[0].mxu0
  %v121 = vadd.f32 %v48, %v120
  %122 = vdwg.mxu0
  %v123 = vmax.f32 %v115, 0.0
  %v124 = vmax.f32 %v117, 0.0
  %v125 = vmax.f32 %v119, 0.0
  %v126 = vmax.f32 %v121, 0.0
  %v127 = vpack.c.bf16 %v125, %v123
  %v128 = vpack.c.bf16 %v126, %v124
  %129 = vst.msk [vmem:[#allocation2] sm:$0xff] %vm76, %v127
  %131 = vrot.lane.b32.xlu0 %v127, 96
  %v132 = vpop.permute.xlu0 %131
  %134 = vst.msk [vmem:[#allocation2 + $0x8] sm:$0xff] %vm76, %v132
  %135 = vrot.lane.b32.xlu0 %v127, 64
  %v136 = vpop.permute.xlu0 %135
  %138 = vst.msk [vmem:[#allocation2 + $0x10] sm:$0xff] %vm76, %v136
  %139 = vrot.lane.b32.xlu0 %v127, 32
  %v140 = vpop.permute.xlu0 %139
  %142 = vst.msk [vmem:[#allocation2 + $0x18] sm:$0xff] %vm76, %v140
  %143 = vst.msk [vmem:[#allocation2 + $0x20] sm:$0xff] %vm76, %v128
  %145 = vrot.lane.b32.xlu0 %v128, 96
  %v146 = vpop.permute.xlu0 %145
  %148 = vst.msk [vmem:[#allocation2 + $0x28] sm:$0xff] %vm76, %v146
  %149 = vrot.lane.b32.xlu0 %v128, 64
  %v150 = vpop.permute.xlu0 %149
  %152 = vst.msk [vmem:[#allocation2 + $0x30] sm:$0xff] %vm76, %v150
  %153 = vrot.lane.b32.xlu0 %v128, 32
  %v154 = vpop.permute.xlu0 %153
  %156 = vst.msk [vmem:[#allocation2 + $0x38] sm:$0xff] %vm76, %v154
  %v157 = vld [vmem:[#allocation2] sm:$0xff]
  %v158 = vld [vmem:[#allocation2 + $0x8] sm:$0xff]
  %v159 = vld [vmem:[#allocation2 + $0x10] sm:$0xff]
  %v160 = vld [vmem:[#allocation2 + $0x18] sm:$0xff]
  %v161 = vld [vmem:[#allocation2 + $0x20] sm:$0xff]
  %v162 = vld [vmem:[#allocation2 + $0x28] sm:$0xff]
  %v163 = vld [vmem:[#allocation2 + $0x30] sm:$0xff]
  %v164 = vld [vmem:[#allocation2 + $0x38] sm:$0xff]
  %v165 = vld [vmem:[%s3] sm:$0xff]
  %v166 = vld [vmem:[%s3 + $0x8] sm:$0xf]
  %v167 = vld [vmem:[%s3 + $0xc] sm:$0xff]
  %v168 = vld [vmem:[%s3 + $0x14] sm:$0xf]
  %v169 = vld [vmem:[%s3 + $0x18] sm:$0xff]
  %v170 = vld [vmem:[%s3 + $0x20] sm:$0xf]
  %v171 = vld [vmem:[%s3 + $0x24] sm:$0xff]
  %v172 = vld [vmem:[%s3 + $0x2c] sm:$0xf]
  %v173 = vld [vmem:[%s4] sm:$0x7]
  %v175 = vlaneseq
  %v176 = vshrl.u32 %v175, 7
  %v177 = vsub.s32 0, %v176
  %v178 = vrot.slane %v173, %v177
  %v179 = vlaneseq
  %v180 = vshrl.u32 %v179, 7
  %v181 = vsub.s32 1, %v180
  %v182 = vrot.slane %v173, %v181
  %v183 = vlaneseq
  %v184 = vshrl.u32 %v183, 7
  %v185 = vsub.s32 2, %v184
  %v186 = vrot.slane %v173, %v185
  %v198 = vunpack.c.l.b16 %v165
  %v199 = vunpack.c.h.b16 %v165
  %v200 = vunpack.c.l.b16 %v166
  %v201 = vunpack.c.l.b16 %v167
  %v202 = vunpack.c.h.b16 %v167
  %v203 = vunpack.c.l.b16 %v168
  %v204 = vunpack.c.l.b16 %v169
  %v205 = vunpack.c.h.b16 %v169
  %v206 = vunpack.c.l.b16 %v170
  %v207 = vunpack.c.l.b16 %v171
  %v208 = vunpack.c.h.b16 %v171
  %v209 = vunpack.c.l.b16 %v172
  %v210 = vpack.c.b16 %v201, %v198
  %v211 = vpack.c.b16 %v202, %v199
  %v212 = vpack.c.b16 %v203, %v200
  %v213 = vpack.c.b16 %v207, %v204
  %v214 = vpack.c.b16 %v208, %v205
  %v215 = vpack.c.b16 %v209, %v206
  %v223 = vsel %vm76, %v157, 0
  %v226 = vsel %vm76, %v158, 0
  %v229 = vsel %vm76, %v159, 0
  %v232 = vsel %vm76, %v160, 0
  %v235 = vsel %vm76, %v161, 0
  %v238 = vsel %vm76, %v162, 0
  %v241 = vsel %vm76, %v163, 0
  %v244 = vsel %vm76, %v164, 0
  %246 = vmatprep.subr.bf16.mxu0 %v211
  %247 = vmatpush1.bf16.msra.mxu0 %v210
  %248 = vmatprep.subr.bf16.mxu0 %v214
  %249 = vmatpush1.bf16.msra.mxu0 %v213
  %250 = vmatprep.subr.bf16.mxu0 0
  %251 = vmatpush1.bf16.msra.mxu0 0
  %252 = vmatprep.subr.bf16.mxu0 0
  %253 = vmatpush1.bf16.msra.mxu0 0
  %254 = vmatprep.subr.bf16.mxu0 0
  %255 = vmatpush1.bf16.msra.mxu0 0
  %256 = vmatprep.subr.bf16.mxu0 0
  %257 = vmatpush1.bf16.msra.mxu0 0
  %258 = vmatprep.subr.bf16.mxu0 0
  %259 = vmatpush1.bf16.msra.mxu0 0
  %260 = vmatprep.subr.bf16.mxu0 0
  %261 = vmatpush1.bf16.msra.mxu0 0
  %262 = vmatprep.subr.bf16.mxu0 0
  %263 = vmatpush1.bf16.msra.mxu0 0
  %264 = vmatprep.subr.bf16.mxu0 0
  %265 = vmatpush1.bf16.msra.mxu0 0
  %266 = vmatprep.subr.bf16.mxu0 0
  %267 = vmatpush1.bf16.msra.mxu0 0
  %268 = vmatprep.subr.bf16.mxu0 0
  %269 = vmatpush1.bf16.msra.mxu0 0
  %270 = vmatprep.subr.bf16.mxu0 0
  %271 = vmatpush1.bf16.msra.mxu0 0
  %272 = vmatprep.subr.bf16.mxu0 0
  %273 = vmatpush1.bf16.msra.mxu0 0
  %274 = vmatprep.subr.bf16.mxu0 0
  %275 = vmatpush1.bf16.msra.mxu0 0
  %276 = vmatprep.subr.bf16.mxu0 0
  %277 = vmatpush1.bf16.msra.mxu0 0
  %278 = vmatprep.mubr.bf16.mxu0 0
  %279 = vmatmul.mubr.bf16.gmra.mrb[0].mxu0 %v223
  %v280 = vpop.f32.mrb[0].mxu0
  %v281 = vadd.f32 %v178, %v280
  %v282 = vpop.f32.mrb[0].mxu0
  %v283 = vadd.f32 %v182, %v282
  %v284 = vpop.f32.mrb[0].mxu0
  %v285 = vadd.f32 %v178, %v284
  %v286 = vpop.f32.mrb[0].mxu0
  %v287 = vadd.f32 %v182, %v286
  %288 = vmatprep.mubr.bf16.mxu0 0
  %289 = vmatmul.mubr.bf16.gmra.mrb[0].mxu0 %v226
  %v290 = vpop.f32.mrb[0].mxu0
  %v291 = vadd.f32 %v178, %v290
  %v292 = vpop.f32.mrb[0].mxu0
  %v293 = vadd.f32 %v182, %v292
  %v294 = vpop.f32.mrb[0].mxu0
  %v295 = vadd.f32 %v178, %v294
  %v296 = vpop.f32.mrb[0].mxu0
  %v297 = vadd.f32 %v182, %v296
  %298 = vmatprep.mubr.bf16.mxu0 0
  %299 = vmatmul.mubr.bf16.gmra.mrb[0].mxu0 %v229
  %v300 = vpop.f32.mrb[0].mxu0
  %v301 = vadd.f32 %v178, %v300
  %v302 = vpop.f32.mrb[0].mxu0
  %v303 = vadd.f32 %v182, %v302
  %v304 = vpop.f32.mrb[0].mxu0
  %v305 = vadd.f32 %v178, %v304
  %v306 = vpop.f32.mrb[0].mxu0
  %v307 = vadd.f32 %v182, %v306
  %308 = vmatprep.mubr.bf16.mxu0 0
  %309 = vmatmul.mubr.bf16.gmra.mrb[0].mxu0 %v232
  %v310 = vpop.f32.mrb[0].mxu0
  %v311 = vadd.f32 %v178, %v310
  %v312 = vpop.f32.mrb[0].mxu0
  %v313 = vadd.f32 %v182, %v312
  %v314 = vpop.f32.mrb[0].mxu0
  %v315 = vadd.f32 %v178, %v314
  %v316 = vpop.f32.mrb[0].mxu0
  %v317 = vadd.f32 %v182, %v316
  %318 = vmatprep.mubr.bf16.mxu0 0
  %319 = vmatmul.mubr.bf16.gmra.mrb[0].mxu0 %v235
  %v320 = vpop.f32.mrb[0].mxu0
  %v321 = vadd.f32 %v178, %v320
  %v322 = vpop.f32.mrb[0].mxu0
  %v323 = vadd.f32 %v182, %v322
  %v324 = vpop.f32.mrb[0].mxu0
  %v325 = vadd.f32 %v178, %v324
  %v326 = vpop.f32.mrb[0].mxu0
  %v327 = vadd.f32 %v182, %v326
  %328 = vmatprep.mubr.bf16.mxu0 0
  %329 = vmatmul.mubr.bf16.gmra.mrb[0].mxu0 %v238
  %v330 = vpop.f32.mrb[0].mxu0
  %v331 = vadd.f32 %v178, %v330
  %v332 = vpop.f32.mrb[0].mxu0
  %v333 = vadd.f32 %v182, %v332
  %v334 = vpop.f32.mrb[0].mxu0
  %v335 = vadd.f32 %v178, %v334
  %v336 = vpop.f32.mrb[0].mxu0
  %v337 = vadd.f32 %v182, %v336
  %338 = vmatprep.mubr.bf16.mxu0 0
  %339 = vmatmul.mubr.bf16.gmra.mrb[0].mxu0 %v241
  %v340 = vpop.f32.mrb[0].mxu0
  %v341 = vadd.f32 %v178, %v340
  %v342 = vpop.f32.mrb[0].mxu0
  %v343 = vadd.f32 %v182, %v342
  %v344 = vpop.f32.mrb[0].mxu0
  %v345 = vadd.f32 %v178, %v344
  %v346 = vpop.f32.mrb[0].mxu0
  %v347 = vadd.f32 %v182, %v346
  %348 = vmatprep.mubr.bf16.mxu0 0
  %349 = vmatmul.mubr.bf16.gmra.mrb[0].mxu0 %v244
  %v350 = vpop.f32.mrb[0].mxu0
  %v351 = vadd.f32 %v178, %v350
  %v352 = vpop.f32.mrb[0].mxu0
  %v353 = vadd.f32 %v182, %v352
  %v354 = vpop.f32.mrb[0].mxu0
  %v355 = vadd.f32 %v178, %v354
  %v356 = vpop.f32.mrb[0].mxu0
  %v357 = vadd.f32 %v182, %v356
  %358 = vdwg.mxu0
  %359 = vmatprep.subr.bf16.mxu0 0
  %360 = vmatpush1.bf16.msra.mxu0 %v212
  %361 = vmatprep.subr.bf16.mxu0 0
  %362 = vmatpush1.bf16.msra.mxu0 %v215
  %363 = vmatprep.subr.bf16.mxu0 0
  %364 = vmatpush1.bf16.msra.mxu0 0
  %365 = vmatprep.subr.bf16.mxu0 0
  %366 = vmatpush1.bf16.msra.mxu0 0
  %367 = vmatprep.subr.bf16.mxu0 0
  %368 = vmatpush1.bf16.msra.mxu0 0
  %369 = vmatprep.subr.bf16.mxu0 0
  %370 = vmatpush1.bf16.msra.mxu0 0
  %371 = vmatprep.subr.bf16.mxu0 0
  %372 = vmatpush1.bf16.msra.mxu0 0
  %373 = vmatprep.subr.bf16.mxu0 0
  %374 = vmatpush1.bf16.msra.mxu0 0
  %375 = vmatprep.subr.bf16.mxu0 0
  %376 = vmatpush1.bf16.msra.mxu0 0
  %377 = vmatprep.subr.bf16.mxu0 0
  %378 = vmatpush1.bf16.msra.mxu0 0
  %379 = vmatprep.subr.bf16.mxu0 0
  %380 = vmatpush1.bf16.msra.mxu0 0
  %381 = vmatprep.subr.bf16.mxu0 0
  %382 = vmatpush1.bf16.msra.mxu0 0
  %383 = vmatprep.subr.bf16.mxu0 0
  %384 = vmatpush1.bf16.msra.mxu0 0
  %385 = vmatprep.subr.bf16.mxu0 0
  %386 = vmatpush1.bf16.msra.mxu0 0
  %387 = vmatprep.subr.bf16.mxu0 0
  %388 = vmatpush1.bf16.msra.mxu0 0
  %389 = vmatprep.subr.bf16.mxu0 0
  %390 = vmatpush1.bf16.msra.mxu0 0
  %391 = vmatprep.mubr.bf16.mxu0 0
  %392 = vmatmul.mubr.bf16.gmra.mrb[0].mxu0 %v223
  %v393 = vpop.f32.mrb[0].mxu0
  %v394 = vadd.f32 %v186, %v393
  %v395 = vpop.f32.mrb[0].mxu0
  %v396 = vpop.f32.mrb[0].mxu0
  %v397 = vadd.f32 %v186, %v396
  %v398 = vpop.f32.mrb[0].mxu0
  %399 = vmatprep.mubr.bf16.mxu0 0
  %400 = vmatmul.mubr.bf16.gmra.mrb[0].mxu0 %v226
  %v401 = vpop.f32.mrb[0].mxu0
  %v402 = vadd.f32 %v186, %v401
  %v403 = vpop.f32.mrb[0].mxu0
  %v404 = vpop.f32.mrb[0].mxu0
  %v405 = vadd.f32 %v186, %v404
  %v406 = vpop.f32.mrb[0].mxu0
  %407 = vmatprep.mubr.bf16.mxu0 0
  %408 = vmatmul.mubr.bf16.gmra.mrb[0].mxu0 %v229
  %v409 = vpop.f32.mrb[0].mxu0
  %v410 = vadd.f32 %v186, %v409
  %v411 = vpop.f32.mrb[0].mxu0
  %v412 = vpop.f32.mrb[0].mxu0
  %v413 = vadd.f32 %v186, %v412
  %v414 = vpop.f32.mrb[0].mxu0
  %415 = vmatprep.mubr.bf16.mxu0 0
  %416 = vmatmul.mubr.bf16.gmra.mrb[0].mxu0 %v232
  %v417 = vpop.f32.mrb[0].mxu0
  %v418 = vadd.f32 %v186, %v417
  %v419 = vpop.f32.mrb[0].mxu0
  %v420 = vpop.f32.mrb[0].mxu0
  %v421 = vadd.f32 %v186, %v420
  %v422 = vpop.f32.mrb[0].mxu0
  %423 = vmatprep.mubr.bf16.mxu0 0
  %424 = vmatmul.mubr.bf16.gmra.mrb[0].mxu0 %v235
  %v425 = vpop.f32.mrb[0].mxu0
  %v426 = vadd.f32 %v186, %v425
  %v427 = vpop.f32.mrb[0].mxu0
  %v428 = vpop.f32.mrb[0].mxu0
  %v429 = vadd.f32 %v186, %v428
  %v430 = vpop.f32.mrb[0].mxu0
  %431 = vmatprep.mubr.bf16.mxu0 0
  %432 = vmatmul.mubr.bf16.gmra.mrb[0].mxu0 %v238
  %v433 = vpop.f32.mrb[0].mxu0
  %v434 = vadd.f32 %v186, %v433
  %v435 = vpop.f32.mrb[0].mxu0
  %v436 = vpop.f32.mrb[0].mxu0
  %v437 = vadd.f32 %v186, %v436
  %v438 = vpop.f32.mrb[0].mxu0
  %439 = vmatprep.mubr.bf16.mxu0 0
  %440 = vmatmul.mubr.bf16.gmra.mrb[0].mxu0 %v241
  %v441 = vpop.f32.mrb[0].mxu0
  %v442 = vadd.f32 %v186, %v441
  %v443 = vpop.f32.mrb[0].mxu0
  %v444 = vpop.f32.mrb[0].mxu0
  %v445 = vadd.f32 %v186, %v444
  %v446 = vpop.f32.mrb[0].mxu0
  %447 = vmatprep.mubr.bf16.mxu0 0
  %448 = vmatmul.mubr.bf16.gmra.mrb[0].mxu0 %v244
  %v449 = vpop.f32.mrb[0].mxu0
  %v450 = vadd.f32 %v186, %v449
  %v451 = vpop.f32.mrb[0].mxu0
  %v452 = vpop.f32.mrb[0].mxu0
  %v453 = vadd.f32 %v186, %v452
  %v454 = vpop.f32.mrb[0].mxu0
  %455 = vdwg.mxu0
  %v456 = vmax.f32 %v281, 0.0
  %v457 = vmax.f32 %v283, 0.0
  %v458 = vmax.f32 %v394, 0.0
  %v459 = vmax.f32 %v285, 0.0
  %v460 = vmax.f32 %v287, 0.0
  %v461 = vmax.f32 %v397, 0.0
  %v462 = vmax.f32 %v291, 0.0
  %v463 = vmax.f32 %v293, 0.0
  %v464 = vmax.f32 %v402, 0.0
  %v465 = vmax.f32 %v295, 0.0
  %v466 = vmax.f32 %v297, 0.0
  %v467 = vmax.f32 %v405, 0.0
  %v468 = vmax.f32 %v301, 0.0
  %v469 = vmax.f32 %v303, 0.0
  %v470 = vmax.f32 %v410, 0.0
  %v471 = vmax.f32 %v305, 0.0
  %v472 = vmax.f32 %v307, 0.0
  %v473 = vmax.f32 %v413, 0.0
  %v474 = vmax.f32 %v311, 0.0
  %v475 = vmax.f32 %v313, 0.0
  %v476 = vmax.f32 %v418, 0.0
  %v477 = vmax.f32 %v315, 0.0
  %v478 = vmax.f32 %v317, 0.0
  %v479 = vmax.f32 %v421, 0.0
  %v480 = vmax.f32 %v321, 0.0
  %v481 = vmax.f32 %v323, 0.0
  %v482 = vmax.f32 %v426, 0.0
  %v483 = vmax.f32 %v325, 0.0
  %v484 = vmax.f32 %v327, 0.0
  %v485 = vmax.f32 %v429, 0.0
  %v486 = vmax.f32 %v331, 0.0
  %v487 = vmax.f32 %v333, 0.0
  %v488 = vmax.f32 %v434, 0.0
  %v489 = vmax.f32 %v335, 0.0
  %v490 = vmax.f32 %v337, 0.0
  %v491 = vmax.f32 %v437, 0.0
  %v492 = vmax.f32 %v341, 0.0
  %v493 = vmax.f32 %v343, 0.0
  %v494 = vmax.f32 %v442, 0.0
  %v495 = vmax.f32 %v345, 0.0
  %v496 = vmax.f32 %v347, 0.0
  %v497 = vmax.f32 %v445, 0.0
  %v498 = vmax.f32 %v351, 0.0
  %v499 = vmax.f32 %v353, 0.0
  %v500 = vmax.f32 %v450, 0.0
  %v501 = vmax.f32 %v355, 0.0
  %v502 = vmax.f32 %v357, 0.0
  %v503 = vmax.f32 %v453, 0.0
  %v504 = vpack.c.bf16 %v459, %v456
  %v505 = vpack.c.bf16 %v460, %v457
  %v506 = vpack.c.bf16 %v461, %v458
  %v507 = vpack.c.bf16 %v465, %v462
  %v508 = vpack.c.bf16 %v466, %v463
  %v509 = vpack.c.bf16 %v467, %v464
  %v510 = vpack.c.bf16 %v471, %v468
  %v511 = vpack.c.bf16 %v472, %v469
  %v512 = vpack.c.bf16 %v473, %v470
  %v513 = vpack.c.bf16 %v477, %v474
  %v514 = vpack.c.bf16 %v478, %v475
  %v515 = vpack.c.bf16 %v479, %v476
  %v516 = vpack.c.bf16 %v483, %v480
  %v517 = vpack.c.bf16 %v484, %v481
  %v518 = vpack.c.bf16 %v485, %v482
  %v519 = vpack.c.bf16 %v489, %v486
  %v520 = vpack.c.bf16 %v490, %v487
  %v521 = vpack.c.bf16 %v491, %v488
  %v522 = vpack.c.bf16 %v495, %v492
  %v523 = vpack.c.bf16 %v496, %v493
  %v524 = vpack.c.bf16 %v497, %v494
  %v525 = vpack.c.bf16 %v501, %v498
  %v526 = vpack.c.bf16 %v502, %v499
  %v527 = vpack.c.bf16 %v503, %v500
  %v528 = vld [vmem:[%s5] sm:$0xff]
  %v529 = vld [vmem:[%s5 + $0x8] sm:$0xff]
  %v530 = vld [vmem:[%s5 + $0x10] sm:$0xff]
  %v531 = vld [vmem:[%s5 + $0x18] sm:$0xf]
  %v532 = vld [vmem:[%s5 + $0x1c] sm:$0xff]
  %v533 = vld [vmem:[%s5 + $0x24] sm:$0xff]
  %v534 = vld [vmem:[%s5 + $0x2c] sm:$0xff]
  %v535 = vld [vmem:[%s5 + $0x34] sm:$0xf]
  %v536 = vld [vmem:[%s5 + $0x38] sm:$0xff]
  %v537 = vld [vmem:[%s5 + $0x40] sm:$0xff]
  %v538 = vld [vmem:[%s5 + $0x48] sm:$0xff]
  %v539 = vld [vmem:[%s5 + $0x50] sm:$0xf]
  %v540 = vld [vmem:[%s5 + $0x54] sm:$0xff]
  %v541 = vld [vmem:[%s5 + $0x5c] sm:$0xff]
  %v542 = vld [vmem:[%s5 + $0x64] sm:$0xff]
  %v543 = vld [vmem:[%s5 + $0x6c] sm:$0xf]
  %v544 = vld [vmem:[%s5 + $0x70] sm:$0xff]
  %v545 = vld [vmem:[%s5 + $0x78] sm:$0xff]
  %v546 = vld [vmem:[%s5 + $0x80] sm:$0xff]
  %v547 = vld [vmem:[%s5 + $0x88] sm:$0xf]
  %v548 = vld [vmem:[%s5 + $0x8c] sm:$0xff]
  %v549 = vld [vmem:[%s5 + $0x94] sm:$0xff]
  %v550 = vld [vmem:[%s5 + $0x9c] sm:$0xff]
  %v551 = vld [vmem:[%s5 + $0xa4] sm:$0xf]
  %v552 = vld [vmem:[%s5 + $0xa8] sm:$0xff]
  %v553 = vld [vmem:[%s5 + $0xb0] sm:$0xff]
  %v554 = vld [vmem:[%s5 + $0xb8] sm:$0xff]
  %v555 = vld [vmem:[%s5 + $0xc0] sm:$0xf]
  %v556 = vld [vmem:[%s5 + $0xc4] sm:$0xff]
  %v557 = vld [vmem:[%s5 + $0xcc] sm:$0xff]
  %v558 = vld [vmem:[%s5 + $0xd4] sm:$0xff]
  %v559 = vld [vmem:[%s5 + $0xdc] sm:$0xf]
  %v560 = vld [vmem:[%s5 + $0xe0] sm:$0xff]
  %v561 = vld [vmem:[%s5 + $0xe8] sm:$0xff]
  %v562 = vld [vmem:[%s5 + $0xf0] sm:$0xff]
  %v563 = vld [vmem:[%s5 + $0xf8] sm:$0xf]
  %v564 = vld [vmem:[%s5 + $0xfc] sm:$0xff]
  %v565 = vld [vmem:[%s5 + $0x104] sm:$0xff]
  %v566 = vld [vmem:[%s5 + $0x10c] sm:$0xff]
  %v567 = vld [vmem:[%s5 + $0x114] sm:$0xf]
  %v568 = vld [vmem:[%s5 + $0x118] sm:$0xff]
  %v569 = vld [vmem:[%s5 + $0x120] sm:$0xff]
  %v570 = vld [vmem:[%s5 + $0x128] sm:$0xff]
  %v571 = vld [vmem:[%s5 + $0x130] sm:$0xf]
  %v572 = vld [vmem:[%s5 + $0x134] sm:$0xff]
  %v573 = vld [vmem:[%s5 + $0x13c] sm:$0xff]
  %v574 = vld [vmem:[%s5 + $0x144] sm:$0xff]
  %v575 = vld [vmem:[%s5 + $0x14c] sm:$0xf]
  %v576 = vld [vmem:[%s5 + $0x150] sm:$0xff]
  %v577 = vld [vmem:[%s5 + $0x158] sm:$0xff]
  %v578 = vld [vmem:[%s5 + $0x160] sm:$0xff]
  %v579 = vld [vmem:[%s5 + $0x168] sm:$0xf]
  %v580 = vld [vmem:[%s5 + $0x16c] sm:$0xff]
  %v581 = vld [vmem:[%s5 + $0x174] sm:$0xff]
  %v582 = vld [vmem:[%s5 + $0x17c] sm:$0xff]
  %v583 = vld [vmem:[%s5 + $0x184] sm:$0xf]
  %v584 = vld [vmem:[%s5 + $0x188] sm:$0xff]
  %v585 = vld [vmem:[%s5 + $0x190] sm:$0xff]
  %v586 = vld [vmem:[%s5 + $0x198] sm:$0xff]
  %v587 = vld [vmem:[%s5 + $0x1a0] sm:$0xf]
  %v588 = vld [vmem:[%s5 + $0x1a4] sm:$0xff]
  %v589 = vld [vmem:[%s5 + $0x1ac] sm:$0xff]
  %v590 = vld [vmem:[%s5 + $0x1b4] sm:$0xff]
  %v591 = vld [vmem:[%s5 + $0x1bc] sm:$0xf]
  %v592 = vld [vmem:[%s5 + $0x1c0] sm:$0xff]
  %v593 = vld [vmem:[%s5 + $0x1c8] sm:$0xff]
  %v594 = vld [vmem:[%s5 + $0x1d0] sm:$0xff]
  %v595 = vld [vmem:[%s5 + $0x1d8] sm:$0xf]
  %v596 = vld [vmem:[%s5 + $0x1dc] sm:$0xff]
  %v597 = vld [vmem:[%s5 + $0x1e4] sm:$0xff]
  %v598 = vld [vmem:[%s5 + $0x1ec] sm:$0xff]
  %v599 = vld [vmem:[%s5 + $0x1f4] sm:$0xf]
  %v600 = vld [vmem:[%s5 + $0x1f8] sm:$0xff]
  %v601 = vld [vmem:[%s5 + $0x200] sm:$0xff]
  %v602 = vld [vmem:[%s5 + $0x208] sm:$0xff]
  %v603 = vld [vmem:[%s5 + $0x210] sm:$0xf]
  %v604 = vld [vmem:[%s5 + $0x214] sm:$0xff]
  %v605 = vld [vmem:[%s5 + $0x21c] sm:$0xff]
  %v606 = vld [vmem:[%s5 + $0x224] sm:$0xff]
  %v607 = vld [vmem:[%s5 + $0x22c] sm:$0xf]
  %v608 = vld [vmem:[%s5 + $0x230] sm:$0xff]
  %v609 = vld [vmem:[%s5 + $0x238] sm:$0xff]
  %v610 = vld [vmem:[%s5 + $0x240] sm:$0xff]
  %v611 = vld [vmem:[%s5 + $0x248] sm:$0xf]
  %v612 = vld [vmem:[%s5 + $0x24c] sm:$0xff]
  %v613 = vld [vmem:[%s5 + $0x254] sm:$0xff]
  %v614 = vld [vmem:[%s5 + $0x25c] sm:$0xff]
  %v615 = vld [vmem:[%s5 + $0x264] sm:$0xf]
  %v616 = vld [vmem:[%s5 + $0x268] sm:$0xff]
  %v617 = vld [vmem:[%s5 + $0x270] sm:$0xff]
  %v618 = vld [vmem:[%s5 + $0x278] sm:$0xff]
  %v619 = vld [vmem:[%s5 + $0x280] sm:$0xf]
  %v620 = vld [vmem:[%s5 + $0x284] sm:$0xff]
  %v621 = vld [vmem:[%s5 + $0x28c] sm:$0xff]
  %v622 = vld [vmem:[%s5 + $0x294] sm:$0xff]
  %v623 = vld [vmem:[%s5 + $0x29c] sm:$0xf]
  %v624 = vld [vmem:[%s5 + $0x2a0] sm:$0xff]
  %v625 = vld [vmem:[%s5 + $0x2a8] sm:$0xff]
  %v626 = vld [vmem:[%s5 + $0x2b0] sm:$0xff]
  %v627 = vld [vmem:[%s5 + $0x2b8] sm:$0xf]
  %v628 = vld [vmem:[%s5 + $0x2bc] sm:$0xff]
  %v629 = vld [vmem:[%s5 + $0x2c4] sm:$0xff]
  %v630 = vld [vmem:[%s5 + $0x2cc] sm:$0xff]
  %v631 = vld [vmem:[%s5 + $0x2d4] sm:$0xf]
  %v632 = vld [vmem:[%s5 + $0x2d8] sm:$0xff]
  %v633 = vld [vmem:[%s5 + $0x2e0] sm:$0xff]
  %v634 = vld [vmem:[%s5 + $0x2e8] sm:$0xff]
  %v635 = vld [vmem:[%s5 + $0x2f0] sm:$0xf]
  %v636 = vld [vmem:[%s5 + $0x2f4] sm:$0xff]
  %v637 = vld [vmem:[%s5 + $0x2fc] sm:$0xff]
  %v638 = vld [vmem:[%s5 + $0x304] sm:$0xff]
  %v639 = vld [vmem:[%s5 + $0x30c] sm:$0xf]
  %v640 = vld [vmem:[%s5 + $0x310] sm:$0xff]
  %v641 = vld [vmem:[%s5 + $0x318] sm:$0xff]
  %v642 = vld [vmem:[%s5 + $0x320] sm:$0xff]
  %v643 = vld [vmem:[%s5 + $0x328] sm:$0xf]
  %v644 = vld [vmem:[%s5 + $0x32c] sm:$0xff]
  %v645 = vld [vmem:[%s5 + $0x334] sm:$0xff]
  %v646 = vld [vmem:[%s5 + $0x33c] sm:$0xff]
  %v647 = vld [vmem:[%s5 + $0x344] sm:$0xf]
  %v648 = vld [vmem:[%s5 + $0x348] sm:$0xff]
  %v649 = vld [vmem:[%s5 + $0x350] sm:$0xff]
  %v650 = vld [vmem:[%s5 + $0x358] sm:$0xff]
  %v651 = vld [vmem:[%s5 + $0x360] sm:$0xf]
  %v652 = vld [vmem:[%s5 + $0x364] sm:$0xff]
  %v653 = vld [vmem:[%s5 + $0x36c] sm:$0xff]
  %v654 = vld [vmem:[%s5 + $0x374] sm:$0xff]
  %v655 = vld [vmem:[%s5 + $0x37c] sm:$0xf]
  %v656 = vld [vmem:[%s5 + $0x380] sm:$0xff]
  %v657 = vld [vmem:[%s5 + $0x388] sm:$0xff]
  %v658 = vld [vmem:[%s5 + $0x390] sm:$0xff]
  %v659 = vld [vmem:[%s5 + $0x398] sm:$0xf]
  %v660 = vld [vmem:[%s5 + $0x39c] sm:$0xff]
  %v661 = vld [vmem:[%s5 + $0x3a4] sm:$0xff]
  %v662 = vld [vmem:[%s5 + $0x3ac] sm:$0xff]
  %v663 = vld [vmem:[%s5 + $0x3b4] sm:$0xf]
  %v664 = vld [vmem:[%s5 + $0x3b8] sm:$0xff]
  %v665 = vld [vmem:[%s5 + $0x3c0] sm:$0xff]
  %v666 = vld [vmem:[%s5 + $0x3c8] sm:$0xff]
  %v667 = vld [vmem:[%s5 + $0x3d0] sm:$0xf]
  %v668 = vld [vmem:[%s5 + $0x3d4] sm:$0xff]
  %v669 = vld [vmem:[%s5 + $0x3dc] sm:$0xff]
  %v670 = vld [vmem:[%s5 + $0x3e4] sm:$0xff]
  %v671 = vld [vmem:[%s5 + $0x3ec] sm:$0xf]
  %v672 = vld [vmem:[%s6] sm:$0x7f]
  %v674 = vlaneseq
  %v675 = vshrl.u32 %v674, 7
  %v676 = vsub.s32 0, %v675
  %v677 = vrot.slane %v672, %v676
  %v678 = vlaneseq
  %v679 = vshrl.u32 %v678, 7
  %v680 = vsub.s32 1, %v679
  %v681 = vrot.slane %v672, %v680
  %v682 = vlaneseq
  %v683 = vshrl.u32 %v682, 7
  %v684 = vsub.s32 2, %v683
  %v685 = vrot.slane %v672, %v684
  %v686 = vlaneseq
  %v687 = vshrl.u32 %v686, 7
  %v688 = vsub.s32 3, %v687
  %v689 = vrot.slane %v672, %v688
  %v690 = vlaneseq
  %v691 = vshrl.u32 %v690, 7
  %v692 = vsub.s32 4, %v691
  %v693 = vrot.slane %v672, %v692
  %v694 = vlaneseq
  %v695 = vshrl.u32 %v694, 7
  %v696 = vsub.s32 5, %v695
  %v697 = vrot.slane %v672, %v696
  %v698 = vlaneseq
  %v699 = vshrl.u32 %v698, 7
  %v700 = vsub.s32 6, %v699
  %v701 = vrot.slane %v672, %v700
  %v853 = vunpack.c.l.b16 %v528
  %v854 = vunpack.c.h.b16 %v528
  %v855 = vunpack.c.l.b16 %v529
  %v856 = vunpack.c.h.b16 %v529
  %v857 = vunpack.c.l.b16 %v530
  %v858 = vunpack.c.h.b16 %v530
  %v859 = vunpack.c.l.b16 %v531
  %v860 = vunpack.c.l.b16 %v532
  %v861 = vunpack.c.h.b16 %v532
  %v862 = vunpack.c.l.b16 %v533
  %v863 = vunpack.c.h.b16 %v533
  %v864 = vunpack.c.l.b16 %v534
  %v865 = vunpack.c.h.b16 %v534
  %v866 = vunpack.c.l.b16 %v535
  %v867 = vunpack.c.l.b16 %v536
  %v868 = vunpack.c.h.b16 %v536
  %v869 = vunpack.c.l.b16 %v537
  %v870 = vunpack.c.h.b16 %v537
  %v871 = vunpack.c.l.b16 %v538
  %v872 = vunpack.c.h.b16 %v538
  %v873 = vunpack.c.l.b16 %v539
  %v874 = vunpack.c.l.b16 %v540
  %v875 = vunpack.c.h.b16 %v540
  %v876 = vunpack.c.l.b16 %v541
  %v877 = vunpack.c.h.b16 %v541
  %v878 = vunpack.c.l.b16 %v542
  %v879 = vunpack.c.h.b16 %v542
  %v880 = vunpack.c.l.b16 %v543
  %v881 = vunpack.c.l.b16 %v544
  %v882 = vunpack.c.h.b16 %v544
  %v883 = vunpack.c.l.b16 %v545
  %v884 = vunpack.c.h.b16 %v545
  %v885 = vunpack.c.l.b16 %v546
  %v886 = vunpack.c.h.b16 %v546
  %v887 = vunpack.c.l.b16 %v547
  %v888 = vunpack.c.l.b16 %v548
  %v889 = vunpack.c.h.b16 %v548
  %v890 = vunpack.c.l.b16 %v549
  %v891 = vunpack.c.h.b16 %v549
  %v892 = vunpack.c.l.b16 %v550
  %v893 = vunpack.c.h.b16 %v550
  %v894 = vunpack.c.l.b16 %v551
  %v895 = vunpack.c.l.b16 %v552
  %v896 = vunpack.c.h.b16 %v552
  %v897 = vunpack.c.l.b16 %v553
  %v898 = vunpack.c.h.b16 %v553
  %v899 = vunpack.c.l.b16 %v554
  %v900 = vunpack.c.h.b16 %v554
  %v901 = vunpack.c.l.b16 %v555
  %v902 = vunpack.c.l.b16 %v556
  %v903 = vunpack.c.h.b16 %v556
  %v904 = vunpack.c.l.b16 %v557
  %v905 = vunpack.c.h.b16 %v557
  %v906 = vunpack.c.l.b16 %v558
  %v907 = vunpack.c.h.b16 %v558
  %v908 = vunpack.c.l.b16 %v559
  %v909 = vunpack.c.l.b16 %v560
  %v910 = vunpack.c.h.b16 %v560
  %v911 = vunpack.c.l.b16 %v561
  %v912 = vunpack.c.h.b16 %v561
  %v913 = vunpack.c.l.b16 %v562
  %v914 = vunpack.c.h.b16 %v562
  %v915 = vunpack.c.l.b16 %v563
  %v916 = vunpack.c.l.b16 %v564
  %v917 = vunpack.c.h.b16 %v564
  %v918 = vunpack.c.l.b16 %v565
  %v919 = vunpack.c.h.b16 %v565
  %v920 = vunpack.c.l.b16 %v566
  %v921 = vunpack.c.h.b16 %v566
  %v922 = vunpack.c.l.b16 %v567
  %v923 = vunpack.c.l.b16 %v568
  %v924 = vunpack.c.h.b16 %v568
  %v925 = vunpack.c.l.b16 %v569
  %v926 = vunpack.c.h.b16 %v569
  %v927 = vunpack.c.l.b16 %v570
  %v928 = vunpack.c.h.b16 %v570
  %v929 = vunpack.c.l.b16 %v571
  %v930 = vunpack.c.l.b16 %v572
  %v931 = vunpack.c.h.b16 %v572
  %v932 = vunpack.c.l.b16 %v573
  %v933 = vunpack.c.h.b16 %v573
  %v934 = vunpack.c.l.b16 %v574
  %v935 = vunpack.c.h.b16 %v574
  %v936 = vunpack.c.l.b16 %v575
  %v937 = vunpack.c.l.b16 %v576
  %v938 = vunpack.c.h.b16 %v576
  %v939 = vunpack.c.l.b16 %v577
  %v940 = vunpack.c.h.b16 %v577
  %v941 = vunpack.c.l.b16 %v578
  %v942 = vunpack.c.h.b16 %v578
  %v943 = vunpack.c.l.b16 %v579
  %v944 = vunpack.c.l.b16 %v580
  %v945 = vunpack.c.h.b16 %v580
  %v946 = vunpack.c.l.b16 %v581
  %v947 = vunpack.c.h.b16 %v581
  %v948 = vunpack.c.l.b16 %v582
  %v949 = vunpack.c.h.b16 %v582
  %v950 = vunpack.c.l.b16 %v583
  %v951 = vunpack.c.l.b16 %v584
  %v952 = vunpack.c.h.b16 %v584
  %v953 = vunpack.c.l.b16 %v585
  %v954 = vunpack.c.h.b16 %v585
  %v955 = vunpack.c.l.b16 %v586
  %v956 = vunpack.c.h.b16 %v586
  %v957 = vunpack.c.l.b16 %v587
  %v958 = vunpack.c.l.b16 %v588
  %v959 = vunpack.c.h.b16 %v588
  %v960 = vunpack.c.l.b16 %v589
  %v961 = vunpack.c.h.b16 %v589
  %v962 = vunpack.c.l.b16 %v590
  %v963 = vunpack.c.h.b16 %v590
  %v964 = vunpack.c.l.b16 %v591
  %v965 = vunpack.c.l.b16 %v592
  %v966 = vunpack.c.h.b16 %v592
  %v967 = vunpack.c.l.b16 %v593
  %v968 = vunpack.c.h.b16 %v593
  %v969 = vunpack.c.l.b16 %v594
  %v970 = vunpack.c.h.b16 %v594
  %v971 = vunpack.c.l.b16 %v595
  %v972 = vunpack.c.l.b16 %v596
  %v973 = vunpack.c.h.b16 %v596
  %v974 = vunpack.c.l.b16 %v597
  %v975 = vunpack.c.h.b16 %v597
  %v976 = vunpack.c.l.b16 %v598
  %v977 = vunpack.c.h.b16 %v598
  %v978 = vunpack.c.l.b16 %v599
  %v979 = vunpack.c.l.b16 %v600
  %v980 = vunpack.c.h.b16 %v600
  %v981 = vunpack.c.l.b16 %v601
  %v982 = vunpack.c.h.b16 %v601
  %v983 = vunpack.c.l.b16 %v602
  %v984 = vunpack.c.h.b16 %v602
  %v985 = vunpack.c.l.b16 %v603
  %v986 = vunpack.c.l.b16 %v604
  %v987 = vunpack.c.h.b16 %v604
  %v988 = vunpack.c.l.b16 %v605
  %v989 = vunpack.c.h.b16 %v605
  %v990 = vunpack.c.l.b16 %v606
  %v991 = vunpack.c.h.b16 %v606
  %v992 = vunpack.c.l.b16 %v607
  %v993 = vunpack.c.l.b16 %v608
  %v994 = vunpack.c.h.b16 %v608
  %v995 = vunpack.c.l.b16 %v609
  %v996 = vunpack.c.h.b16 %v609
  %v997 = vunpack.c.l.b16 %v610
  %v998 = vunpack.c.h.b16 %v610
  %v999 = vunpack.c.l.b16 %v611
  %v1000 = vunpack.c.l.b16 %v612
  %v1001 = vunpack.c.h.b16 %v612
  %v1002 = vunpack.c.l.b16 %v613
  %v1003 = vunpack.c.h.b16 %v613
  %v1004 = vunpack.c.l.b16 %v614
  %v1005 = vunpack.c.h.b16 %v614
  %v1006 = vunpack.c.l.b16 %v615
  %v1007 = vunpack.c.l.b16 %v616
  %v1008 = vunpack.c.h.b16 %v616
  %v1009 = vunpack.c.l.b16 %v617
  %v1010 = vunpack.c.h.b16 %v617
  %v1011 = vunpack.c.l.b16 %v618
  %v1012 = vunpack.c.h.b16 %v618
  %v1013 = vunpack.c.l.b16 %v619
  %v1014 = vunpack.c.l.b16 %v620
  %v1015 = vunpack.c.h.b16 %v620
  %v1016 = vunpack.c.l.b16 %v621
  %v1017 = vunpack.c.h.b16 %v621
  %v1018 = vunpack.c.l.b16 %v622
  %v1019 = vunpack.c.h.b16 %v622
  %v1020 = vunpack.c.l.b16 %v623
  %v1021 = vunpack.c.l.b16 %v624
  %v1022 = vunpack.c.h.b16 %v624
  %v1023 = vunpack.c.l.b16 %v625
  %v1024 = vunpack.c.h.b16 %v625
  %v1025 = vunpack.c.l.b16 %v626
  %v1026 = vunpack.c.h.b16 %v626
  %v1027 = vunpack.c.l.b16 %v627
  %v1028 = vunpack.c.l.b16 %v628
  %v1029 = vunpack.c.h.b16 %v628
  %v1030 = vunpack.c.l.b16 %v629
  %v1031 = vunpack.c.h.b16 %v629
  %v1032 = vunpack.c.l.b16 %v630
  %v1033 = vunpack.c.h.b16 %v630
  %v1034 = vunpack.c.l.b16 %v631
  %v1035 = vunpack.c.l.b16 %v632
  %v1036 = vunpack.c.h.b16 %v632
  %v1037 = vunpack.c.l.b16 %v633
  %v1038 = vunpack.c.h.b16 %v633
  %v1039 = vunpack.c.l.b16 %v634
  %v1040 = vunpack.c.h.b16 %v634
  %v1041 = vunpack.c.l.b16 %v635
  %v1042 = vunpack.c.l.b16 %v636
  %v1043 = vunpack.c.h.b16 %v636
  %v1044 = vunpack.c.l.b16 %v637
  %v1045 = vunpack.c.h.b16 %v637
  %v1046 = vunpack.c.l.b16 %v638
  %v1047 = vunpack.c.h.b16 %v638
  %v1048 = vunpack.c.l.b16 %v639
  %v1049 = vunpack.c.l.b16 %v640
  %v1050 = vunpack.c.h.b16 %v640
  %v1051 = vunpack.c.l.b16 %v641
  %v1052 = vunpack.c.h.b16 %v641
  %v1053 = vunpack.c.l.b16 %v642
  %v1054 = vunpack.c.h.b16 %v642
  %v1055 = vunpack.c.l.b16 %v643
  %v1056 = vunpack.c.l.b16 %v644
  %v1057 = vunpack.c.h.b16 %v644
  %v1058 = vunpack.c.l.b16 %v645
  %v1059 = vunpack.c.h.b16 %v645
  %v1060 = vunpack.c.l.b16 %v646
  %v1061 = vunpack.c.h.b16 %v646
  %v1062 = vunpack.c.l.b16 %v647
  %v1063 = vunpack.c.l.b16 %v648
  %v1064 = vunpack.c.h.b16 %v648
  %v1065 = vunpack.c.l.b16 %v649
  %v1066 = vunpack.c.h.b16 %v649
  %v1067 = vunpack.c.l.b16 %v650
  %v1068 = vunpack.c.h.b16 %v650
  %v1069 = vunpack.c.l.b16 %v651
  %v1070 = vunpack.c.l.b16 %v652
  %v1071 = vunpack.c.h.b16 %v652
  %v1072 = vunpack.c.l.b16 %v653
  %v1073 = vunpack.c.h.b16 %v653
  %v1074 = vunpack.c.l.b16 %v654
  %v1075 = vunpack.c.h.b16 %v654
  %v1076 = vunpack.c.l.b16 %v655
  %v1077 = vunpack.c.l.b16 %v656
  %v1078 = vunpack.c.h.b16 %v656
  %v1079 = vunpack.c.l.b16 %v657
  %v1080 = vunpack.c.h.b16 %v657
  %v1081 = vunpack.c.l.b16 %v658
  %v1082 = vunpack.c.h.b16 %v658
  %v1083 = vunpack.c.l.b16 %v659
  %v1084 = vunpack.c.l.b16 %v660
  %v1085 = vunpack.c.h.b16 %v660
  %v1086 = vunpack.c.l.b16 %v661
  %v1087 = vunpack.c.h.b16 %v661
  %v1088 = vunpack.c.l.b16 %v662
  %v1089 = vunpack.c.h.b16 %v662
  %v1090 = vunpack.c.l.b16 %v663
  %v1091 = vunpack.c.l.b16 %v664
  %v1092 = vunpack.c.h.b16 %v664
  %v1093 = vunpack.c.l.b16 %v665
  %v1094 = vunpack.c.h.b16 %v665
  %v1095 = vunpack.c.l.b16 %v666
  %v1096 = vunpack.c.h.b16 %v666
  %v1097 = vunpack.c.l.b16 %v667
  %v1098 = vunpack.c.l.b16 %v668
  %v1099 = vunpack.c.h.b16 %v668
  %v1100 = vunpack.c.l.b16 %v669
  %v1101 = vunpack.c.h.b16 %v669
  %v1102 = vunpack.c.l.b16 %v670
  %v1103 = vunpack.c.h.b16 %v670
  %v1104 = vunpack.c.l.b16 %v671
  %v1105 = vpack.c.b16 %v860, %v853
  %v1106 = vpack.c.b16 %v861, %v854
  %v1107 = vpack.c.b16 %v862, %v855
  %v1108 = vpack.c.b16 %v863, %v856
  %v1109 = vpack.c.b16 %v864, %v857
  %v1110 = vpack.c.b16 %v865, %v858
  %v1111 = vpack.c.b16 %v866, %v859
  %v1112 = vpack.c.b16 %v874, %v867
  %v1113 = vpack.c.b16 %v875, %v868
  %v1114 = vpack.c.b16 %v876, %v869
  %v1115 = vpack.c.b16 %v877, %v870
  %v1116 = vpack.c.b16 %v878, %v871
  %v1117 = vpack.c.b16 %v879, %v872
  %v1118 = vpack.c.b16 %v880, %v873
  %v1119 = vpack.c.b16 %v888, %v881
  %v1120 = vpack.c.b16 %v889, %v882
  %v1121 = vpack.c.b16 %v890, %v883
  %v1122 = vpack.c.b16 %v891, %v884
  %v1123 = vpack.c.b16 %v892, %v885
  %v1124 = vpack.c.b16 %v893, %v886
  %v1125 = vpack.c.b16 %v894, %v887
  %v1126 = vpack.c.b16 %v902, %v895
  %v1127 = vpack.c.b16 %v903, %v896
  %v1128 = vpack.c.b16 %v904, %v897
  %v1129 = vpack.c.b16 %v905, %v898
  %v1130 = vpack.c.b16 %v906, %v899
  %v1131 = vpack.c.b16 %v907, %v900
  %v1132 = vpack.c.b16 %v908, %v901
  %v1133 = vpack.c.b16 %v916, %v909
  %v1134 = vpack.c.b16 %v917, %v910
  %v1135 = vpack.c.b16 %v918, %v911
  %v1136 = vpack.c.b16 %v919, %v912
  %v1137 = vpack.c.b16 %v920, %v913
  %v1138 = vpack.c.b16 %v921, %v914
  %v1139 = vpack.c.b16 %v922, %v915
  %v1140 = vpack.c.b16 %v930, %v923
  %v1141 = vpack.c.b16 %v931, %v924
  %v1142 = vpack.c.b16 %v932, %v925
  %v1143 = vpack.c.b16 %v933, %v926
  %v1144 = vpack.c.b16 %v934, %v927
  %v1145 = vpack.c.b16 %v935, %v928
  %v1146 = vpack.c.b16 %v936, %v929
  %v1147 = vpack.c.b16 %v944, %v937
  %v1148 = vpack.c.b16 %v945, %v938
  %v1149 = vpack.c.b16 %v946, %v939
  %v1150 = vpack.c.b16 %v947, %v940
  %v1151 = vpack.c.b16 %v948, %v941
  %v1152 = vpack.c.b16 %v949, %v942
  %v1153 = vpack.c.b16 %v950, %v943
  %v1154 = vpack.c.b16 %v958, %v951
  %v1155 = vpack.c.b16 %v959, %v952
  %v1156 = vpack.c.b16 %v960, %v953
  %v1157 = vpack.c.b16 %v961, %v954
  %v1158 = vpack.c.b16 %v962, %v955
  %v1159 = vpack.c.b16 %v963, %v956
  %v1160 = vpack.c.b16 %v964, %v957
  %v1161 = vpack.c.b16 %v972, %v965
  %v1162 = vpack.c.b16 %v973, %v966
  %v1163 = vpack.c.b16 %v974, %v967
  %v1164 = vpack.c.b16 %v975, %v968
  %v1165 = vpack.c.b16 %v976, %v969
  %v1166 = vpack.c.b16 %v977, %v970
  %v1167 = vpack.c.b16 %v978, %v971
  %v1168 = vpack.c.b16 %v986, %v979
  %v1169 = vpack.c.b16 %v987, %v980
  %v1170 = vpack.c.b16 %v988, %v981
  %v1171 = vpack.c.b16 %v989, %v982
  %v1172 = vpack.c.b16 %v990, %v983
  %v1173 = vpack.c.b16 %v991, %v984
  %v1174 = vpack.c.b16 %v992, %v985
  %v1175 = vpack.c.b16 %v1000, %v993
  %v1176 = vpack.c.b16 %v1001, %v994
  %v1177 = vpack.c.b16 %v1002, %v995
  %v1178 = vpack.c.b16 %v1003, %v996
  %v1179 = vpack.c.b16 %v1004, %v997
  %v1180 = vpack.c.b16 %v1005, %v998
  %v1181 = vpack.c.b16 %v1006, %v999
  %v1182 = vpack.c.b16 %v1014, %v1007
  %v1183 = vpack.c.b16 %v1015, %v1008
  %v1184 = vpack.c.b16 %v1016, %v1009
  %v1185 = vpack.c.b16 %v1017, %v1010
  %v1186 = vpack.c.b16 %v1018, %v1011
  %v1187 = vpack.c.b16 %v1019, %v1012
  %v1188 = vpack.c.b16 %v1020, %v1013
  %v1189 = vpack.c.b16 %v1028, %v1021
  %v1190 = vpack.c.b16 %v1029, %v1022
  %v1191 = vpack.c.b16 %v1030, %v1023
  %v1192 = vpack.c.b16 %v1031, %v1024
  %v1193 = vpack.c.b16 %v1032, %v1025
  %v1194 = vpack.c.b16 %v1033, %v1026
  %v1195 = vpack.c.b16 %v1034, %v1027
  %v1196 = vpack.c.b16 %v1042, %v1035
  %v1197 = vpack.c.b16 %v1043, %v1036
  %v1198 = vpack.c.b16 %v1044, %v1037
  %v1199 = vpack.c.b16 %v1045, %v1038
  %v1200 = vpack.c.b16 %v1046, %v1039
  %v1201 = vpack.c.b16 %v1047, %v1040
  %v1202 = vpack.c.b16 %v1048, %v1041
  %v1203 = vpack.c.b16 %v1056, %v1049
  %v1204 = vpack.c.b16 %v1057, %v1050
  %v1205 = vpack.c.b16 %v1058, %v1051
  %v1206 = vpack.c.b16 %v1059, %v1052
  %v1207 = vpack.c.b16 %v1060, %v1053
  %v1208 = vpack.c.b16 %v1061, %v1054
  %v1209 = vpack.c.b16 %v1062, %v1055
  %v1210 = vpack.c.b16 %v1070, %v1063
  %v1211 = vpack.c.b16 %v1071, %v1064
  %v1212 = vpack.c.b16 %v1072, %v1065
  %v1213 = vpack.c.b16 %v1073, %v1066
  %v1214 = vpack.c.b16 %v1074, %v1067
  %v1215 = vpack.c.b16 %v1075, %v1068
  %v1216 = vpack.c.b16 %v1076, %v1069
  %v1217 = vpack.c.b16 %v1084, %v1077
  %v1218 = vpack.c.b16 %v1085, %v1078
  %v1219 = vpack.c.b16 %v1086, %v1079
  %v1220 = vpack.c.b16 %v1087, %v1080
  %v1221 = vpack.c.b16 %v1088, %v1081
  %v1222 = vpack.c.b16 %v1089, %v1082
  %v1223 = vpack.c.b16 %v1090, %v1083
  %v1224 = vpack.c.b16 %v1098, %v1091
  %v1225 = vpack.c.b16 %v1099, %v1092
  %v1226 = vpack.c.b16 %v1100, %v1093
  %v1227 = vpack.c.b16 %v1101, %v1094
  %v1228 = vpack.c.b16 %v1102, %v1095
  %v1229 = vpack.c.b16 %v1103, %v1096
  %v1230 = vpack.c.b16 %v1104, %v1097
  %v1358 = vsel %vm76, %v506, 0
  %v1361 = vsel %vm76, %v509, 0
  %v1364 = vsel %vm76, %v512, 0
  %v1367 = vsel %vm76, %v515, 0
  %v1370 = vsel %vm76, %v518, 0
  %v1373 = vsel %vm76, %v521, 0
  %v1376 = vsel %vm76, %v524, 0
  %v1379 = vsel %vm76, %v527, 0
  %1381 = vmatprep.subr.bf16.mxu0 %v1106
  %1382 = vmatpush1.bf16.msra.mxu0 %v1105
  %1383 = vmatprep.subr.bf16.mxu0 %v1113
  %1384 = vmatpush1.bf16.msra.mxu0 %v1112
  %1385 = vmatprep.subr.bf16.mxu0 %v1120
  %1386 = vmatpush1.bf16.msra.mxu0 %v1119
  %1387 = vmatprep.subr.bf16.mxu0 %v1127
  %1388 = vmatpush1.bf16.msra.mxu0 %v1126
  %1389 = vmatprep.subr.bf16.mxu0 %v1134
  %1390 = vmatpush1.bf16.msra.mxu0 %v1133
  %1391 = vmatprep.subr.bf16.mxu0 %v1141
  %1392 = vmatpush1.bf16.msra.mxu0 %v1140
  %1393 = vmatprep.subr.bf16.mxu0 %v1148
  %1394 = vmatpush1.bf16.msra.mxu0 %v1147
  %1395 = vmatprep.subr.bf16.mxu0 %v1155
  %1396 = vmatpush1.bf16.msra.mxu0 %v1154
  %1397 = vmatprep.subr.bf16.mxu0 %v1162
  %1398 = vmatpush1.bf16.msra.mxu0 %v1161
  %1399 = vmatprep.subr.bf16.mxu0 %v1169
  %1400 = vmatpush1.bf16.msra.mxu0 %v1168
  %1401 = vmatprep.subr.bf16.mxu0 %v1176
  %1402 = vmatpush1.bf16.msra.mxu0 %v1175
  %1403 = vmatprep.subr.bf16.mxu0 %v1183
  %1404 = vmatpush1.bf16.msra.mxu0 %v1182
  %1405 = vmatprep.subr.bf16.mxu0 %v1190
  %1406 = vmatpush1.bf16.msra.mxu0 %v1189
  %1407 = vmatprep.subr.bf16.mxu0 %v1197
  %1408 = vmatpush1.bf16.msra.mxu0 %v1196
  %1409 = vmatprep.subr.bf16.mxu0 %v1204
  %1410 = vmatpush1.bf16.msra.mxu0 %v1203
  %1411 = vmatprep.subr.bf16.mxu0 %v1211
  %1412 = vmatpush1.bf16.msra.mxu0 %v1210
  %1413 = vmatprep.mubr.bf16.mxu0 %v505
  %1414 = vmatmul.mubr.bf16.gmra.mrb[0].mxu0 %v504
  %v1415 = vpop.f32.mrb[0].mxu0
  %v1416 = vadd.f32 %v677, %v1415
  %v1417 = vpop.f32.mrb[0].mxu0
  %v1418 = vadd.f32 %v681, %v1417
  %v1419 = vpop.f32.mrb[0].mxu0
  %v1420 = vadd.f32 %v677, %v1419
  %v1421 = vpop.f32.mrb[0].mxu0
  %v1422 = vadd.f32 %v681, %v1421
  %1423 = vmatprep.mubr.bf16.mxu0 %v508
  %1424 = vmatmul.mubr.bf16.gmra.mrb[0].mxu0 %v507
  %v1425 = vpop.f32.mrb[0].mxu0
  %v1426 = vadd.f32 %v677, %v1425
  %v1427 = vpop.f32.mrb[0].mxu0
  %v1428 = vadd.f32 %v681, %v1427
  %v1429 = vpop.f32.mrb[0].mxu0
  %v1430 = vadd.f32 %v677, %v1429
  %v1431 = vpop.f32.mrb[0].mxu0
  %v1432 = vadd.f32 %v681, %v1431
  %1433 = vmatprep.mubr.bf16.mxu0 %v511
  %1434 = vmatmul.mubr.bf16.gmra.mrb[0].mxu0 %v510
  %v1435 = vpop.f32.mrb[0].mxu0
  %v1436 = vadd.f32 %v677, %v1435
  %v1437 = vpop.f32.mrb[0].mxu0
  %v1438 = vadd.f32 %v681, %v1437
  %v1439 = vpop.f32.mrb[0].mxu0
  %v1440 = vadd.f32 %v677, %v1439
  %v1441 = vpop.f32.mrb[0].mxu0
  %v1442 = vadd.f32 %v681, %v1441
  %1443 = vmatprep.mubr.bf16.mxu0 %v514
  %1444 = vmatmul.mubr.bf16.gmra.mrb[0].mxu0 %v513
  %v1445 = vpop.f32.mrb[0].mxu0
  %v1446 = vadd.f32 %v677, %v1445
  %v1447 = vpop.f32.mrb[0].mxu0
  %v1448 = vadd.f32 %v681, %v1447
  %v1449 = vpop.f32.mrb[0].mxu0
  %v1450 = vadd.f32 %v677, %v1449
  %v1451 = vpop.f32.mrb[0].mxu0
  %v1452 = vadd.f32 %v681, %v1451
  %1453 = vmatprep.mubr.bf16.mxu0 %v517
  %1454 = vmatmul.mubr.bf16.gmra.mrb[0].mxu0 %v516
  %v1455 = vpop.f32.mrb[0].mxu0
  %v1456 = vadd.f32 %v677, %v1455
  %v1457 = vpop.f32.mrb[0].mxu0
  %v1458 = vadd.f32 %v681, %v1457
  %v1459 = vpop.f32.mrb[0].mxu0
  %v1460 = vadd.f32 %v677, %v1459
  %v1461 = vpop.f32.mrb[0].mxu0
  %v1462 = vadd.f32 %v681, %v1461
  %1463 = vmatprep.mubr.bf16.mxu0 %v520
  %1464 = vmatmul.mubr.bf16.gmra.mrb[0].mxu0 %v519
  %v1465 = vpop.f32.mrb[0].mxu0
  %v1466 = vadd.f32 %v677, %v1465
  %v1467 = vpop.f32.mrb[0].mxu0
  %v1468 = vadd.f32 %v681, %v1467
  %v1469 = vpop.f32.mrb[0].mxu0
  %v1470 = vadd.f32 %v677, %v1469
  %v1471 = vpop.f32.mrb[0].mxu0
  %v1472 = vadd.f32 %v681, %v1471
  %1473 = vmatprep.mubr.bf16.mxu0 %v523
  %1474 = vmatmul.mubr.bf16.gmra.mrb[0].mxu0 %v522
  %v1475 = vpop.f32.mrb[0].mxu0
  %v1476 = vadd.f32 %v677, %v1475
  %v1477 = vpop.f32.mrb[0].mxu0
  %v1478 = vadd.f32 %v681, %v1477
  %v1479 = vpop.f32.mrb[0].mxu0
  %v1480 = vadd.f32 %v677, %v1479
  %v1481 = vpop.f32.mrb[0].mxu0
  %v1482 = vadd.f32 %v681, %v1481
  %1483 = vmatprep.mubr.bf16.mxu0 %v526
  %1484 = vmatmul.mubr.bf16.gmra.mrb[0].mxu0 %v525
  %v1485 = vpop.f32.mrb[0].mxu0
  %v1486 = vadd.f32 %v677, %v1485
  %v1487 = vpop.f32.mrb[0].mxu0
  %v1488 = vadd.f32 %v681, %v1487
  %v1489 = vpop.f32.mrb[0].mxu0
  %v1490 = vadd.f32 %v677, %v1489
  %v1491 = vpop.f32.mrb[0].mxu0
  %v1492 = vadd.f32 %v681, %v1491
  %1493 = vdwg.mxu0
  %1494 = vmatprep.subr.bf16.mxu0 %v1218
  %1495 = vmatpush1.bf16.msra.mxu0 %v1217
  %1496 = vmatprep.subr.bf16.mxu0 %v1225
  %1497 = vmatpush1.bf16.msra.mxu0 %v1224
  %1498 = vmatprep.subr.bf16.mxu0 0
  %1499 = vmatpush1.bf16.msra.mxu0 0
  %1500 = vmatprep.subr.bf16.mxu0 0
  %1501 = vmatpush1.bf16.msra.mxu0 0
  %1502 = vmatprep.subr.bf16.mxu0 0
  %1503 = vmatpush1.bf16.msra.mxu0 0
  %1504 = vmatprep.subr.bf16.mxu0 0
  %1505 = vmatpush1.bf16.msra.mxu0 0
  %1506 = vmatprep.subr.bf16.mxu0 0
  %1507 = vmatpush1.bf16.msra.mxu0 0
  %1508 = vmatprep.subr.bf16.mxu0 0
  %1509 = vmatpush1.bf16.msra.mxu0 0
  %1510 = vmatprep.subr.bf16.mxu0 0
  %1511 = vmatpush1.bf16.msra.mxu0 0
  %1512 = vmatprep.subr.bf16.mxu0 0
  %1513 = vmatpush1.bf16.msra.mxu0 0
  %1514 = vmatprep.subr.bf16.mxu0 0
  %1515 = vmatpush1.bf16.msra.mxu0 0
  %1516 = vmatprep.subr.bf16.mxu0 0
  %1517 = vmatpush1.bf16.msra.mxu0 0
  %1518 = vmatprep.subr.bf16.mxu0 0
  %1519 = vmatpush1.bf16.msra.mxu0 0
  %1520 = vmatprep.subr.bf16.mxu0 0
  %1521 = vmatpush1.bf16.msra.mxu0 0
  %1522 = vmatprep.subr.bf16.mxu0 0
  %1523 = vmatpush1.bf16.msra.mxu0 0
  %1524 = vmatprep.subr.bf16.mxu0 0
  %1525 = vmatpush1.bf16.msra.mxu0 0
  %1526 = vmatprep.mubr.bf16.mxu0 0
  %1527 = vmatmul.mubr.bf16.gmra.mrb[0].mxu0 %v1358
  %v1528 = vpop.f32.mrb[0].mxu0
  %v1529 = vadd.f32 %v1416, %v1528
  %v1530 = vpop.f32.mrb[0].mxu0
  %v1531 = vadd.f32 %v1418, %v1530
  %v1532 = vpop.f32.mrb[0].mxu0
  %v1533 = vadd.f32 %v1420, %v1532
  %v1534 = vpop.f32.mrb[0].mxu0
  %v1535 = vadd.f32 %v1422, %v1534
  %1536 = vmatprep.mubr.bf16.mxu0 0
  %1537 = vmatmul.mubr.bf16.gmra.mrb[0].mxu0 %v1361
  %v1538 = vpop.f32.mrb[0].mxu0
  %v1539 = vadd.f32 %v1426, %v1538
  %v1540 = vpop.f32.mrb[0].mxu0
  %v1541 = vadd.f32 %v1428, %v1540
  %v1542 = vpop.f32.mrb[0].mxu0
  %v1543 = vadd.f32 %v1430, %v1542
  %v1544 = vpop.f32.mrb[0].mxu0
  %v1545 = vadd.f32 %v1432, %v1544
  %1546 = vmatprep.mubr.bf16.mxu0 0
  %1547 = vmatmul.mubr.bf16.gmra.mrb[0].mxu0 %v1364
  %v1548 = vpop.f32.mrb[0].mxu0
  %v1549 = vadd.f32 %v1436, %v1548
  %v1550 = vpop.f32.mrb[0].mxu0
  %v1551 = vadd.f32 %v1438, %v1550
  %v1552 = vpop.f32.mrb[0].mxu0
  %v1553 = vadd.f32 %v1440, %v1552
  %v1554 = vpop.f32.mrb[0].mxu0
  %v1555 = vadd.f32 %v1442, %v1554
  %1556 = vmatprep.mubr.bf16.mxu0 0
  %1557 = vmatmul.mubr.bf16.gmra.mrb[0].mxu0 %v1367
  %v1558 = vpop.f32.mrb[0].mxu0
  %v1559 = vadd.f32 %v1446, %v1558
  %v1560 = vpop.f32.mrb[0].mxu0
  %v1561 = vadd.f32 %v1448, %v1560
  %v1562 = vpop.f32.mrb[0].mxu0
  %v1563 = vadd.f32 %v1450, %v1562
  %v1564 = vpop.f32.mrb[0].mxu0
  %v1565 = vadd.f32 %v1452, %v1564
  %1566 = vmatprep.mubr.bf16.mxu0 0
  %1567 = vmatmul.mubr.bf16.gmra.mrb[0].mxu0 %v1370
  %v1568 = vpop.f32.mrb[0].mxu0
  %v1569 = vadd.f32 %v1456, %v1568
  %v1570 = vpop.f32.mrb[0].mxu0
  %v1571 = vadd.f32 %v1458, %v1570
  %v1572 = vpop.f32.mrb[0].mxu0
  %v1573 = vadd.f32 %v1460, %v1572
  %v1574 = vpop.f32.mrb[0].mxu0
  %v1575 = vadd.f32 %v1462, %v1574
  %1576 = vmatprep.mubr.bf16.mxu0 0
  %1577 = vmatmul.mubr.bf16.gmra.mrb[0].mxu0 %v1373
  %v1578 = vpop.f32.mrb[0].mxu0
  %v1579 = vadd.f32 %v1466, %v1578
  %v1580 = vpop.f32.mrb[0].mxu0
  %v1581 = vadd.f32 %v1468, %v1580
  %v1582 = vpop.f32.mrb[0].mxu0
  %v1583 = vadd.f32 %v1470, %v1582
  %v1584 = vpop.f32.mrb[0].mxu0
  %v1585 = vadd.f32 %v1472, %v1584
  %1586 = vmatprep.mubr.bf16.mxu0 0
  %1587 = vmatmul.mubr.bf16.gmra.mrb[0].mxu0 %v1376
  %v1588 = vpop.f32.mrb[0].mxu0
  %v1589 = vadd.f32 %v1476, %v1588
  %v1590 = vpop.f32.mrb[0].mxu0
  %v1591 = vadd.f32 %v1478, %v1590
  %v1592 = vpop.f32.mrb[0].mxu0
  %v1593 = vadd.f32 %v1480, %v1592
  %v1594 = vpop.f32.mrb[0].mxu0
  %v1595 = vadd.f32 %v1482, %v1594
  %1596 = vmatprep.mubr.bf16.mxu0 0
  %1597 = vmatmul.mubr.bf16.gmra.mrb[0].mxu0 %v1379
  %v1598 = vpop.f32.mrb[0].mxu0
  %v1599 = vadd.f32 %v1486, %v1598
  %v1600 = vpop.f32.mrb[0].mxu0
  %v1601 = vadd.f32 %v1488, %v1600
  %v1602 = vpop.f32.mrb[0].mxu0
  %v1603 = vadd.f32 %v1490, %v1602
  %v1604 = vpop.f32.mrb[0].mxu0
  %v1605 = vadd.f32 %v1492, %v1604
  %1606 = vdwg.mxu0
  %1607 = vmatprep.subr.bf16.mxu0 %v1108
  %1608 = vmatpush1.bf16.msra.mxu0 %v1107
  %1609 = vmatprep.subr.bf16.mxu0 %v1115
  %1610 = vmatpush1.bf16.msra.mxu0 %v1114
  %1611 = vmatprep.subr.bf16.mxu0 %v1122
  %1612 = vmatpush1.bf16.msra.mxu0 %v1121
  %1613 = vmatprep.subr.bf16.mxu0 %v1129
  %1614 = vmatpush1.bf16.msra.mxu0 %v1128
  %1615 = vmatprep.subr.bf16.mxu0 %v1136
  %1616 = vmatpush1.bf16.msra.mxu0 %v1135
  %1617 = vmatprep.subr.bf16.mxu0 %v1143
  %1618 = vmatpush1.bf16.msra.mxu0 %v1142
  %1619 = vmatprep.subr.bf16.mxu0 %v1150
  %1620 = vmatpush1.bf16.msra.mxu0 %v1149
  %1621 = vmatprep.subr.bf16.mxu0 %v1157
  %1622 = vmatpush1.bf16.msra.mxu0 %v1156
  %1623 = vmatprep.subr.bf16.mxu0 %v1164
  %1624 = vmatpush1.bf16.msra.mxu0 %v1163
  %1625 = vmatprep.subr.bf16.mxu0 %v1171
  %1626 = vmatpush1.bf16.msra.mxu0 %v1170
  %1627 = vmatprep.subr.bf16.mxu0 %v1178
  %1628 = vmatpush1.bf16.msra.mxu0 %v1177
  %1629 = vmatprep.subr.bf16.mxu0 %v1185
  %1630 = vmatpush1.bf16.msra.mxu0 %v1184
  %1631 = vmatprep.subr.bf16.mxu0 %v1192
  %1632 = vmatpush1.bf16.msra.mxu0 %v1191
  %1633 = vmatprep.subr.bf16.mxu0 %v1199
  %1634 = vmatpush1.bf16.msra.mxu0 %v1198
  %1635 = vmatprep.subr.bf16.mxu0 %v1206
  %1636 = vmatpush1.bf16.msra.mxu0 %v1205
  %1637 = vmatprep.subr.bf16.mxu0 %v1213
  %1638 = vmatpush1.bf16.msra.mxu0 %v1212
  %1639 = vmatprep.mubr.bf16.mxu0 %v505
  %1640 = vmatmul.mubr.bf16.gmra.mrb[0].mxu0 %v504
  %v1641 = vpop.f32.mrb[0].mxu0
  %v1642 = vadd.f32 %v685, %v1641
  %v1643 = vpop.f32.mrb[0].mxu0
  %v1644 = vadd.f32 %v689, %v1643
  %v1645 = vpop.f32.mrb[0].mxu0
  %v1646 = vadd.f32 %v685, %v1645
  %v1647 = vpop.f32.mrb[0].mxu0
  %v1648 = vadd.f32 %v689, %v1647
  %1649 = vmatprep.mubr.bf16.mxu0 %v508
  %1650 = vmatmul.mubr.bf16.gmra.mrb[0].mxu0 %v507
  %v1651 = vpop.f32.mrb[0].mxu0
  %v1652 = vadd.f32 %v685, %v1651
  %v1653 = vpop.f32.mrb[0].mxu0
  %v1654 = vadd.f32 %v689, %v1653
  %v1655 = vpop.f32.mrb[0].mxu0
  %v1656 = vadd.f32 %v685, %v1655
  %v1657 = vpop.f32.mrb[0].mxu0
  %v1658 = vadd.f32 %v689, %v1657
  %1659 = vmatprep.mubr.bf16.mxu0 %v511
  %1660 = vmatmul.mubr.bf16.gmra.mrb[0].mxu0 %v510
  %v1661 = vpop.f32.mrb[0].mxu0
  %v1662 = vadd.f32 %v685, %v1661
  %v1663 = vpop.f32.mrb[0].mxu0
  %v1664 = vadd.f32 %v689, %v1663
  %v1665 = vpop.f32.mrb[0].mxu0
  %v1666 = vadd.f32 %v685, %v1665
  %v1667 = vpop.f32.mrb[0].mxu0
  %v1668 = vadd.f32 %v689, %v1667
  %1669 = vmatprep.mubr.bf16.mxu0 %v514
  %1670 = vmatmul.mubr.bf16.gmra.mrb[0].mxu0 %v513
  %v1671 = vpop.f32.mrb[0].mxu0
  %v1672 = vadd.f32 %v685, %v1671
  %v1673 = vpop.f32.mrb[0].mxu0
  %v1674 = vadd.f32 %v689, %v1673
  %v1675 = vpop.f32.mrb[0].mxu0
  %v1676 = vadd.f32 %v685, %v1675
  %v1677 = vpop.f32.mrb[0].mxu0
  %v1678 = vadd.f32 %v689, %v1677
  %1679 = vmatprep.mubr.bf16.mxu0 %v517
  %1680 = vmatmul.mubr.bf16.gmra.mrb[0].mxu0 %v516
  %v1681 = vpop.f32.mrb[0].mxu0
  %v1682 = vadd.f32 %v685, %v1681
  %v1683 = vpop.f32.mrb[0].mxu0
  %v1684 = vadd.f32 %v689, %v1683
  %v1685 = vpop.f32.mrb[0].mxu0
  %v1686 = vadd.f32 %v685, %v1685
  %v1687 = vpop.f32.mrb[0].mxu0
  %v1688 = vadd.f32 %v689, %v1687
  %1689 = vmatprep.mubr.bf16.mxu0 %v520
  %1690 = vmatmul.mubr.bf16.gmra.mrb[0].mxu0 %v519
  %v1691 = vpop.f32.mrb[0].mxu0
  %v1692 = vadd.f32 %v685, %v1691
  %v1693 = vpop.f32.mrb[0].mxu0
  %v1694 = vadd.f32 %v689, %v1693
  %v1695 = vpop.f32.mrb[0].mxu0
  %v1696 = vadd.f32 %v685, %v1695
  %v1697 = vpop.f32.mrb[0].mxu0
  %v1698 = vadd.f32 %v689, %v1697
  %1699 = vmatprep.mubr.bf16.mxu0 %v523
  %1700 = vmatmul.mubr.bf16.gmra.mrb[0].mxu0 %v522
  %v1701 = vpop.f32.mrb[0].mxu0
  %v1702 = vadd.f32 %v685, %v1701
  %v1703 = vpop.f32.mrb[0].mxu0
  %v1704 = vadd.f32 %v689, %v1703
  %v1705 = vpop.f32.mrb[0].mxu0
  %v1706 = vadd.f32 %v685, %v1705
  %v1707 = vpop.f32.mrb[0].mxu0
  %v1708 = vadd.f32 %v689, %v1707
  %1709 = vmatprep.mubr.bf16.mxu0 %v526
  %1710 = vmatmul.mubr.bf16.gmra.mrb[0].mxu0 %v525
  %v1711 = vpop.f32.mrb[0].mxu0
  %v1712 = vadd.f32 %v685, %v1711
  %v1713 = vpop.f32.mrb[0].mxu0
  %v1714 = vadd.f32 %v689, %v1713
  %v1715 = vpop.f32.mrb[0].mxu0
  %v1716 = vadd.f32 %v685, %v1715
  %v1717 = vpop.f32.mrb[0].mxu0
  %v1718 = vadd.f32 %v689, %v1717
  %1719 = vdwg.mxu0
  %1720 = vmatprep.subr.bf16.mxu0 %v1220
  %1721 = vmatpush1.bf16.msra.mxu0 %v1219
  %1722 = vmatprep.subr.bf16.mxu0 %v1227
  %1723 = vmatpush1.bf16.msra.mxu0 %v1226
  %1724 = vmatprep.subr.bf16.mxu0 0
  %1725 = vmatpush1.bf16.msra.mxu0 0
  %1726 = vmatprep.subr.bf16.mxu0 0
  %1727 = vmatpush1.bf16.msra.mxu0 0
  %1728 = vmatprep.subr.bf16.mxu0 0
  %1729 = vmatpush1.bf16.msra.mxu0 0
  %1730 = vmatprep.subr.bf16.mxu0 0
  %1731 = vmatpush1.bf16.msra.mxu0 0
  %1732 = vmatprep.subr.bf16.mxu0 0
  %1733 = vmatpush1.bf16.msra.mxu0 0
  %1734 = vmatprep.subr.bf16.mxu0 0
  %1735 = vmatpush1.bf16.msra.mxu0 0
  %1736 = vmatprep.subr.bf16.mxu0 0
  %1737 = vmatpush1.bf16.msra.mxu0 0
  %1738 = vmatprep.subr.bf16.mxu0 0
  %1739 = vmatpush1.bf16.msra.mxu0 0
  %1740 = vmatprep.subr.bf16.mxu0 0
  %1741 = vmatpush1.bf16.msra.mxu0 0
  %1742 = vmatprep.subr.bf16.mxu0 0
  %1743 = vmatpush1.bf16.msra.mxu0 0
  %1744 = vmatprep.subr.bf16.mxu0 0
  %1745 = vmatpush1.bf16.msra.mxu0 0
  %1746 = vmatprep.subr.bf16.mxu0 0
  %1747 = vmatpush1.bf16.msra.mxu0 0
  %1748 = vmatprep.subr.bf16.mxu0 0
  %1749 = vmatpush1.bf16.msra.mxu0 0
  %1750 = vmatprep.subr.bf16.mxu0 0
  %1751 = vmatpush1.bf16.msra.mxu0 0
  %1752 = vmatprep.mubr.bf16.mxu0 0
  %1753 = vmatmul.mubr.bf16.gmra.mrb[0].mxu0 %v1358
  %v1754 = vpop.f32.mrb[0].mxu0
  %v1755 = vadd.f32 %v1642, %v1754
  %v1756 = vpop.f32.mrb[0].mxu0
  %v1757 = vadd.f32 %v1644, %v1756
  %v1758 = vpop.f32.mrb[0].mxu0
  %v1759 = vadd.f32 %v1646, %v1758
  %v1760 = vpop.f32.mrb[0].mxu0
  %v1761 = vadd.f32 %v1648, %v1760
  %1762 = vmatprep.mubr.bf16.mxu0 0
  %1763 = vmatmul.mubr.bf16.gmra.mrb[0].mxu0 %v1361
  %v1764 = vpop.f32.mrb[0].mxu0
  %v1765 = vadd.f32 %v1652, %v1764
  %v1766 = vpop.f32.mrb[0].mxu0
  %v1767 = vadd.f32 %v1654, %v1766
  %v1768 = vpop.f32.mrb[0].mxu0
  %v1769 = vadd.f32 %v1656, %v1768
  %v1770 = vpop.f32.mrb[0].mxu0
  %v1771 = vadd.f32 %v1658, %v1770
  %1772 = vmatprep.mubr.bf16.mxu0 0
  %1773 = vmatmul.mubr.bf16.gmra.mrb[0].mxu0 %v1364
  %v1774 = vpop.f32.mrb[0].mxu0
  %v1775 = vadd.f32 %v1662, %v1774
  %v1776 = vpop.f32.mrb[0].mxu0
  %v1777 = vadd.f32 %v1664, %v1776
  %v1778 = vpop.f32.mrb[0].mxu0
  %v1779 = vadd.f32 %v1666, %v1778
  %v1780 = vpop.f32.mrb[0].mxu0
  %v1781 = vadd.f32 %v1668, %v1780
  %1782 = vmatprep.mubr.bf16.mxu0 0
  %1783 = vmatmul.mubr.bf16.gmra.mrb[0].mxu0 %v1367
  %v1784 = vpop.f32.mrb[0].mxu0
  %v1785 = vadd.f32 %v1672, %v1784
  %v1786 = vpop.f32.mrb[0].mxu0
  %v1787 = vadd.f32 %v1674, %v1786
  %v1788 = vpop.f32.mrb[0].mxu0
  %v1789 = vadd.f32 %v1676, %v1788
  %v1790 = vpop.f32.mrb[0].mxu0
  %v1791 = vadd.f32 %v1678, %v1790
  %1792 = vmatprep.mubr.bf16.mxu0 0
  %1793 = vmatmul.mubr.bf16.gmra.mrb[0].mxu0 %v1370
  %v1794 = vpop.f32.mrb[0].mxu0
  %v1795 = vadd.f32 %v1682, %v1794
  %v1796 = vpop.f32.mrb[0].mxu0
  %v1797 = vadd.f32 %v1684, %v1796
  %v1798 = vpop.f32.mrb[0].mxu0
  %v1799 = vadd.f32 %v1686, %v1798
  %v1800 = vpop.f32.mrb[0].mxu0
  %v1801 = vadd.f32 %v1688, %v1800
  %1802 = vmatprep.mubr.bf16.mxu0 0
  %1803 = vmatmul.mubr.bf16.gmra.mrb[0].mxu0 %v1373
  %v1804 = vpop.f32.mrb[0].mxu0
  %v1805 = vadd.f32 %v1692, %v1804
  %v1806 = vpop.f32.mrb[0].mxu0
  %v1807 = vadd.f32 %v1694, %v1806
  %v1808 = vpop.f32.mrb[0].mxu0
  %v1809 = vadd.f32 %v1696, %v1808
  %v1810 = vpop.f32.mrb[0].mxu0
  %v1811 = vadd.f32 %v1698, %v1810
  %1812 = vmatprep.mubr.bf16.mxu0 0
  %1813 = vmatmul.mubr.bf16.gmra.mrb[0].mxu0 %v1376
  %v1814 = vpop.f32.mrb[0].mxu0
  %v1815 = vadd.f32 %v1702, %v1814
  %v1816 = vpop.f32.mrb[0].mxu0
  %v1817 = vadd.f32 %v1704, %v1816
  %v1818 = vpop.f32.mrb[0].mxu0
  %v1819 = vadd.f32 %v1706, %v1818
  %v1820 = vpop.f32.mrb[0].mxu0
  %v1821 = vadd.f32 %v1708, %v1820
  %1822 = vmatprep.mubr.bf16.mxu0 0
  %1823 = vmatmul.mubr.bf16.gmra.mrb[0].mxu0 %v1379
  %v1824 = vpop.f32.mrb[0].mxu0
  %v1825 = vadd.f32 %v1712, %v1824
  %v1826 = vpop.f32.mrb[0].mxu0
  %v1827 = vadd.f32 %v1714, %v1826
  %v1828 = vpop.f32.mrb[0].mxu0
  %v1829 = vadd.f32 %v1716, %v1828
  %v1830 = vpop.f32.mrb[0].mxu0
  %v1831 = vadd.f32 %v1718, %v1830
  %1832 = vdwg.mxu0
  %1833 = vmatprep.subr.bf16.mxu0 %v1110
  %1834 = vmatpush1.bf16.msra.mxu0 %v1109
  %1835 = vmatprep.subr.bf16.mxu0 %v1117
  %1836 = vmatpush1.bf16.msra.mxu0 %v1116
  %1837 = vmatprep.subr.bf16.mxu0 %v1124
  %1838 = vmatpush1.bf16.msra.mxu0 %v1123
  %1839 = vmatprep.subr.bf16.mxu0 %v1131
  %1840 = vmatpush1.bf16.msra.mxu0 %v1130
  %1841 = vmatprep.subr.bf16.mxu0 %v1138
  %1842 = vmatpush1.bf16.msra.mxu0 %v1137
  %1843 = vmatprep.subr.bf16.mxu0 %v1145
  %1844 = vmatpush1.bf16.msra.mxu0 %v1144
  %1845 = vmatprep.subr.bf16.mxu0 %v1152
  %1846 = vmatpush1.bf16.msra.mxu0 %v1151
  %1847 = vmatprep.subr.bf16.mxu0 %v1159
  %1848 = vmatpush1.bf16.msra.mxu0 %v1158
  %1849 = vmatprep.subr.bf16.mxu0 %v1166
  %1850 = vmatpush1.bf16.msra.mxu0 %v1165
  %1851 = vmatprep.subr.bf16.mxu0 %v1173
  %1852 = vmatpush1.bf16.msra.mxu0 %v1172
  %1853 = vmatprep.subr.bf16.mxu0 %v1180
  %1854 = vmatpush1.bf16.msra.mxu0 %v1179
  %1855 = vmatprep.subr.bf16.mxu0 %v1187
  %1856 = vmatpush1.bf16.msra.mxu0 %v1186
  %1857 = vmatprep.subr.bf16.mxu0 %v1194
  %1858 = vmatpush1.bf16.msra.mxu0 %v1193
  %1859 = vmatprep.subr.bf16.mxu0 %v1201
  %1860 = vmatpush1.bf16.msra.mxu0 %v1200
  %1861 = vmatprep.subr.bf16.mxu0 %v1208
  %1862 = vmatpush1.bf16.msra.mxu0 %v1207
  %1863 = vmatprep.subr.bf16.mxu0 %v1215
  %1864 = vmatpush1.bf16.msra.mxu0 %v1214
  %1865 = vmatprep.mubr.bf16.mxu0 %v505
  %1866 = vmatmul.mubr.bf16.gmra.mrb[0].mxu0 %v504
  %v1867 = vpop.f32.mrb[0].mxu0
  %v1868 = vadd.f32 %v693, %v1867
  %v1869 = vpop.f32.mrb[0].mxu0
  %v1870 = vadd.f32 %v697, %v1869
  %v1871 = vpop.f32.mrb[0].mxu0
  %v1872 = vadd.f32 %v693, %v1871
  %v1873 = vpop.f32.mrb[0].mxu0
  %v1874 = vadd.f32 %v697, %v1873
  %1875 = vmatprep.mubr.bf16.mxu0 %v508
  %1876 = vmatmul.mubr.bf16.gmra.mrb[0].mxu0 %v507
  %v1877 = vpop.f32.mrb[0].mxu0
  %v1878 = vadd.f32 %v693, %v1877
  %v1879 = vpop.f32.mrb[0].mxu0
  %v1880 = vadd.f32 %v697, %v1879
  %v1881 = vpop.f32.mrb[0].mxu0
  %v1882 = vadd.f32 %v693, %v1881
  %v1883 = vpop.f32.mrb[0].mxu0
  %v1884 = vadd.f32 %v697, %v1883
  %1885 = vmatprep.mubr.bf16.mxu0 %v511
  %1886 = vmatmul.mubr.bf16.gmra.mrb[0].mxu0 %v510
  %v1887 = vpop.f32.mrb[0].mxu0
  %v1888 = vadd.f32 %v693, %v1887
  %v1889 = vpop.f32.mrb[0].mxu0
  %v1890 = vadd.f32 %v697, %v1889
  %v1891 = vpop.f32.mrb[0].mxu0
  %v1892 = vadd.f32 %v693, %v1891
  %v1893 = vpop.f32.mrb[0].mxu0
  %v1894 = vadd.f32 %v697, %v1893
  %1895 = vmatprep.mubr.bf16.mxu0 %v514
  %1896 = vmatmul.mubr.bf16.gmra.mrb[0].mxu0 %v513
  %v1897 = vpop.f32.mrb[0].mxu0
  %v1898 = vadd.f32 %v693, %v1897
  %v1899 = vpop.f32.mrb[0].mxu0
  %v1900 = vadd.f32 %v697, %v1899
  %v1901 = vpop.f32.mrb[0].mxu0
  %v1902 = vadd.f32 %v693, %v1901
  %v1903 = vpop.f32.mrb[0].mxu0
  %v1904 = vadd.f32 %v697, %v1903
  %1905 = vmatprep.mubr.bf16.mxu0 %v517
  %1906 = vmatmul.mubr.bf16.gmra.mrb[0].mxu0 %v516
  %v1907 = vpop.f32.mrb[0].mxu0
  %v1908 = vadd.f32 %v693, %v1907
  %v1909 = vpop.f32.mrb[0].mxu0
  %v1910 = vadd.f32 %v697, %v1909
  %v1911 = vpop.f32.mrb[0].mxu0
  %v1912 = vadd.f32 %v693, %v1911
  %v1913 = vpop.f32.mrb[0].mxu0
  %v1914 = vadd.f32 %v697, %v1913
  %1915 = vmatprep.mubr.bf16.mxu0 %v520
  %1916 = vmatmul.mubr.bf16.gmra.mrb[0].mxu0 %v519
  %v1917 = vpop.f32.mrb[0].mxu0
  %v1918 = vadd.f32 %v693, %v1917
  %v1919 = vpop.f32.mrb[0].mxu0
  %v1920 = vadd.f32 %v697, %v1919
  %v1921 = vpop.f32.mrb[0].mxu0
  %v1922 = vadd.f32 %v693, %v1921
  %v1923 = vpop.f32.mrb[0].mxu0
  %v1924 = vadd.f32 %v697, %v1923
  %1925 = vmatprep.mubr.bf16.mxu0 %v523
  %1926 = vmatmul.mubr.bf16.gmra.mrb[0].mxu0 %v522
  %v1927 = vpop.f32.mrb[0].mxu0
  %v1928 = vadd.f32 %v693, %v1927
  %v1929 = vpop.f32.mrb[0].mxu0
  %v1930 = vadd.f32 %v697, %v1929
  %v1931 = vpop.f32.mrb[0].mxu0
  %v1932 = vadd.f32 %v693, %v1931
  %v1933 = vpop.f32.mrb[0].mxu0
  %v1934 = vadd.f32 %v697, %v1933
  %1935 = vmatprep.mubr.bf16.mxu0 %v526
  %1936 = vmatmul.mubr.bf16.gmra.mrb[0].mxu0 %v525
  %v1937 = vpop.f32.mrb[0].mxu0
  %v1938 = vadd.f32 %v693, %v1937
  %v1939 = vpop.f32.mrb[0].mxu0
  %v1940 = vadd.f32 %v697, %v1939
  %v1941 = vpop.f32.mrb[0].mxu0
  %v1942 = vadd.f32 %v693, %v1941
  %v1943 = vpop.f32.mrb[0].mxu0
  %v1944 = vadd.f32 %v697, %v1943
  %1945 = vdwg.mxu0
  %1946 = vmatprep.subr.bf16.mxu0 %v1222
  %1947 = vmatpush1.bf16.msra.mxu0 %v1221
  %1948 = vmatprep.subr.bf16.mxu0 %v1229
  %1949 = vmatpush1.bf16.msra.mxu0 %v1228
  %1950 = vmatprep.subr.bf16.mxu0 0
  %1951 = vmatpush1.bf16.msra.mxu0 0
  %1952 = vmatprep.subr.bf16.mxu0 0
  %1953 = vmatpush1.bf16.msra.mxu0 0
  %1954 = vmatprep.subr.bf16.mxu0 0
  %1955 = vmatpush1.bf16.msra.mxu0 0
  %1956 = vmatprep.subr.bf16.mxu0 0
  %1957 = vmatpush1.bf16.msra.mxu0 0
  %1958 = vmatprep.subr.bf16.mxu0 0
  %1959 = vmatpush1.bf16.msra.mxu0 0
  %1960 = vmatprep.subr.bf16.mxu0 0
  %1961 = vmatpush1.bf16.msra.mxu0 0
  %1962 = vmatprep.subr.bf16.mxu0 0
  %1963 = vmatpush1.bf16.msra.mxu0 0
  %1964 = vmatprep.subr.bf16.mxu0 0
  %1965 = vmatpush1.bf16.msra.mxu0 0
  %1966 = vmatprep.subr.bf16.mxu0 0
  %1967 = vmatpush1.bf16.msra.mxu0 0
  %1968 = vmatprep.subr.bf16.mxu0 0
  %1969 = vmatpush1.bf16.msra.mxu0 0
  %1970 = vmatprep.subr.bf16.mxu0 0
  %1971 = vmatpush1.bf16.msra.mxu0 0
  %1972 = vmatprep.subr.bf16.mxu0 0
  %1973 = vmatpush1.bf16.msra.mxu0 0
  %1974 = vmatprep.subr.bf16.mxu0 0
  %1975 = vmatpush1.bf16.msra.mxu0 0
  %1976 = vmatprep.subr.bf16.mxu0 0
  %1977 = vmatpush1.bf16.msra.mxu0 0
  %1978 = vmatprep.mubr.bf16.mxu0 0
  %1979 = vmatmul.mubr.bf16.gmra.mrb[0].mxu0 %v1358
  %v1980 = vpop.f32.mrb[0].mxu0
  %v1981 = vadd.f32 %v1868, %v1980
  %v1982 = vpop.f32.mrb[0].mxu0
  %v1983 = vadd.f32 %v1870, %v1982
  %v1984 = vpop.f32.mrb[0].mxu0
  %v1985 = vadd.f32 %v1872, %v1984
  %v1986 = vpop.f32.mrb[0].mxu0
  %v1987 = vadd.f32 %v1874, %v1986
  %1988 = vmatprep.mubr.bf16.mxu0 0
  %1989 = vmatmul.mubr.bf16.gmra.mrb[0].mxu0 %v1361
  %v1990 = vpop.f32.mrb[0].mxu0
  %v1991 = vadd.f32 %v1878, %v1990
  %v1992 = vpop.f32.mrb[0].mxu0
  %v1993 = vadd.f32 %v1880, %v1992
  %v1994 = vpop.f32.mrb[0].mxu0
  %v1995 = vadd.f32 %v1882, %v1994
  %v1996 = vpop.f32.mrb[0].mxu0
  %v1997 = vadd.f32 %v1884, %v1996
  %1998 = vmatprep.mubr.bf16.mxu0 0
  %1999 = vmatmul.mubr.bf16.gmra.mrb[0].mxu0 %v1364
  %v2000 = vpop.f32.mrb[0].mxu0
  %v2001 = vadd.f32 %v1888, %v2000
  %v2002 = vpop.f32.mrb[0].mxu0
  %v2003 = vadd.f32 %v1890, %v2002
  %v2004 = vpop.f32.mrb[0].mxu0
  %v2005 = vadd.f32 %v1892, %v2004
  %v2006 = vpop.f32.mrb[0].mxu0
  %v2007 = vadd.f32 %v1894, %v2006
  %2008 = vmatprep.mubr.bf16.mxu0 0
  %2009 = vmatmul.mubr.bf16.gmra.mrb[0].mxu0 %v1367
  %v2010 = vpop.f32.mrb[0].mxu0
  %v2011 = vadd.f32 %v1898, %v2010
  %v2012 = vpop.f32.mrb[0].mxu0
  %v2013 = vadd.f32 %v1900, %v2012
  %v2014 = vpop.f32.mrb[0].mxu0
  %v2015 = vadd.f32 %v1902, %v2014
  %v2016 = vpop.f32.mrb[0].mxu0
  %v2017 = vadd.f32 %v1904, %v2016
  %2018 = vmatprep.mubr.bf16.mxu0 0
  %2019 = vmatmul.mubr.bf16.gmra.mrb[0].mxu0 %v1370
  %v2020 = vpop.f32.mrb[0].mxu0
  %v2021 = vadd.f32 %v1908, %v2020
  %v2022 = vpop.f32.mrb[0].mxu0
  %v2023 = vadd.f32 %v1910, %v2022
  %v2024 = vpop.f32.mrb[0].mxu0
  %v2025 = vadd.f32 %v1912, %v2024
  %v2026 = vpop.f32.mrb[0].mxu0
  %v2027 = vadd.f32 %v1914, %v2026
  %2028 = vmatprep.mubr.bf16.mxu0 0
  %2029 = vmatmul.mubr.bf16.gmra.mrb[0].mxu0 %v1373
  %v2030 = vpop.f32.mrb[0].mxu0
  %v2031 = vadd.f32 %v1918, %v2030
  %v2032 = vpop.f32.mrb[0].mxu0
  %v2033 = vadd.f32 %v1920, %v2032
  %v2034 = vpop.f32.mrb[0].mxu0
  %v2035 = vadd.f32 %v1922, %v2034
  %v2036 = vpop.f32.mrb[0].mxu0
  %v2037 = vadd.f32 %v1924, %v2036
  %2038 = vmatprep.mubr.bf16.mxu0 0
  %2039 = vmatmul.mubr.bf16.gmra.mrb[0].mxu0 %v1376
  %v2040 = vpop.f32.mrb[0].mxu0
  %v2041 = vadd.f32 %v1928, %v2040
  %v2042 = vpop.f32.mrb[0].mxu0
  %v2043 = vadd.f32 %v1930, %v2042
  %v2044 = vpop.f32.mrb[0].mxu0
  %v2045 = vadd.f32 %v1932, %v2044
  %v2046 = vpop.f32.mrb[0].mxu0
  %v2047 = vadd.f32 %v1934, %v2046
  %2048 = vmatprep.mubr.bf16.mxu0 0
  %2049 = vmatmul.mubr.bf16.gmra.mrb[0].mxu0 %v1379
  %v2050 = vpop.f32.mrb[0].mxu0
  %v2051 = vadd.f32 %v1938, %v2050
  %v2052 = vpop.f32.mrb[0].mxu0
  %v2053 = vadd.f32 %v1940, %v2052
  %v2054 = vpop.f32.mrb[0].mxu0
  %v2055 = vadd.f32 %v1942, %v2054
  %v2056 = vpop.f32.mrb[0].mxu0
  %v2057 = vadd.f32 %v1944, %v2056
  %2058 = vdwg.mxu0
  %2059 = vmatprep.subr.bf16.mxu0 0
  %2060 = vmatpush1.bf16.msra.mxu0 %v1111
  %2061 = vmatprep.subr.bf16.mxu0 0
  %2062 = vmatpush1.bf16.msra.mxu0 %v1118
  %2063 = vmatprep.subr.bf16.mxu0 0
  %2064 = vmatpush1.bf16.msra.mxu0 %v1125
  %2065 = vmatprep.subr.bf16.mxu0 0
  %2066 = vmatpush1.bf16.msra.mxu0 %v1132
  %2067 = vmatprep.subr.bf16.mxu0 0
  %2068 = vmatpush1.bf16.msra.mxu0 %v1139
  %2069 = vmatprep.subr.bf16.mxu0 0
  %2070 = vmatpush1.bf16.msra.mxu0 %v1146
  %2071 = vmatprep.subr.bf16.mxu0 0
  %2072 = vmatpush1.bf16.msra.mxu0 %v1153
  %2073 = vmatprep.subr.bf16.mxu0 0
  %2074 = vmatpush1.bf16.msra.mxu0 %v1160
  %2075 = vmatprep.subr.bf16.mxu0 0
  %2076 = vmatpush1.bf16.msra.mxu0 %v1167
  %2077 = vmatprep.subr.bf16.mxu0 0
  %2078 = vmatpush1.bf16.msra.mxu0 %v1174
  %2079 = vmatprep.subr.bf16.mxu0 0
  %2080 = vmatpush1.bf16.msra.mxu0 %v1181
  %2081 = vmatprep.subr.bf16.mxu0 0
  %2082 = vmatpush1.bf16.msra.mxu0 %v1188
  %2083 = vmatprep.subr.bf16.mxu0 0
  %2084 = vmatpush1.bf16.msra.mxu0 %v1195
  %2085 = vmatprep.subr.bf16.mxu0 0
  %2086 = vmatpush1.bf16.msra.mxu0 %v1202
  %2087 = vmatprep.subr.bf16.mxu0 0
  %2088 = vmatpush1.bf16.msra.mxu0 %v1209
  %2089 = vmatprep.subr.bf16.mxu0 0
  %2090 = vmatpush1.bf16.msra.mxu0 %v1216
  %2091 = vmatprep.mubr.bf16.mxu0 %v505
  %2092 = vmatmul.mubr.bf16.gmra.mrb[0].mxu0 %v504
  %v2093 = vpop.f32.mrb[0].mxu0
  %v2094 = vadd.f32 %v701, %v2093
  %v2095 = vpop.f32.mrb[0].mxu0
  %v2096 = vpop.f32.mrb[0].mxu0
  %v2097 = vadd.f32 %v701, %v2096
  %v2098 = vpop.f32.mrb[0].mxu0
  %2099 = vmatprep.mubr.bf16.mxu0 %v508
  %2100 = vmatmul.mubr.bf16.gmra.mrb[0].mxu0 %v507
  %v2101 = vpop.f32.mrb[0].mxu0
  %v2102 = vadd.f32 %v701, %v2101
  %v2103 = vpop.f32.mrb[0].mxu0
  %v2104 = vpop.f32.mrb[0].mxu0
  %v2105 = vadd.f32 %v701, %v2104
  %v2106 = vpop.f32.mrb[0].mxu0
  %2107 = vmatprep.mubr.bf16.mxu0 %v511
  %2108 = vmatmul.mubr.bf16.gmra.mrb[0].mxu0 %v510
  %v2109 = vpop.f32.mrb[0].mxu0
  %v2110 = vadd.f32 %v701, %v2109
  %v2111 = vpop.f32.mrb[0].mxu0
  %v2112 = vpop.f32.mrb[0].mxu0
  %v2113 = vadd.f32 %v701, %v2112
  %v2114 = vpop.f32.mrb[0].mxu0
  %2115 = vmatprep.mubr.bf16.mxu0 %v514
  %2116 = vmatmul.mubr.bf16.gmra.mrb[0].mxu0 %v513
  %v2117 = vpop.f32.mrb[0].mxu0
  %v2118 = vadd.f32 %v701, %v2117
  %v2119 = vpop.f32.mrb[0].mxu0
  %v2120 = vpop.f32.mrb[0].mxu0
  %v2121 = vadd.f32 %v701, %v2120
  %v2122 = vpop.f32.mrb[0].mxu0
  %2123 = vmatprep.mubr.bf16.mxu0 %v517
  %2124 = vmatmul.mubr.bf16.gmra.mrb[0].mxu0 %v516
  %v2125 = vpop.f32.mrb[0].mxu0
  %v2126 = vadd.f32 %v701, %v2125
  %v2127 = vpop.f32.mrb[0].mxu0
  %v2128 = vpop.f32.mrb[0].mxu0
  %v2129 = vadd.f32 %v701, %v2128
  %v2130 = vpop.f32.mrb[0].mxu0
  %2131 = vmatprep.mubr.bf16.mxu0 %v520
  %2132 = vmatmul.mubr.bf16.gmra.mrb[0].mxu0 %v519
  %v2133 = vpop.f32.mrb[0].mxu0
  %v2134 = vadd.f32 %v701, %v2133
  %v2135 = vpop.f32.mrb[0].mxu0
  %v2136 = vpop.f32.mrb[0].mxu0
  %v2137 = vadd.f32 %v701, %v2136
  %v2138 = vpop.f32.mrb[0].mxu0
  %2139 = vmatprep.mubr.bf16.mxu0 %v523
  %2140 = vmatmul.mubr.bf16.gmra.mrb[0].mxu0 %v522
  %v2141 = vpop.f32.mrb[0].mxu0
  %v2142 = vadd.f32 %v701, %v2141
  %v2143 = vpop.f32.mrb[0].mxu0
  %v2144 = vpop.f32.mrb[0].mxu0
  %v2145 = vadd.f32 %v701, %v2144
  %v2146 = vpop.f32.mrb[0].mxu0
  %2147 = vmatprep.mubr.bf16.mxu0 %v526
  %2148 = vmatmul.mubr.bf16.gmra.mrb[0].mxu0 %v525
  %v2149 = vpop.f32.mrb[0].mxu0
  %v2150 = vadd.f32 %v701, %v2149
  %v2151 = vpop.f32.mrb[0].mxu0
  %v2152 = vpop.f32.mrb[0].mxu0
  %v2153 = vadd.f32 %v701, %v2152
  %v2154 = vpop.f32.mrb[0].mxu0
  %2155 = vdwg.mxu0
  %2156 = vmatprep.subr.bf16.mxu0 0
  %2157 = vmatpush1.bf16.msra.mxu0 %v1223
  %2158 = vmatprep.subr.bf16.mxu0 0
  %2159 = vmatpush1.bf16.msra.mxu0 %v1230
  %2160 = vmatprep.subr.bf16.mxu0 0
  %2161 = vmatpush1.bf16.msra.mxu0 0
  %2162 = vmatprep.subr.bf16.mxu0 0
  %2163 = vmatpush1.bf16.msra.mxu0 0
  %2164 = vmatprep.subr.bf16.mxu0 0
  %2165 = vmatpush1.bf16.msra.mxu0 0
  %2166 = vmatprep.subr.bf16.mxu0 0
  %2167 = vmatpush1.bf16.msra.mxu0 0
  %2168 = vmatprep.subr.bf16.mxu0 0
  %2169 = vmatpush1.bf16.msra.mxu0 0
  %2170 = vmatprep.subr.bf16.mxu0 0
  %2171 = vmatpush1.bf16.msra.mxu0 0
  %2172 = vmatprep.subr.bf16.mxu0 0
  %2173 = vmatpush1.bf16.msra.mxu0 0
  %2174 = vmatprep.subr.bf16.mxu0 0
  %2175 = vmatpush1.bf16.msra.mxu0 0
  %2176 = vmatprep.subr.bf16.mxu0 0
  %2177 = vmatpush1.bf16.msra.mxu0 0
  %2178 = vmatprep.subr.bf16.mxu0 0
  %2179 = vmatpush1.bf16.msra.mxu0 0
  %2180 = vmatprep.subr.bf16.mxu0 0
  %2181 = vmatpush1.bf16.msra.mxu0 0
  %2182 = vmatprep.subr.bf16.mxu0 0
  %2183 = vmatpush1.bf16.msra.mxu0 0
  %2184 = vmatprep.subr.bf16.mxu0 0
  %2185 = vmatpush1.bf16.msra.mxu0 0
  %2186 = vmatprep.subr.bf16.mxu0 0
  %2187 = vmatpush1.bf16.msra.mxu0 0
  %2188 = vmatprep.mubr.bf16.mxu0 0
  %2189 = vmatmul.mubr.bf16.gmra.mrb[0].mxu0 %v1358
  %v2190 = vpop.f32.mrb[0].mxu0
  %v2191 = vadd.f32 %v2094, %v2190
  %v2192 = vpop.f32.mrb[0].mxu0
  %v2193 = vpop.f32.mrb[0].mxu0
  %v2194 = vadd.f32 %v2097, %v2193
  %v2195 = vpop.f32.mrb[0].mxu0
  %2196 = vmatprep.mubr.bf16.mxu0 0
  %2197 = vmatmul.mubr.bf16.gmra.mrb[0].mxu0 %v1361
  %v2198 = vpop.f32.mrb[0].mxu0
  %v2199 = vadd.f32 %v2102, %v2198
  %v2200 = vpop.f32.mrb[0].mxu0
  %v2201 = vpop.f32.mrb[0].mxu0
  %v2202 = vadd.f32 %v2105, %v2201
  %v2203 = vpop.f32.mrb[0].mxu0
  %2204 = vmatprep.mubr.bf16.mxu0 0
  %2205 = vmatmul.mubr.bf16.gmra.mrb[0].mxu0 %v1364
  %v2206 = vpop.f32.mrb[0].mxu0
  %v2207 = vadd.f32 %v2110, %v2206
  %v2208 = vpop.f32.mrb[0].mxu0
  %v2209 = vpop.f32.mrb[0].mxu0
  %v2210 = vadd.f32 %v2113, %v2209
  %v2211 = vpop.f32.mrb[0].mxu0
  %2212 = vmatprep.mubr.bf16.mxu0 0
  %2213 = vmatmul.mubr.bf16.gmra.mrb[0].mxu0 %v1367
  %v2214 = vpop.f32.mrb[0].mxu0
  %v2215 = vadd.f32 %v2118, %v2214
  %v2216 = vpop.f32.mrb[0].mxu0
  %v2217 = vpop.f32.mrb[0].mxu0
  %v2218 = vadd.f32 %v2121, %v2217
  %v2219 = vpop.f32.mrb[0].mxu0
  %2220 = vmatprep.mubr.bf16.mxu0 0
  %2221 = vmatmul.mubr.bf16.gmra.mrb[0].mxu0 %v1370
  %v2222 = vpop.f32.mrb[0].mxu0
  %v2223 = vadd.f32 %v2126, %v2222
  %v2224 = vpop.f32.mrb[0].mxu0
  %v2225 = vpop.f32.mrb[0].mxu0
  %v2226 = vadd.f32 %v2129, %v2225
  %v2227 = vpop.f32.mrb[0].mxu0
  %2228 = vmatprep.mubr.bf16.mxu0 0
  %2229 = vmatmul.mubr.bf16.gmra.mrb[0].mxu0 %v1373
  %v2230 = vpop.f32.mrb[0].mxu0
  %v2231 = vadd.f32 %v2134, %v2230
  %v2232 = vpop.f32.mrb[0].mxu0
  %v2233 = vpop.f32.mrb[0].mxu0
  %v2234 = vadd.f32 %v2137, %v2233
  %v2235 = vpop.f32.mrb[0].mxu0
  %2236 = vmatprep.mubr.bf16.mxu0 0
  %2237 = vmatmul.mubr.bf16.gmra.mrb[0].mxu0 %v1376
  %v2238 = vpop.f32.mrb[0].mxu0
  %v2239 = vadd.f32 %v2142, %v2238
  %v2240 = vpop.f32.mrb[0].mxu0
  %v2241 = vpop.f32.mrb[0].mxu0
  %v2242 = vadd.f32 %v2145, %v2241
  %v2243 = vpop.f32.mrb[0].mxu0
  %2244 = vmatprep.mubr.bf16.mxu0 0
  %2245 = vmatmul.mubr.bf16.gmra.mrb[0].mxu0 %v1379
  %v2246 = vpop.f32.mrb[0].mxu0
  %v2247 = vadd.f32 %v2150, %v2246
  %v2248 = vpop.f32.mrb[0].mxu0
  %v2249 = vpop.f32.mrb[0].mxu0
  %v2250 = vadd.f32 %v2153, %v2249
  %v2251 = vpop.f32.mrb[0].mxu0
  %2252 = vdwg.mxu0
  %v2253 = vmax.f32 %v1529, 0.0
  %v2254 = vmax.f32 %v1531, 0.0
  %v2255 = vmax.f32 %v1755, 0.0
  %v2256 = vmax.f32 %v1757, 0.0
  %v2257 = vmax.f32 %v1981, 0.0
  %v2258 = vmax.f32 %v1983, 0.0
  %v2259 = vmax.f32 %v2191, 0.0
  %v2260 = vmax.f32 %v1533, 0.0
  %v2261 = vmax.f32 %v1535, 0.0
  %v2262 = vmax.f32 %v1759, 0.0
  %v2263 = vmax.f32 %v1761, 0.0
  %v2264 = vmax.f32 %v1985, 0.0
  %v2265 = vmax.f32 %v1987, 0.0
  %v2266 = vmax.f32 %v2194, 0.0
  %v2267 = vmax.f32 %v1539, 0.0
  %v2268 = vmax.f32 %v1541, 0.0
  %v2269 = vmax.f32 %v1765, 0.0
  %v2270 = vmax.f32 %v1767, 0.0
  %v2271 = vmax.f32 %v1991, 0.0
  %v2272 = vmax.f32 %v1993, 0.0
  %v2273 = vmax.f32 %v2199, 0.0
  %v2274 = vmax.f32 %v1543, 0.0
  %v2275 = vmax.f32 %v1545, 0.0
  %v2276 = vmax.f32 %v1769, 0.0
  %v2277 = vmax.f32 %v1771, 0.0
  %v2278 = vmax.f32 %v1995, 0.0
  %v2279 = vmax.f32 %v1997, 0.0
  %v2280 = vmax.f32 %v2202, 0.0
  %v2281 = vmax.f32 %v1549, 0.0
  %v2282 = vmax.f32 %v1551, 0.0
  %v2283 = vmax.f32 %v1775, 0.0
  %v2284 = vmax.f32 %v1777, 0.0
  %v2285 = vmax.f32 %v2001, 0.0
  %v2286 = vmax.f32 %v2003, 0.0
  %v2287 = vmax.f32 %v2207, 0.0
  %v2288 = vmax.f32 %v1553, 0.0
  %v2289 = vmax.f32 %v1555, 0.0
  %v2290 = vmax.f32 %v1779, 0.0
  %v2291 = vmax.f32 %v1781, 0.0
  %v2292 = vmax.f32 %v2005, 0.0
  %v2293 = vmax.f32 %v2007, 0.0
  %v2294 = vmax.f32 %v2210, 0.0
  %v2295 = vmax.f32 %v1559, 0.0
  %v2296 = vmax.f32 %v1561, 0.0
  %v2297 = vmax.f32 %v1785, 0.0
  %v2298 = vmax.f32 %v1787, 0.0
  %v2299 = vmax.f32 %v2011, 0.0
  %v2300 = vmax.f32 %v2013, 0.0
  %v2301 = vmax.f32 %v2215, 0.0
  %v2302 = vmax.f32 %v1563, 0.0
  %v2303 = vmax.f32 %v1565, 0.0
  %v2304 = vmax.f32 %v1789, 0.0
  %v2305 = vmax.f32 %v1791, 0.0
  %v2306 = vmax.f32 %v2015, 0.0
  %v2307 = vmax.f32 %v2017, 0.0
  %v2308 = vmax.f32 %v2218, 0.0
  %v2309 = vmax.f32 %v1569, 0.0
  %v2310 = vmax.f32 %v1571, 0.0
  %v2311 = vmax.f32 %v1795, 0.0
  %v2312 = vmax.f32 %v1797, 0.0
  %v2313 = vmax.f32 %v2021, 0.0
  %v2314 = vmax.f32 %v2023, 0.0
  %v2315 = vmax.f32 %v2223, 0.0
  %v2316 = vmax.f32 %v1573, 0.0
  %v2317 = vmax.f32 %v1575, 0.0
  %v2318 = vmax.f32 %v1799, 0.0
  %v2319 = vmax.f32 %v1801, 0.0
  %v2320 = vmax.f32 %v2025, 0.0
  %v2321 = vmax.f32 %v2027, 0.0
  %v2322 = vmax.f32 %v2226, 0.0
  %v2323 = vmax.f32 %v1579, 0.0
  %v2324 = vmax.f32 %v1581, 0.0
  %v2325 = vmax.f32 %v1805, 0.0
  %v2326 = vmax.f32 %v1807, 0.0
  %v2327 = vmax.f32 %v2031, 0.0
  %v2328 = vmax.f32 %v2033, 0.0
  %v2329 = vmax.f32 %v2231, 0.0
  %v2330 = vmax.f32 %v1583, 0.0
  %v2331 = vmax.f32 %v1585, 0.0
  %v2332 = vmax.f32 %v1809, 0.0
  %v2333 = vmax.f32 %v1811, 0.0
  %v2334 = vmax.f32 %v2035, 0.0
  %v2335 = vmax.f32 %v2037, 0.0
  %v2336 = vmax.f32 %v2234, 0.0
  %v2337 = vmax.f32 %v1589, 0.0
  %v2338 = vmax.f32 %v1591, 0.0
  %v2339 = vmax.f32 %v1815, 0.0
  %v2340 = vmax.f32 %v1817, 0.0
  %v2341 = vmax.f32 %v2041, 0.0
  %v2342 = vmax.f32 %v2043, 0.0
  %v2343 = vmax.f32 %v2239, 0.0
  %v2344 = vmax.f32 %v1593, 0.0
  %v2345 = vmax.f32 %v1595, 0.0
  %v2346 = vmax.f32 %v1819, 0.0
  %v2347 = vmax.f32 %v1821, 0.0
  %v2348 = vmax.f32 %v2045, 0.0
  %v2349 = vmax.f32 %v2047, 0.0
  %v2350 = vmax.f32 %v2242, 0.0
  %v2351 = vmax.f32 %v1599, 0.0
  %v2352 = vmax.f32 %v1601, 0.0
  %v2353 = vmax.f32 %v1825, 0.0
  %v2354 = vmax.f32 %v1827, 0.0
  %v2355 = vmax.f32 %v2051, 0.0
  %v2356 = vmax.f32 %v2053, 0.0
  %v2357 = vmax.f32 %v2247, 0.0
  %v2358 = vmax.f32 %v1603, 0.0
  %v2359 = vmax.f32 %v1605, 0.0
  %v2360 = vmax.f32 %v1829, 0.0
  %v2361 = vmax.f32 %v1831, 0.0
  %v2362 = vmax.f32 %v2055, 0.0
  %v2363 = vmax.f32 %v2057, 0.0
  %v2364 = vmax.f32 %v2250, 0.0
  %v2365 = vpack.c.bf16 %v2260, %v2253
  %v2366 = vpack.c.bf16 %v2261, %v2254
  %v2367 = vpack.c.bf16 %v2262, %v2255
  %v2368 = vpack.c.bf16 %v2263, %v2256
  %v2369 = vpack.c.bf16 %v2264, %v2257
  %v2370 = vpack.c.bf16 %v2265, %v2258
  %v2371 = vpack.c.bf16 %v2266, %v2259
  %v2372 = vpack.c.bf16 %v2274, %v2267
  %v2373 = vpack.c.bf16 %v2275, %v2268
  %v2374 = vpack.c.bf16 %v2276, %v2269
  %v2375 = vpack.c.bf16 %v2277, %v2270
  %v2376 = vpack.c.bf16 %v2278, %v2271
  %v2377 = vpack.c.bf16 %v2279, %v2272
  %v2378 = vpack.c.bf16 %v2280, %v2273
  %v2379 = vpack.c.bf16 %v2288, %v2281
  %v2380 = vpack.c.bf16 %v2289, %v2282
  %v2381 = vpack.c.bf16 %v2290, %v2283
  %v2382 = vpack.c.bf16 %v2291, %v2284
  %v2383 = vpack.c.bf16 %v2292, %v2285
  %v2384 = vpack.c.bf16 %v2293, %v2286
  %v2385 = vpack.c.bf16 %v2294, %v2287
  %v2386 = vpack.c.bf16 %v2302, %v2295
  %v2387 = vpack.c.bf16 %v2303, %v2296
  %v2388 = vpack.c.bf16 %v2304, %v2297
  %v2389 = vpack.c.bf16 %v2305, %v2298
  %v2390 = vpack.c.bf16 %v2306, %v2299
  %v2391 = vpack.c.bf16 %v2307, %v2300
  %v2392 = vpack.c.bf16 %v2308, %v2301
  %v2393 = vpack.c.bf16 %v2316, %v2309
  %v2394 = vpack.c.bf16 %v2317, %v2310
  %v2395 = vpack.c.bf16 %v2318, %v2311
  %v2396 = vpack.c.bf16 %v2319, %v2312
  %v2397 = vpack.c.bf16 %v2320, %v2313
  %v2398 = vpack.c.bf16 %v2321, %v2314
  %v2399 = vpack.c.bf16 %v2322, %v2315
  %v2400 = vpack.c.bf16 %v2330, %v2323
  %v2401 = vpack.c.bf16 %v2331, %v2324
  %v2402 = vpack.c.bf16 %v2332, %v2325
  %v2403 = vpack.c.bf16 %v2333, %v2326
  %v2404 = vpack.c.bf16 %v2334, %v2327
  %v2405 = vpack.c.bf16 %v2335, %v2328
  %v2406 = vpack.c.bf16 %v2336, %v2329
  %v2407 = vpack.c.bf16 %v2344, %v2337
  %v2408 = vpack.c.bf16 %v2345, %v2338
  %v2409 = vpack.c.bf16 %v2346, %v2339
  %v2410 = vpack.c.bf16 %v2347, %v2340
  %v2411 = vpack.c.bf16 %v2348, %v2341
  %v2412 = vpack.c.bf16 %v2349, %v2342
  %v2413 = vpack.c.bf16 %v2350, %v2343
  %v2414 = vpack.c.bf16 %v2358, %v2351
  %v2415 = vpack.c.bf16 %v2359, %v2352
  %v2416 = vpack.c.bf16 %v2360, %v2353
  %v2417 = vpack.c.bf16 %v2361, %v2354
  %v2418 = vpack.c.bf16 %v2362, %v2355
  %v2419 = vpack.c.bf16 %v2363, %v2356
  %v2420 = vpack.c.bf16 %v2364, %v2357
  %v2421 = vld [vmem:[%s7] sm:$0xff]
  %v2422 = vld [vmem:[%s7 + $0x8] sm:$0xff]
  %v2423 = vld [vmem:[%s7 + $0x10] sm:$0xff]
  %v2424 = vld [vmem:[%s7 + $0x18] sm:$0xff]
  %v2425 = vld [vmem:[%s7 + $0x20] sm:$0xff]
  %v2426 = vld [vmem:[%s7 + $0x28] sm:$0xff]
  %v2427 = vld [vmem:[%s7 + $0x30] sm:$0xff]
  %v2428 = vld [vmem:[%s7 + $0x38] sm:$0xff]
  %v2429 = vld [vmem:[%s7 + $0x40] sm:$0xff]
  %v2430 = vld [vmem:[%s7 + $0x48] sm:$0xff]
  %v2431 = vld [vmem:[%s7 + $0x50] sm:$0xff]
  %v2432 = vld [vmem:[%s7 + $0x58] sm:$0xff]
  %v2433 = vld [vmem:[%s7 + $0x60] sm:$0xff]
  %v2434 = vld [vmem:[%s7 + $0x68] sm:$0xff]
  %v2435 = vld [vmem:[%s7 + $0x70] sm:$0xff]
  %v2436 = vld [vmem:[%s7 + $0x78] sm:$0xff]
  %v2437 = vld [vmem:[%s7 + $0x80] sm:$0xff]
  %v2438 = vld [vmem:[%s7 + $0x88] sm:$0xff]
  %v2439 = vld [vmem:[%s7 + $0x90] sm:$0xff]
  %v2440 = vld [vmem:[%s7 + $0x98] sm:$0xff]
  %v2441 = vld [vmem:[%s7 + $0xa0] sm:$0xff]
  %v2442 = vld [vmem:[%s7 + $0xa8] sm:$0xff]
  %v2443 = vld [vmem:[%s7 + $0xb0] sm:$0xff]
  %v2444 = vld [vmem:[%s7 + $0xb8] sm:$0xff]
  %v2445 = vld [vmem:[%s7 + $0xc0] sm:$0xff]
  %v2446 = vld [vmem:[%s7 + $0xc8] sm:$0xff]
  %v2447 = vld [vmem:[%s7 + $0xd0] sm:$0xff]
  %v2448 = vld [vmem:[%s7 + $0xd8] sm:$0xff]
  %v2449 = vld [vmem:[%s7 + $0xe0] sm:$0xff]
  %v2450 = vld [vmem:[%s7 + $0xe8] sm:$0xff]
  %v2451 = vld [vmem:[%s7 + $0xf0] sm:$0xff]
  %v2452 = vld [vmem:[%s7 + $0xf8] sm:$0xff]
  %v2453 = vld [vmem:[%s7 + $0x100] sm:$0xff]
  %v2454 = vld [vmem:[%s7 + $0x108] sm:$0xff]
  %v2455 = vld [vmem:[%s7 + $0x110] sm:$0xff]
  %v2456 = vld [vmem:[%s7 + $0x118] sm:$0xff]
  %v2457 = vld [vmem:[%s7 + $0x120] sm:$0xff]
  %v2458 = vld [vmem:[%s7 + $0x128] sm:$0xff]
  %v2459 = vld [vmem:[%s7 + $0x130] sm:$0xff]
  %v2460 = vld [vmem:[%s7 + $0x138] sm:$0xff]
  %v2461 = vld [vmem:[%s7 + $0x140] sm:$0xff]
  %v2462 = vld [vmem:[%s7 + $0x148] sm:$0xff]
  %v2463 = vld [vmem:[%s7 + $0x150] sm:$0xff]
  %v2464 = vld [vmem:[%s7 + $0x158] sm:$0xff]
  %v2465 = vld [vmem:[%s7 + $0x160] sm:$0xff]
  %v2466 = vld [vmem:[%s7 + $0x168] sm:$0xff]
  %v2467 = vld [vmem:[%s7 + $0x170] sm:$0xff]
  %v2468 = vld [vmem:[%s7 + $0x178] sm:$0xff]
  %v2469 = vld [vmem:[%s7 + $0x180] sm:$0xff]
  %v2470 = vld [vmem:[%s7 + $0x188] sm:$0xff]
  %v2471 = vld [vmem:[%s7 + $0x190] sm:$0xff]
  %v2472 = vld [vmem:[%s7 + $0x198] sm:$0xff]
  %v2473 = vld [vmem:[%s7 + $0x1a0] sm:$0xff]
  %v2474 = vld [vmem:[%s7 + $0x1a8] sm:$0xff]
  %v2475 = vld [vmem:[%s7 + $0x1b0] sm:$0xff]
  %v2476 = vld [vmem:[%s7 + $0x1b8] sm:$0xff]
  %v2477 = vld [vmem:[%s7 + $0x1c0] sm:$0xff]
  %v2478 = vld [vmem:[%s7 + $0x1c8] sm:$0xff]
  %v2479 = vld [vmem:[%s7 + $0x1d0] sm:$0xff]
  %v2480 = vld [vmem:[%s7 + $0x1d8] sm:$0xff]
  %v2481 = vld [vmem:[%s7 + $0x1e0] sm:$0xff]
  %v2482 = vld [vmem:[%s7 + $0x1e8] sm:$0xff]
  %v2483 = vld [vmem:[%s7 + $0x1f0] sm:$0xff]
  %v2484 = vld [vmem:[%s7 + $0x1f8] sm:$0xff]
  %v2485 = vld [vmem:[%s7 + $0x200] sm:$0xff]
  %v2486 = vld [vmem:[%s7 + $0x208] sm:$0xff]
  %v2487 = vld [vmem:[%s7 + $0x210] sm:$0xff]
  %v2488 = vld [vmem:[%s7 + $0x218] sm:$0xff]
  %v2489 = vld [vmem:[%s7 + $0x220] sm:$0xff]
  %v2490 = vld [vmem:[%s7 + $0x228] sm:$0xff]
  %v2491 = vld [vmem:[%s7 + $0x230] sm:$0xff]
  %v2492 = vld [vmem:[%s7 + $0x238] sm:$0xff]
  %v2493 = vld [vmem:[%s7 + $0x240] sm:$0xff]
  %v2494 = vld [vmem:[%s7 + $0x248] sm:$0xff]
  %v2495 = vld [vmem:[%s7 + $0x250] sm:$0xff]
  %v2496 = vld [vmem:[%s7 + $0x258] sm:$0xff]
  %v2497 = vld [vmem:[%s7 + $0x260] sm:$0xff]
  %v2498 = vld [vmem:[%s7 + $0x268] sm:$0xff]
  %v2499 = vld [vmem:[%s7 + $0x270] sm:$0xff]
  %v2500 = vld [vmem:[%s7 + $0x278] sm:$0xff]
  %v2501 = vld [vmem:[%s7 + $0x280] sm:$0xff]
  %v2502 = vld [vmem:[%s7 + $0x288] sm:$0xff]
  %v2503 = vld [vmem:[%s7 + $0x290] sm:$0xff]
  %v2504 = vld [vmem:[%s7 + $0x298] sm:$0xff]
  %v2505 = vld [vmem:[%s7 + $0x2a0] sm:$0xff]
  %v2506 = vld [vmem:[%s7 + $0x2a8] sm:$0xff]
  %v2507 = vld [vmem:[%s7 + $0x2b0] sm:$0xff]
  %v2508 = vld [vmem:[%s7 + $0x2b8] sm:$0xff]
  %v2509 = vld [vmem:[%s7 + $0x2c0] sm:$0xff]
  %v2510 = vld [vmem:[%s7 + $0x2c8] sm:$0xff]
  %v2511 = vld [vmem:[%s7 + $0x2d0] sm:$0xff]
  %v2512 = vld [vmem:[%s7 + $0x2d8] sm:$0xff]
  %v2513 = vld [vmem:[%s7 + $0x2e0] sm:$0xff]
  %v2514 = vld [vmem:[%s7 + $0x2e8] sm:$0xff]
  %v2515 = vld [vmem:[%s7 + $0x2f0] sm:$0xff]
  %v2516 = vld [vmem:[%s7 + $0x2f8] sm:$0xff]
  %v2517 = vld [vmem:[%s7 + $0x300] sm:$0xff]
  %v2518 = vld [vmem:[%s7 + $0x308] sm:$0xff]
  %v2519 = vld [vmem:[%s8] sm:$0x3]
  %v2521 = vlaneseq
  %v2522 = vshrl.u32 %v2521, 7
  %v2523 = vsub.s32 0, %v2522
  %v2524 = vrot.slane %v2519, %v2523
  %v2525 = vlaneseq
  %v2526 = vshrl.u32 %v2525, 7
  %v2527 = vsub.s32 1, %v2526
  %v2528 = vrot.slane %v2519, %v2527
  %v2629 = vunpack.c.l.b16 %v2421
  %v2630 = vunpack.c.h.b16 %v2421
  %v2631 = vunpack.c.l.b16 %v2422
  %v2632 = vunpack.c.h.b16 %v2422
  %v2633 = vunpack.c.l.b16 %v2423
  %v2634 = vunpack.c.h.b16 %v2423
  %v2635 = vunpack.c.l.b16 %v2424
  %v2636 = vunpack.c.h.b16 %v2424
  %v2637 = vunpack.c.l.b16 %v2425
  %v2638 = vunpack.c.h.b16 %v2425
  %v2639 = vunpack.c.l.b16 %v2426
  %v2640 = vunpack.c.h.b16 %v2426
  %v2641 = vunpack.c.l.b16 %v2427
  %v2642 = vunpack.c.h.b16 %v2427
  %v2643 = vunpack.c.l.b16 %v2428
  %v2644 = vunpack.c.h.b16 %v2428
  %v2645 = vunpack.c.l.b16 %v2429
  %v2646 = vunpack.c.h.b16 %v2429
  %v2647 = vunpack.c.l.b16 %v2430
  %v2648 = vunpack.c.h.b16 %v2430
  %v2649 = vunpack.c.l.b16 %v2431
  %v2650 = vunpack.c.h.b16 %v2431
  %v2651 = vunpack.c.l.b16 %v2432
  %v2652 = vunpack.c.h.b16 %v2432
  %v2653 = vunpack.c.l.b16 %v2433
  %v2654 = vunpack.c.h.b16 %v2433
  %v2655 = vunpack.c.l.b16 %v2434
  %v2656 = vunpack.c.h.b16 %v2434
  %v2657 = vunpack.c.l.b16 %v2435
  %v2658 = vunpack.c.h.b16 %v2435
  %v2659 = vunpack.c.l.b16 %v2436
  %v2660 = vunpack.c.h.b16 %v2436
  %v2661 = vunpack.c.l.b16 %v2437
  %v2662 = vunpack.c.h.b16 %v2437
  %v2663 = vunpack.c.l.b16 %v2438
  %v2664 = vunpack.c.h.b16 %v2438
  %v2665 = vunpack.c.l.b16 %v2439
  %v2666 = vunpack.c.h.b16 %v2439
  %v2667 = vunpack.c.l.b16 %v2440
  %v2668 = vunpack.c.h.b16 %v2440
  %v2669 = vunpack.c.l.b16 %v2441
  %v2670 = vunpack.c.h.b16 %v2441
  %v2671 = vunpack.c.l.b16 %v2442
  %v2672 = vunpack.c.h.b16 %v2442
  %v2673 = vunpack.c.l.b16 %v2443
  %v2674 = vunpack.c.h.b16 %v2443
  %v2675 = vunpack.c.l.b16 %v2444
  %v2676 = vunpack.c.h.b16 %v2444
  %v2677 = vunpack.c.l.b16 %v2445
  %v2678 = vunpack.c.h.b16 %v2445
  %v2679 = vunpack.c.l.b16 %v2446
  %v2680 = vunpack.c.h.b16 %v2446
  %v2681 = vunpack.c.l.b16 %v2447
  %v2682 = vunpack.c.h.b16 %v2447
  %v2683 = vunpack.c.l.b16 %v2448
  %v2684 = vunpack.c.h.b16 %v2448
  %v2685 = vunpack.c.l.b16 %v2449
  %v2686 = vunpack.c.h.b16 %v2449
  %v2687 = vunpack.c.l.b16 %v2450
  %v2688 = vunpack.c.h.b16 %v2450
  %v2689 = vunpack.c.l.b16 %v2451
  %v2690 = vunpack.c.h.b16 %v2451
  %v2691 = vunpack.c.l.b16 %v2452
  %v2692 = vunpack.c.h.b16 %v2452
  %v2693 = vunpack.c.l.b16 %v2453
  %v2694 = vunpack.c.h.b16 %v2453
  %v2695 = vunpack.c.l.b16 %v2454
  %v2696 = vunpack.c.h.b16 %v2454
  %v2697 = vunpack.c.l.b16 %v2455
  %v2698 = vunpack.c.h.b16 %v2455
  %v2699 = vunpack.c.l.b16 %v2456
  %v2700 = vunpack.c.h.b16 %v2456
  %v2701 = vunpack.c.l.b16 %v2457
  %v2702 = vunpack.c.h.b16 %v2457
  %v2703 = vunpack.c.l.b16 %v2458
  %v2704 = vunpack.c.h.b16 %v2458
  %v2705 = vunpack.c.l.b16 %v2459
  %v2706 = vunpack.c.h.b16 %v2459
  %v2707 = vunpack.c.l.b16 %v2460
  %v2708 = vunpack.c.h.b16 %v2460
  %v2709 = vunpack.c.l.b16 %v2461
  %v2710 = vunpack.c.h.b16 %v2461
  %v2711 = vunpack.c.l.b16 %v2462
  %v2712 = vunpack.c.h.b16 %v2462
  %v2713 = vunpack.c.l.b16 %v2463
  %v2714 = vunpack.c.h.b16 %v2463
  %v2715 = vunpack.c.l.b16 %v2464
  %v2716 = vunpack.c.h.b16 %v2464
  %v2717 = vunpack.c.l.b16 %v2465
  %v2718 = vunpack.c.h.b16 %v2465
  %v2719 = vunpack.c.l.b16 %v2466
  %v2720 = vunpack.c.h.b16 %v2466
  %v2721 = vunpack.c.l.b16 %v2467
  %v2722 = vunpack.c.h.b16 %v2467
  %v2723 = vunpack.c.l.b16 %v2468
  %v2724 = vunpack.c.h.b16 %v2468
  %v2725 = vunpack.c.l.b16 %v2469
  %v2726 = vunpack.c.h.b16 %v2469
  %v2727 = vunpack.c.l.b16 %v2470
  %v2728 = vunpack.c.h.b16 %v2470
  %v2729 = vunpack.c.l.b16 %v2471
  %v2730 = vunpack.c.h.b16 %v2471
  %v2731 = vunpack.c.l.b16 %v2472
  %v2732 = vunpack.c.h.b16 %v2472
  %v2733 = vunpack.c.l.b16 %v2473
  %v2734 = vunpack.c.h.b16 %v2473
  %v2735 = vunpack.c.l.b16 %v2474
  %v2736 = vunpack.c.h.b16 %v2474
  %v2737 = vunpack.c.l.b16 %v2475
  %v2738 = vunpack.c.h.b16 %v2475
  %v2739 = vunpack.c.l.b16 %v2476
  %v2740 = vunpack.c.h.b16 %v2476
  %v2741 = vunpack.c.l.b16 %v2477
  %v2742 = vunpack.c.h.b16 %v2477
  %v2743 = vunpack.c.l.b16 %v2478
  %v2744 = vunpack.c.h.b16 %v2478
  %v2745 = vunpack.c.l.b16 %v2479
  %v2746 = vunpack.c.h.b16 %v2479
  %v2747 = vunpack.c.l.b16 %v2480
  %v2748 = vunpack.c.h.b16 %v2480
  %v2749 = vunpack.c.l.b16 %v2481
  %v2750 = vunpack.c.h.b16 %v2481
  %v2751 = vunpack.c.l.b16 %v2482
  %v2752 = vunpack.c.h.b16 %v2482
  %v2753 = vunpack.c.l.b16 %v2483
  %v2754 = vunpack.c.h.b16 %v2483
  %v2755 = vunpack.c.l.b16 %v2484
  %v2756 = vunpack.c.h.b16 %v2484
  %v2757 = vunpack.c.l.b16 %v2485
  %v2758 = vunpack.c.h.b16 %v2485
  %v2759 = vunpack.c.l.b16 %v2486
  %v2760 = vunpack.c.h.b16 %v2486
  %v2761 = vunpack.c.l.b16 %v2487
  %v2762 = vunpack.c.h.b16 %v2487
  %v2763 = vunpack.c.l.b16 %v2488
  %v2764 = vunpack.c.h.b16 %v2488
  %v2765 = vunpack.c.l.b16 %v2489
  %v2766 = vunpack.c.h.b16 %v2489
  %v2767 = vunpack.c.l.b16 %v2490
  %v2768 = vunpack.c.h.b16 %v2490
  %v2769 = vunpack.c.l.b16 %v2491
  %v2770 = vunpack.c.h.b16 %v2491
  %v2771 = vunpack.c.l.b16 %v2492
  %v2772 = vunpack.c.h.b16 %v2492
  %v2773 = vunpack.c.l.b16 %v2493
  %v2774 = vunpack.c.h.b16 %v2493
  %v2775 = vunpack.c.l.b16 %v2494
  %v2776 = vunpack.c.h.b16 %v2494
  %v2777 = vunpack.c.l.b16 %v2495
  %v2778 = vunpack.c.h.b16 %v2495
  %v2779 = vunpack.c.l.b16 %v2496
  %v2780 = vunpack.c.h.b16 %v2496
  %v2781 = vunpack.c.l.b16 %v2497
  %v2782 = vunpack.c.h.b16 %v2497
  %v2783 = vunpack.c.l.b16 %v2498
  %v2784 = vunpack.c.h.b16 %v2498
  %v2785 = vunpack.c.l.b16 %v2499
  %v2786 = vunpack.c.h.b16 %v2499
  %v2787 = vunpack.c.l.b16 %v2500
  %v2788 = vunpack.c.h.b16 %v2500
  %v2789 = vunpack.c.l.b16 %v2501
  %v2790 = vunpack.c.h.b16 %v2501
  %v2791 = vunpack.c.l.b16 %v2502
  %v2792 = vunpack.c.h.b16 %v2502
  %v2793 = vunpack.c.l.b16 %v2503
  %v2794 = vunpack.c.h.b16 %v2503
  %v2795 = vunpack.c.l.b16 %v2504
  %v2796 = vunpack.c.h.b16 %v2504
  %v2797 = vunpack.c.l.b16 %v2505
  %v2798 = vunpack.c.h.b16 %v2505
  %v2799 = vunpack.c.l.b16 %v2506
  %v2800 = vunpack.c.h.b16 %v2506
  %v2801 = vunpack.c.l.b16 %v2507
  %v2802 = vunpack.c.h.b16 %v2507
  %v2803 = vunpack.c.l.b16 %v2508
  %v2804 = vunpack.c.h.b16 %v2508
  %v2805 = vunpack.c.l.b16 %v2509
  %v2806 = vunpack.c.h.b16 %v2509
  %v2807 = vunpack.c.l.b16 %v2510
  %v2808 = vunpack.c.h.b16 %v2510
  %v2809 = vunpack.c.l.b16 %v2511
  %v2810 = vunpack.c.h.b16 %v2511
  %v2811 = vunpack.c.l.b16 %v2512
  %v2812 = vunpack.c.h.b16 %v2512
  %v2813 = vunpack.c.l.b16 %v2513
  %v2814 = vunpack.c.h.b16 %v2513
  %v2815 = vunpack.c.l.b16 %v2514
  %v2816 = vunpack.c.h.b16 %v2514
  %v2817 = vunpack.c.l.b16 %v2515
  %v2818 = vunpack.c.h.b16 %v2515
  %v2819 = vunpack.c.l.b16 %v2516
  %v2820 = vunpack.c.h.b16 %v2516
  %v2821 = vunpack.c.l.b16 %v2517
  %v2822 = vunpack.c.h.b16 %v2517
  %v2823 = vunpack.c.l.b16 %v2518
  %v2824 = vunpack.c.h.b16 %v2518
  %v2825 = vpack.c.b16 %v2631, %v2629
  %v2826 = vpack.c.b16 %v2632, %v2630
  %v2827 = vpack.c.b16 %v2635, %v2633
  %v2828 = vpack.c.b16 %v2636, %v2634
  %v2829 = vpack.c.b16 %v2639, %v2637
  %v2830 = vpack.c.b16 %v2640, %v2638
  %v2831 = vpack.c.b16 %v2643, %v2641
  %v2832 = vpack.c.b16 %v2644, %v2642
  %v2833 = vpack.c.b16 %v2647, %v2645
  %v2834 = vpack.c.b16 %v2648, %v2646
  %v2835 = vpack.c.b16 %v2651, %v2649
  %v2836 = vpack.c.b16 %v2652, %v2650
  %v2837 = vpack.c.b16 %v2655, %v2653
  %v2838 = vpack.c.b16 %v2656, %v2654
  %v2839 = vpack.c.b16 %v2659, %v2657
  %v2840 = vpack.c.b16 %v2660, %v2658
  %v2841 = vpack.c.b16 %v2663, %v2661
  %v2842 = vpack.c.b16 %v2664, %v2662
  %v2843 = vpack.c.b16 %v2667, %v2665
  %v2844 = vpack.c.b16 %v2668, %v2666
  %v2845 = vpack.c.b16 %v2671, %v2669
  %v2846 = vpack.c.b16 %v2672, %v2670
  %v2847 = vpack.c.b16 %v2675, %v2673
  %v2848 = vpack.c.b16 %v2676, %v2674
  %v2849 = vpack.c.b16 %v2679, %v2677
  %v2850 = vpack.c.b16 %v2680, %v2678
  %v2851 = vpack.c.b16 %v2683, %v2681
  %v2852 = vpack.c.b16 %v2684, %v2682
  %v2853 = vpack.c.b16 %v2687, %v2685
  %v2854 = vpack.c.b16 %v2688, %v2686
  %v2855 = vpack.c.b16 %v2691, %v2689
  %v2856 = vpack.c.b16 %v2692, %v2690
  %v2857 = vpack.c.b16 %v2695, %v2693
  %v2858 = vpack.c.b16 %v2696, %v2694
  %v2859 = vpack.c.b16 %v2699, %v2697
  %v2860 = vpack.c.b16 %v2700, %v2698
  %v2861 = vpack.c.b16 %v2703, %v2701
  %v2862 = vpack.c.b16 %v2704, %v2702
  %v2863 = vpack.c.b16 %v2707, %v2705
  %v2864 = vpack.c.b16 %v2708, %v2706
  %v2865 = vpack.c.b16 %v2711, %v2709
  %v2866 = vpack.c.b16 %v2712, %v2710
  %v2867 = vpack.c.b16 %v2715, %v2713
  %v2868 = vpack.c.b16 %v2716, %v2714
  %v2869 = vpack.c.b16 %v2719, %v2717
  %v2870 = vpack.c.b16 %v2720, %v2718
  %v2871 = vpack.c.b16 %v2723, %v2721
  %v2872 = vpack.c.b16 %v2724, %v2722
  %v2873 = vpack.c.b16 %v2727, %v2725
  %v2874 = vpack.c.b16 %v2728, %v2726
  %v2875 = vpack.c.b16 %v2731, %v2729
  %v2876 = vpack.c.b16 %v2732, %v2730
  %v2877 = vpack.c.b16 %v2735, %v2733
  %v2878 = vpack.c.b16 %v2736, %v2734
  %v2879 = vpack.c.b16 %v2739, %v2737
  %v2880 = vpack.c.b16 %v2740, %v2738
  %v2881 = vpack.c.b16 %v2743, %v2741
  %v2882 = vpack.c.b16 %v2744, %v2742
  %v2883 = vpack.c.b16 %v2747, %v2745
  %v2884 = vpack.c.b16 %v2748, %v2746
  %v2885 = vpack.c.b16 %v2751, %v2749
  %v2886 = vpack.c.b16 %v2752, %v2750
  %v2887 = vpack.c.b16 %v2755, %v2753
  %v2888 = vpack.c.b16 %v2756, %v2754
  %v2889 = vpack.c.b16 %v2759, %v2757
  %v2890 = vpack.c.b16 %v2760, %v2758
  %v2891 = vpack.c.b16 %v2763, %v2761
  %v2892 = vpack.c.b16 %v2764, %v2762
  %v2893 = vpack.c.b16 %v2767, %v2765
  %v2894 = vpack.c.b16 %v2768, %v2766
  %v2895 = vpack.c.b16 %v2771, %v2769
  %v2896 = vpack.c.b16 %v2772, %v2770
  %v2897 = vpack.c.b16 %v2775, %v2773
  %v2898 = vpack.c.b16 %v2776, %v2774
  %v2899 = vpack.c.b16 %v2779, %v2777
  %v2900 = vpack.c.b16 %v2780, %v2778
  %v2901 = vpack.c.b16 %v2783, %v2781
  %v2902 = vpack.c.b16 %v2784, %v2782
  %v2903 = vpack.c.b16 %v2787, %v2785
  %v2904 = vpack.c.b16 %v2788, %v2786
  %v2905 = vpack.c.b16 %v2791, %v2789
  %v2906 = vpack.c.b16 %v2792, %v2790
  %v2907 = vpack.c.b16 %v2795, %v2793
  %v2908 = vpack.c.b16 %v2796, %v2794
  %v2909 = vpack.c.b16 %v2799, %v2797
  %v2910 = vpack.c.b16 %v2800, %v2798
  %v2911 = vpack.c.b16 %v2803, %v2801
  %v2912 = vpack.c.b16 %v2804, %v2802
  %v2913 = vpack.c.b16 %v2807, %v2805
  %v2914 = vpack.c.b16 %v2808, %v2806
  %v2915 = vpack.c.b16 %v2811, %v2809
  %v2916 = vpack.c.b16 %v2812, %v2810
  %v2917 = vpack.c.b16 %v2815, %v2813
  %v2918 = vpack.c.b16 %v2816, %v2814
  %v2919 = vpack.c.b16 %v2819, %v2817
  %v2920 = vpack.c.b16 %v2820, %v2818
  %v2921 = vpack.c.b16 %v2823, %v2821
  %v2922 = vpack.c.b16 %v2824, %v2822
  %vm3021 = vcmask 130048
  %v3023 = vsel %vm3021, %v2371, 0
  %v3026 = vsel %vm3021, %v2378, 0
  %v3029 = vsel %vm3021, %v2385, 0
  %v3032 = vsel %vm3021, %v2392, 0
  %v3035 = vsel %vm3021, %v2399, 0
  %v3038 = vsel %vm3021, %v2406, 0
  %v3041 = vsel %vm3021, %v2413, 0
  %v3044 = vsel %vm3021, %v2420, 0
  %3046 = vmatprep.subr.bf16.mxu0 %v2826
  %3047 = vmatpush1.bf16.msra.mxu0 %v2825
  %3048 = vmatprep.subr.bf16.mxu0 %v2828
  %3049 = vmatpush1.bf16.msra.mxu0 %v2827
  %3050 = vmatprep.subr.bf16.mxu0 %v2830
  %3051 = vmatpush1.bf16.msra.mxu0 %v2829
  %3052 = vmatprep.subr.bf16.mxu0 %v2832
  %3053 = vmatpush1.bf16.msra.mxu0 %v2831
  %3054 = vmatprep.subr.bf16.mxu0 %v2834
  %3055 = vmatpush1.bf16.msra.mxu0 %v2833
  %3056 = vmatprep.subr.bf16.mxu0 %v2836
  %3057 = vmatpush1.bf16.msra.mxu0 %v2835
  %3058 = vmatprep.subr.bf16.mxu0 %v2838
  %3059 = vmatpush1.bf16.msra.mxu0 %v2837
  %3060 = vmatprep.subr.bf16.mxu0 %v2840
  %3061 = vmatpush1.bf16.msra.mxu0 %v2839
  %3062 = vmatprep.subr.bf16.mxu0 %v2842
  %3063 = vmatpush1.bf16.msra.mxu0 %v2841
  %3064 = vmatprep.subr.bf16.mxu0 %v2844
  %3065 = vmatpush1.bf16.msra.mxu0 %v2843
  %3066 = vmatprep.subr.bf16.mxu0 %v2846
  %3067 = vmatpush1.bf16.msra.mxu0 %v2845
  %3068 = vmatprep.subr.bf16.mxu0 %v2848
  %3069 = vmatpush1.bf16.msra.mxu0 %v2847
  %3070 = vmatprep.subr.bf16.mxu0 %v2850
  %3071 = vmatpush1.bf16.msra.mxu0 %v2849
  %3072 = vmatprep.subr.bf16.mxu0 %v2852
  %3073 = vmatpush1.bf16.msra.mxu0 %v2851
  %3074 = vmatprep.subr.bf16.mxu0 %v2854
  %3075 = vmatpush1.bf16.msra.mxu0 %v2853
  %3076 = vmatprep.subr.bf16.mxu0 %v2856
  %3077 = vmatpush1.bf16.msra.mxu0 %v2855
  %3078 = vmatprep.mubr.bf16.mxu0 %v2366
  %3079 = vmatmul.mubr.bf16.gmra.mrb[0].mxu0 %v2365
  %v3080 = vpop.f32.mrb[0].mxu0
  %v3081 = vadd.f32 %v2524, %v3080
  %v3082 = vpop.f32.mrb[0].mxu0
  %v3083 = vadd.f32 %v2528, %v3082
  %v3084 = vpop.f32.mrb[0].mxu0
  %v3085 = vadd.f32 %v2524, %v3084
  %v3086 = vpop.f32.mrb[0].mxu0
  %v3087 = vadd.f32 %v2528, %v3086
  %3088 = vmatprep.mubr.bf16.mxu0 %v2373
  %3089 = vmatmul.mubr.bf16.gmra.mrb[0].mxu0 %v2372
  %v3090 = vpop.f32.mrb[0].mxu0
  %v3091 = vadd.f32 %v2524, %v3090
  %v3092 = vpop.f32.mrb[0].mxu0
  %v3093 = vadd.f32 %v2528, %v3092
  %v3094 = vpop.f32.mrb[0].mxu0
  %v3095 = vadd.f32 %v2524, %v3094
  %v3096 = vpop.f32.mrb[0].mxu0
  %v3097 = vadd.f32 %v2528, %v3096
  %3098 = vmatprep.mubr.bf16.mxu0 %v2380
  %3099 = vmatmul.mubr.bf16.gmra.mrb[0].mxu0 %v2379
  %v3100 = vpop.f32.mrb[0].mxu0
  %v3101 = vadd.f32 %v2524, %v3100
  %v3102 = vpop.f32.mrb[0].mxu0
  %v3103 = vadd.f32 %v2528, %v3102
  %v3104 = vpop.f32.mrb[0].mxu0
  %v3105 = vadd.f32 %v2524, %v3104
  %v3106 = vpop.f32.mrb[0].mxu0
  %v3107 = vadd.f32 %v2528, %v3106
  %3108 = vmatprep.mubr.bf16.mxu0 %v2387
  %3109 = vmatmul.mubr.bf16.gmra.mrb[0].mxu0 %v2386
  %v3110 = vpop.f32.mrb[0].mxu0
  %v3111 = vadd.f32 %v2524, %v3110
  %v3112 = vpop.f32.mrb[0].mxu0
  %v3113 = vadd.f32 %v2528, %v3112
  %v3114 = vpop.f32.mrb[0].mxu0
  %v3115 = vadd.f32 %v2524, %v3114
  %v3116 = vpop.f32.mrb[0].mxu0
  %v3117 = vadd.f32 %v2528, %v3116
  %3118 = vmatprep.mubr.bf16.mxu0 %v2394
  %3119 = vmatmul.mubr.bf16.gmra.mrb[0].mxu0 %v2393
  %v3120 = vpop.f32.mrb[0].mxu0
  %v3121 = vadd.f32 %v2524, %v3120
  %v3122 = vpop.f32.mrb[0].mxu0
  %v3123 = vadd.f32 %v2528, %v3122
  %v3124 = vpop.f32.mrb[0].mxu0
  %v3125 = vadd.f32 %v2524, %v3124
  %v3126 = vpop.f32.mrb[0].mxu0
  %v3127 = vadd.f32 %v2528, %v3126
  %3128 = vmatprep.mubr.bf16.mxu0 %v2401
  %3129 = vmatmul.mubr.bf16.gmra.mrb[0].mxu0 %v2400
  %v3130 = vpop.f32.mrb[0].mxu0
  %v3131 = vadd.f32 %v2524, %v3130
  %v3132 = vpop.f32.mrb[0].mxu0
  %v3133 = vadd.f32 %v2528, %v3132
  %v3134 = vpop.f32.mrb[0].mxu0
  %v3135 = vadd.f32 %v2524, %v3134
  %v3136 = vpop.f32.mrb[0].mxu0
  %v3137 = vadd.f32 %v2528, %v3136
  %3138 = vmatprep.mubr.bf16.mxu0 %v2408
  %3139 = vmatmul.mubr.bf16.gmra.mrb[0].mxu0 %v2407
  %v3140 = vpop.f32.mrb[0].mxu0
  %v3141 = vadd.f32 %v2524, %v3140
  %v3142 = vpop.f32.mrb[0].mxu0
  %v3143 = vadd.f32 %v2528, %v3142
  %v3144 = vpop.f32.mrb[0].mxu0
  %v3145 = vadd.f32 %v2524, %v3144
  %v3146 = vpop.f32.mrb[0].mxu0
  %v3147 = vadd.f32 %v2528, %v3146
  %3148 = vmatprep.mubr.bf16.mxu0 %v2415
  %3149 = vmatmul.mubr.bf16.gmra.mrb[0].mxu0 %v2414
  %v3150 = vpop.f32.mrb[0].mxu0
  %v3151 = vadd.f32 %v2524, %v3150
  %v3152 = vpop.f32.mrb[0].mxu0
  %v3153 = vadd.f32 %v2528, %v3152
  %v3154 = vpop.f32.mrb[0].mxu0
  %v3155 = vadd.f32 %v2524, %v3154
  %v3156 = vpop.f32.mrb[0].mxu0
  %v3157 = vadd.f32 %v2528, %v3156
  %3158 = vdwg.mxu0
  %3159 = vmatprep.subr.bf16.mxu0 %v2858
  %3160 = vmatpush1.bf16.msra.mxu0 %v2857
  %3161 = vmatprep.subr.bf16.mxu0 %v2860
  %3162 = vmatpush1.bf16.msra.mxu0 %v2859
  %3163 = vmatprep.subr.bf16.mxu0 %v2862
  %3164 = vmatpush1.bf16.msra.mxu0 %v2861
  %3165 = vmatprep.subr.bf16.mxu0 %v2864
  %3166 = vmatpush1.bf16.msra.mxu0 %v2863
  %3167 = vmatprep.subr.bf16.mxu0 %v2866
  %3168 = vmatpush1.bf16.msra.mxu0 %v2865
  %3169 = vmatprep.subr.bf16.mxu0 %v2868
  %3170 = vmatpush1.bf16.msra.mxu0 %v2867
  %3171 = vmatprep.subr.bf16.mxu0 %v2870
  %3172 = vmatpush1.bf16.msra.mxu0 %v2869
  %3173 = vmatprep.subr.bf16.mxu0 %v2872
  %3174 = vmatpush1.bf16.msra.mxu0 %v2871
  %3175 = vmatprep.subr.bf16.mxu0 %v2874
  %3176 = vmatpush1.bf16.msra.mxu0 %v2873
  %3177 = vmatprep.subr.bf16.mxu0 %v2876
  %3178 = vmatpush1.bf16.msra.mxu0 %v2875
  %3179 = vmatprep.subr.bf16.mxu0 %v2878
  %3180 = vmatpush1.bf16.msra.mxu0 %v2877
  %3181 = vmatprep.subr.bf16.mxu0 %v2880
  %3182 = vmatpush1.bf16.msra.mxu0 %v2879
  %3183 = vmatprep.subr.bf16.mxu0 %v2882
  %3184 = vmatpush1.bf16.msra.mxu0 %v2881
  %3185 = vmatprep.subr.bf16.mxu0 %v2884
  %3186 = vmatpush1.bf16.msra.mxu0 %v2883
  %3187 = vmatprep.subr.bf16.mxu0 %v2886
  %3188 = vmatpush1.bf16.msra.mxu0 %v2885
  %3189 = vmatprep.subr.bf16.mxu0 %v2888
  %3190 = vmatpush1.bf16.msra.mxu0 %v2887
  %3191 = vmatprep.mubr.bf16.mxu0 %v2368
  %3192 = vmatmul.mubr.bf16.gmra.mrb[0].mxu0 %v2367
  %v3193 = vpop.f32.mrb[0].mxu0
  %v3194 = vadd.f32 %v3081, %v3193
  %v3195 = vpop.f32.mrb[0].mxu0
  %v3196 = vadd.f32 %v3083, %v3195
  %v3197 = vpop.f32.mrb[0].mxu0
  %v3198 = vadd.f32 %v3085, %v3197
  %v3199 = vpop.f32.mrb[0].mxu0
  %v3200 = vadd.f32 %v3087, %v3199
  %3201 = vmatprep.mubr.bf16.mxu0 %v2375
  %3202 = vmatmul.mubr.bf16.gmra.mrb[0].mxu0 %v2374
  %v3203 = vpop.f32.mrb[0].mxu0
  %v3204 = vadd.f32 %v3091, %v3203
  %v3205 = vpop.f32.mrb[0].mxu0
  %v3206 = vadd.f32 %v3093, %v3205
  %v3207 = vpop.f32.mrb[0].mxu0
  %v3208 = vadd.f32 %v3095, %v3207
  %v3209 = vpop.f32.mrb[0].mxu0
  %v3210 = vadd.f32 %v3097, %v3209
  %3211 = vmatprep.mubr.bf16.mxu0 %v2382
  %3212 = vmatmul.mubr.bf16.gmra.mrb[0].mxu0 %v2381
  %v3213 = vpop.f32.mrb[0].mxu0
  %v3214 = vadd.f32 %v3101, %v3213
  %v3215 = vpop.f32.mrb[0].mxu0
  %v3216 = vadd.f32 %v3103, %v3215
  %v3217 = vpop.f32.mrb[0].mxu0
  %v3218 = vadd.f32 %v3105, %v3217
  %v3219 = vpop.f32.mrb[0].mxu0
  %v3220 = vadd.f32 %v3107, %v3219
  %3221 = vmatprep.mubr.bf16.mxu0 %v2389
  %3222 = vmatmul.mubr.bf16.gmra.mrb[0].mxu0 %v2388
  %v3223 = vpop.f32.mrb[0].mxu0
  %v3224 = vadd.f32 %v3111, %v3223
  %v3225 = vpop.f32.mrb[0].mxu0
  %v3226 = vadd.f32 %v3113, %v3225
  %v3227 = vpop.f32.mrb[0].mxu0
  %v3228 = vadd.f32 %v3115, %v3227
  %v3229 = vpop.f32.mrb[0].mxu0
  %v3230 = vadd.f32 %v3117, %v3229
  %3231 = vmatprep.mubr.bf16.mxu0 %v2396
  %3232 = vmatmul.mubr.bf16.gmra.mrb[0].mxu0 %v2395
  %v3233 = vpop.f32.mrb[0].mxu0
  %v3234 = vadd.f32 %v3121, %v3233
  %v3235 = vpop.f32.mrb[0].mxu0
  %v3236 = vadd.f32 %v3123, %v3235
  %v3237 = vpop.f32.mrb[0].mxu0
  %v3238 = vadd.f32 %v3125, %v3237
  %v3239 = vpop.f32.mrb[0].mxu0
  %v3240 = vadd.f32 %v3127, %v3239
  %3241 = vmatprep.mubr.bf16.mxu0 %v2403
  %3242 = vmatmul.mubr.bf16.gmra.mrb[0].mxu0 %v2402
  %v3243 = vpop.f32.mrb[0].mxu0
  %v3244 = vadd.f32 %v3131, %v3243
  %v3245 = vpop.f32.mrb[0].mxu0
  %v3246 = vadd.f32 %v3133, %v3245
  %v3247 = vpop.f32.mrb[0].mxu0
  %v3248 = vadd.f32 %v3135, %v3247
  %v3249 = vpop.f32.mrb[0].mxu0
  %v3250 = vadd.f32 %v3137, %v3249
  %3251 = vmatprep.mubr.bf16.mxu0 %v2410
  %3252 = vmatmul.mubr.bf16.gmra.mrb[0].mxu0 %v2409
  %v3253 = vpop.f32.mrb[0].mxu0
  %v3254 = vadd.f32 %v3141, %v3253
  %v3255 = vpop.f32.mrb[0].mxu0
  %v3256 = vadd.f32 %v3143, %v3255
  %v3257 = vpop.f32.mrb[0].mxu0
  %v3258 = vadd.f32 %v3145, %v3257
  %v3259 = vpop.f32.mrb[0].mxu0
  %v3260 = vadd.f32 %v3147, %v3259
  %3261 = vmatprep.mubr.bf16.mxu0 %v2417
  %3262 = vmatmul.mubr.bf16.gmra.mrb[0].mxu0 %v2416
  %v3263 = vpop.f32.mrb[0].mxu0
  %v3264 = vadd.f32 %v3151, %v3263
  %v3265 = vpop.f32.mrb[0].mxu0
  %v3266 = vadd.f32 %v3153, %v3265
  %v3267 = vpop.f32.mrb[0].mxu0
  %v3268 = vadd.f32 %v3155, %v3267
  %v3269 = vpop.f32.mrb[0].mxu0
  %v3270 = vadd.f32 %v3157, %v3269
  %3271 = vdwg.mxu0
  %3272 = vmatprep.subr.bf16.mxu0 %v2890
  %3273 = vmatpush1.bf16.msra.mxu0 %v2889
  %3274 = vmatprep.subr.bf16.mxu0 %v2892
  %3275 = vmatpush1.bf16.msra.mxu0 %v2891
  %3276 = vmatprep.subr.bf16.mxu0 %v2894
  %3277 = vmatpush1.bf16.msra.mxu0 %v2893
  %3278 = vmatprep.subr.bf16.mxu0 %v2896
  %3279 = vmatpush1.bf16.msra.mxu0 %v2895
  %3280 = vmatprep.subr.bf16.mxu0 %v2898
  %3281 = vmatpush1.bf16.msra.mxu0 %v2897
  %3282 = vmatprep.subr.bf16.mxu0 %v2900
  %3283 = vmatpush1.bf16.msra.mxu0 %v2899
  %3284 = vmatprep.subr.bf16.mxu0 %v2902
  %3285 = vmatpush1.bf16.msra.mxu0 %v2901
  %3286 = vmatprep.subr.bf16.mxu0 %v2904
  %3287 = vmatpush1.bf16.msra.mxu0 %v2903
  %3288 = vmatprep.subr.bf16.mxu0 %v2906
  %3289 = vmatpush1.bf16.msra.mxu0 %v2905
  %3290 = vmatprep.subr.bf16.mxu0 %v2908
  %3291 = vmatpush1.bf16.msra.mxu0 %v2907
  %3292 = vmatprep.subr.bf16.mxu0 %v2910
  %3293 = vmatpush1.bf16.msra.mxu0 %v2909
  %3294 = vmatprep.subr.bf16.mxu0 %v2912
  %3295 = vmatpush1.bf16.msra.mxu0 %v2911
  %3296 = vmatprep.subr.bf16.mxu0 %v2914
  %3297 = vmatpush1.bf16.msra.mxu0 %v2913
  %3298 = vmatprep.subr.bf16.mxu0 %v2916
  %3299 = vmatpush1.bf16.msra.mxu0 %v2915
  %3300 = vmatprep.subr.bf16.mxu0 %v2918
  %3301 = vmatpush1.bf16.msra.mxu0 %v2917
  %3302 = vmatprep.subr.bf16.mxu0 %v2920
  %3303 = vmatpush1.bf16.msra.mxu0 %v2919
  %3304 = vmatprep.mubr.bf16.mxu0 %v2370
  %3305 = vmatmul.mubr.bf16.gmra.mrb[0].mxu0 %v2369
  %v3306 = vpop.f32.mrb[0].mxu0
  %v3307 = vadd.f32 %v3194, %v3306
  %v3308 = vpop.f32.mrb[0].mxu0
  %v3309 = vadd.f32 %v3196, %v3308
  %v3310 = vpop.f32.mrb[0].mxu0
  %v3311 = vadd.f32 %v3198, %v3310
  %v3312 = vpop.f32.mrb[0].mxu0
  %v3313 = vadd.f32 %v3200, %v3312
  %3314 = vmatprep.mubr.bf16.mxu0 %v2377
  %3315 = vmatmul.mubr.bf16.gmra.mrb[0].mxu0 %v2376
  %v3316 = vpop.f32.mrb[0].mxu0
  %v3317 = vadd.f32 %v3204, %v3316
  %v3318 = vpop.f32.mrb[0].mxu0
  %v3319 = vadd.f32 %v3206, %v3318
  %v3320 = vpop.f32.mrb[0].mxu0
  %v3321 = vadd.f32 %v3208, %v3320
  %v3322 = vpop.f32.mrb[0].mxu0
  %v3323 = vadd.f32 %v3210, %v3322
  %3324 = vmatprep.mubr.bf16.mxu0 %v2384
  %3325 = vmatmul.mubr.bf16.gmra.mrb[0].mxu0 %v2383
  %v3326 = vpop.f32.mrb[0].mxu0
  %v3327 = vadd.f32 %v3214, %v3326
  %v3328 = vpop.f32.mrb[0].mxu0
  %v3329 = vadd.f32 %v3216, %v3328
  %v3330 = vpop.f32.mrb[0].mxu0
  %v3331 = vadd.f32 %v3218, %v3330
  %v3332 = vpop.f32.mrb[0].mxu0
  %v3333 = vadd.f32 %v3220, %v3332
  %3334 = vmatprep.mubr.bf16.mxu0 %v2391
  %3335 = vmatmul.mubr.bf16.gmra.mrb[0].mxu0 %v2390
  %v3336 = vpop.f32.mrb[0].mxu0
  %v3337 = vadd.f32 %v3224, %v3336
  %v3338 = vpop.f32.mrb[0].mxu0
  %v3339 = vadd.f32 %v3226, %v3338
  %v3340 = vpop.f32.mrb[0].mxu0
  %v3341 = vadd.f32 %v3228, %v3340
  %v3342 = vpop.f32.mrb[0].mxu0
  %v3343 = vadd.f32 %v3230, %v3342
  %3344 = vmatprep.mubr.bf16.mxu0 %v2398
  %3345 = vmatmul.mubr.bf16.gmra.mrb[0].mxu0 %v2397
  %v3346 = vpop.f32.mrb[0].mxu0
  %v3347 = vadd.f32 %v3234, %v3346
  %v3348 = vpop.f32.mrb[0].mxu0
  %v3349 = vadd.f32 %v3236, %v3348
  %v3350 = vpop.f32.mrb[0].mxu0
  %v3351 = vadd.f32 %v3238, %v3350
  %v3352 = vpop.f32.mrb[0].mxu0
  %v3353 = vadd.f32 %v3240, %v3352
  %3354 = vmatprep.mubr.bf16.mxu0 %v2405
  %3355 = vmatmul.mubr.bf16.gmra.mrb[0].mxu0 %v2404
  %v3356 = vpop.f32.mrb[0].mxu0
  %v3357 = vadd.f32 %v3244, %v3356
  %v3358 = vpop.f32.mrb[0].mxu0
  %v3359 = vadd.f32 %v3246, %v3358
  %v3360 = vpop.f32.mrb[0].mxu0
  %v3361 = vadd.f32 %v3248, %v3360
  %v3362 = vpop.f32.mrb[0].mxu0
  %v3363 = vadd.f32 %v3250, %v3362
  %3364 = vmatprep.mubr.bf16.mxu0 %v2412
  %3365 = vmatmul.mubr.bf16.gmra.mrb[0].mxu0 %v2411
  %v3366 = vpop.f32.mrb[0].mxu0
  %v3367 = vadd.f32 %v3254, %v3366
  %v3368 = vpop.f32.mrb[0].mxu0
  %v3369 = vadd.f32 %v3256, %v3368
  %v3370 = vpop.f32.mrb[0].mxu0
  %v3371 = vadd.f32 %v3258, %v3370
  %v3372 = vpop.f32.mrb[0].mxu0
  %v3373 = vadd.f32 %v3260, %v3372
  %3374 = vmatprep.mubr.bf16.mxu0 %v2419
  %3375 = vmatmul.mubr.bf16.gmra.mrb[0].mxu0 %v2418
  %v3376 = vpop.f32.mrb[0].mxu0
  %v3377 = vadd.f32 %v3264, %v3376
  %v3378 = vpop.f32.mrb[0].mxu0
  %v3379 = vadd.f32 %v3266, %v3378
  %v3380 = vpop.f32.mrb[0].mxu0
  %v3381 = vadd.f32 %v3268, %v3380
  %v3382 = vpop.f32.mrb[0].mxu0
  %v3383 = vadd.f32 %v3270, %v3382
  %3384 = vdwg.mxu0
  %3385 = vmatprep.subr.bf16.mxu0 %v2922
  %3386 = vmatpush1.bf16.msra.mxu0 %v2921
  %3387 = vmatprep.subr.bf16.mxu0 0
  %3388 = vmatpush1.bf16.msra.mxu0 0
  %3389 = vmatprep.subr.bf16.mxu0 0
  %3390 = vmatpush1.bf16.msra.mxu0 0
  %3391 = vmatprep.subr.bf16.mxu0 0
  %3392 = vmatpush1.bf16.msra.mxu0 0
  %3393 = vmatprep.subr.bf16.mxu0 0
  %3394 = vmatpush1.bf16.msra.mxu0 0
  %3395 = vmatprep.subr.bf16.mxu0 0
  %3396 = vmatpush1.bf16.msra.mxu0 0
  %3397 = vmatprep.subr.bf16.mxu0 0
  %3398 = vmatpush1.bf16.msra.mxu0 0
  %3399 = vmatprep.subr.bf16.mxu0 0
  %3400 = vmatpush1.bf16.msra.mxu0 0
  %3401 = vmatprep.subr.bf16.mxu0 0
  %3402 = vmatpush1.bf16.msra.mxu0 0
  %3403 = vmatprep.subr.bf16.mxu0 0
  %3404 = vmatpush1.bf16.msra.mxu0 0
  %3405 = vmatprep.subr.bf16.mxu0 0
  %3406 = vmatpush1.bf16.msra.mxu0 0
  %3407 = vmatprep.subr.bf16.mxu0 0
  %3408 = vmatpush1.bf16.msra.mxu0 0
  %3409 = vmatprep.subr.bf16.mxu0 0
  %3410 = vmatpush1.bf16.msra.mxu0 0
  %3411 = vmatprep.subr.bf16.mxu0 0
  %3412 = vmatpush1.bf16.msra.mxu0 0
  %3413 = vmatprep.subr.bf16.mxu0 0
  %3414 = vmatpush1.bf16.msra.mxu0 0
  %3415 = vmatprep.subr.bf16.mxu0 0
  %3416 = vmatpush1.bf16.msra.mxu0 0
  %3417 = vmatprep.mubr.bf16.mxu0 0
  %3418 = vmatmul.mubr.bf16.gmra.mrb[0].mxu0 %v3023
  %v3419 = vpop.f32.mrb[0].mxu0
  %v3420 = vadd.f32 %v3307, %v3419
  %v3421 = vpop.f32.mrb[0].mxu0
  %v3422 = vadd.f32 %v3309, %v3421
  %v3423 = vpop.f32.mrb[0].mxu0
  %v3424 = vadd.f32 %v3311, %v3423
  %v3425 = vpop.f32.mrb[0].mxu0
  %v3426 = vadd.f32 %v3313, %v3425
  %3427 = vmatprep.mubr.bf16.mxu0 0
  %3428 = vmatmul.mubr.bf16.gmra.mrb[0].mxu0 %v3026
  %v3429 = vpop.f32.mrb[0].mxu0
  %v3430 = vadd.f32 %v3317, %v3429
  %v3431 = vpop.f32.mrb[0].mxu0
  %v3432 = vadd.f32 %v3319, %v3431
  %v3433 = vpop.f32.mrb[0].mxu0
  %v3434 = vadd.f32 %v3321, %v3433
  %v3435 = vpop.f32.mrb[0].mxu0
  %v3436 = vadd.f32 %v3323, %v3435
  %3437 = vmatprep.mubr.bf16.mxu0 0
  %3438 = vmatmul.mubr.bf16.gmra.mrb[0].mxu0 %v3029
  %v3439 = vpop.f32.mrb[0].mxu0
  %v3440 = vadd.f32 %v3327, %v3439
  %v3441 = vpop.f32.mrb[0].mxu0
  %v3442 = vadd.f32 %v3329, %v3441
  %v3443 = vpop.f32.mrb[0].mxu0
  %v3444 = vadd.f32 %v3331, %v3443
  %v3445 = vpop.f32.mrb[0].mxu0
  %v3446 = vadd.f32 %v3333, %v3445
  %3447 = vmatprep.mubr.bf16.mxu0 0
  %3448 = vmatmul.mubr.bf16.gmra.mrb[0].mxu0 %v3032
  %v3449 = vpop.f32.mrb[0].mxu0
  %v3450 = vadd.f32 %v3337, %v3449
  %v3451 = vpop.f32.mrb[0].mxu0
  %v3452 = vadd.f32 %v3339, %v3451
  %v3453 = vpop.f32.mrb[0].mxu0
  %v3454 = vadd.f32 %v3341, %v3453
  %v3455 = vpop.f32.mrb[0].mxu0
  %v3456 = vadd.f32 %v3343, %v3455
  %3457 = vmatprep.mubr.bf16.mxu0 0
  %3458 = vmatmul.mubr.bf16.gmra.mrb[0].mxu0 %v3035
  %v3459 = vpop.f32.mrb[0].mxu0
  %v3460 = vadd.f32 %v3347, %v3459
  %v3461 = vpop.f32.mrb[0].mxu0
  %v3462 = vadd.f32 %v3349, %v3461
  %v3463 = vpop.f32.mrb[0].mxu0
  %v3464 = vadd.f32 %v3351, %v3463
  %v3465 = vpop.f32.mrb[0].mxu0
  %v3466 = vadd.f32 %v3353, %v3465
  %3467 = vmatprep.mubr.bf16.mxu0 0
  %3468 = vmatmul.mubr.bf16.gmra.mrb[0].mxu0 %v3038
  %v3469 = vpop.f32.mrb[0].mxu0
  %v3470 = vadd.f32 %v3357, %v3469
  %v3471 = vpop.f32.mrb[0].mxu0
  %v3472 = vadd.f32 %v3359, %v3471
  %v3473 = vpop.f32.mrb[0].mxu0
  %v3474 = vadd.f32 %v3361, %v3473
  %v3475 = vpop.f32.mrb[0].mxu0
  %v3476 = vadd.f32 %v3363, %v3475
  %3477 = vmatprep.mubr.bf16.mxu0 0
  %3478 = vmatmul.mubr.bf16.gmra.mrb[0].mxu0 %v3041
  %v3479 = vpop.f32.mrb[0].mxu0
  %v3480 = vadd.f32 %v3367, %v3479
  %v3481 = vpop.f32.mrb[0].mxu0
  %v3482 = vadd.f32 %v3369, %v3481
  %v3483 = vpop.f32.mrb[0].mxu0
  %v3484 = vadd.f32 %v3371, %v3483
  %v3485 = vpop.f32.mrb[0].mxu0
  %v3486 = vadd.f32 %v3373, %v3485
  %3487 = vmatprep.mubr.bf16.mxu0 0
  %3488 = vmatmul.mubr.bf16.gmra.mrb[0].mxu0 %v3044
  %v3489 = vpop.f32.mrb[0].mxu0
  %v3490 = vadd.f32 %v3377, %v3489
  %v3491 = vpop.f32.mrb[0].mxu0
  %v3492 = vadd.f32 %v3379, %v3491
  %v3493 = vpop.f32.mrb[0].mxu0
  %v3494 = vadd.f32 %v3381, %v3493
  %v3495 = vpop.f32.mrb[0].mxu0
  %v3496 = vadd.f32 %v3383, %v3495
  %3497 = vdwg.mxu0
  %v3498 = vsub.f32 0.0, %v3420
  %v3499 = vsub.f32 0.0, %v3422
  %v3500 = vsub.f32 0.0, %v3424
  %v3501 = vsub.f32 0.0, %v3426
  %v3502 = vsub.f32 0.0, %v3430
  %v3503 = vsub.f32 0.0, %v3432
  %v3504 = vsub.f32 0.0, %v3434
  %v3505 = vsub.f32 0.0, %v3436
  %v3506 = vsub.f32 0.0, %v3440
  %v3507 = vsub.f32 0.0, %v3442
  %v3508 = vsub.f32 0.0, %v3444
  %v3509 = vsub.f32 0.0, %v3446
  %v3510 = vsub.f32 0.0, %v3450
  %v3511 = vsub.f32 0.0, %v3452
  %v3512 = vsub.f32 0.0, %v3454
  %v3513 = vsub.f32 0.0, %v3456
  %v3514 = vsub.f32 0.0, %v3460
  %v3515 = vsub.f32 0.0, %v3462
  %v3516 = vsub.f32 0.0, %v3464
  %v3517 = vsub.f32 0.0, %v3466
  %v3518 = vsub.f32 0.0, %v3470
  %v3519 = vsub.f32 0.0, %v3472
  %v3520 = vsub.f32 0.0, %v3474
  %v3521 = vsub.f32 0.0, %v3476
  %v3522 = vsub.f32 0.0, %v3480
  %v3523 = vsub.f32 0.0, %v3482
  %v3524 = vsub.f32 0.0, %v3484
  %v3525 = vsub.f32 0.0, %v3486
  %v3526 = vsub.f32 0.0, %v3490
  %v3527 = vsub.f32 0.0, %v3492
  %v3528 = vsub.f32 0.0, %v3494
  %v3529 = vsub.f32 0.0, %v3496
  %v3530 = vmul.f32 %v3498, 1.442695
  %v3531 = vpow.pop %v3530
  %v3532 = vmul.f32 %v3499, 1.442695
  %v3533 = vpow.pop %v3532
  %v3534 = vmul.f32 %v3500, 1.442695
  %v3535 = vpow.pop %v3534
  %v3536 = vmul.f32 %v3501, 1.442695
  %v3537 = vpow.pop %v3536
  %v3538 = vmul.f32 %v3502, 1.442695
  %v3539 = vpow.pop %v3538
  %v3540 = vmul.f32 %v3503, 1.442695
  %v3541 = vpow.pop %v3540
  %v3542 = vmul.f32 %v3504, 1.442695
  %v3543 = vpow.pop %v3542
  %v3544 = vmul.f32 %v3505, 1.442695
  %v3545 = vpow.pop %v3544
  %v3546 = vmul.f32 %v3506, 1.442695
  %v3547 = vpow.pop %v3546
  %v3548 = vmul.f32 %v3507, 1.442695
  %v3549 = vpow.pop %v3548
  %v3550 = vmul.f32 %v3508, 1.442695
  %v3551 = vpow.pop %v3550
  %v3552 = vmul.f32 %v3509, 1.442695
  %v3553 = vpow.pop %v3552
  %v3554 = vmul.f32 %v3510, 1.442695
  %v3555 = vpow.pop %v3554
  %v3556 = vmul.f32 %v3511, 1.442695
  %v3557 = vpow.pop %v3556
  %v3558 = vmul.f32 %v3512, 1.442695
  %v3559 = vpow.pop %v3558
  %v3560 = vmul.f32 %v3513, 1.442695
  %v3561 = vpow.pop %v3560
  %v3562 = vmul.f32 %v3514, 1.442695
  %v3563 = vpow.pop %v3562
  %v3564 = vmul.f32 %v3515, 1.442695
  %v3565 = vpow.pop %v3564
  %v3566 = vmul.f32 %v3516, 1.442695
  %v3567 = vpow.pop %v3566
  %v3568 = vmul.f32 %v3517, 1.442695
  %v3569 = vpow.pop %v3568
  %v3570 = vmul.f32 %v3518, 1.442695
  %v3571 = vpow.pop %v3570
  %v3572 = vmul.f32 %v3519, 1.442695
  %v3573 = vpow.pop %v3572
  %v3574 = vmul.f32 %v3520, 1.442695
  %v3575 = vpow.pop %v3574
  %v3576 = vmul.f32 %v3521, 1.442695
  %v3577 = vpow.pop %v3576
  %v3578 = vmul.f32 %v3522, 1.442695
  %v3579 = vpow.pop %v3578
  %v3580 = vmul.f32 %v3523, 1.442695
  %v3581 = vpow.pop %v3580
  %v3582 = vmul.f32 %v3524, 1.442695
  %v3583 = vpow.pop %v3582
  %v3584 = vmul.f32 %v3525, 1.442695
  %v3585 = vpow.pop %v3584
  %v3586 = vmul.f32 %v3526, 1.442695
  %v3587 = vpow.pop %v3586
  %v3588 = vmul.f32 %v3527, 1.442695
  %v3589 = vpow.pop %v3588
  %v3590 = vmul.f32 %v3528, 1.442695
  %v3591 = vpow.pop %v3590
  %v3592 = vmul.f32 %v3529, 1.442695
  %v3593 = vpow.pop %v3592
  %v3594 = vadd.f32 %v3531, 1.0
  %v3595 = vadd.f32 %v3533, 1.0
  %v3596 = vadd.f32 %v3535, 1.0
  %v3597 = vadd.f32 %v3537, 1.0
  %v3598 = vadd.f32 %v3539, 1.0
  %v3599 = vadd.f32 %v3541, 1.0
  %v3600 = vadd.f32 %v3543, 1.0
  %v3601 = vadd.f32 %v3545, 1.0
  %v3602 = vadd.f32 %v3547, 1.0
  %v3603 = vadd.f32 %v3549, 1.0
  %v3604 = vadd.f32 %v3551, 1.0
  %v3605 = vadd.f32 %v3553, 1.0
  %v3606 = vadd.f32 %v3555, 1.0
  %v3607 = vadd.f32 %v3557, 1.0
  %v3608 = vadd.f32 %v3559, 1.0
  %v3609 = vadd.f32 %v3561, 1.0
  %v3610 = vadd.f32 %v3563, 1.0
  %v3611 = vadd.f32 %v3565, 1.0
  %v3612 = vadd.f32 %v3567, 1.0
  %v3613 = vadd.f32 %v3569, 1.0
  %v3614 = vadd.f32 %v3571, 1.0
  %v3615 = vadd.f32 %v3573, 1.0
  %v3616 = vadd.f32 %v3575, 1.0
  %v3617 = vadd.f32 %v3577, 1.0
  %v3618 = vadd.f32 %v3579, 1.0
  %v3619 = vadd.f32 %v3581, 1.0
  %v3620 = vadd.f32 %v3583, 1.0
  %v3621 = vadd.f32 %v3585, 1.0
  %v3622 = vadd.f32 %v3587, 1.0
  %v3623 = vadd.f32 %v3589, 1.0
  %v3624 = vadd.f32 %v3591, 1.0
  %v3625 = vadd.f32 %v3593, 1.0
  %v3626 = vrcp.pop %v3594
  %v3627 = vrcp.pop %v3595
  %v3628 = vrcp.pop %v3596
  %v3629 = vrcp.pop %v3597
  %v3630 = vrcp.pop %v3598
  %v3631 = vrcp.pop %v3599
  %v3632 = vrcp.pop %v3600
  %v3633 = vrcp.pop %v3601
  %v3634 = vrcp.pop %v3602
  %v3635 = vrcp.pop %v3603
  %v3636 = vrcp.pop %v3604
  %v3637 = vrcp.pop %v3605
  %v3638 = vrcp.pop %v3606
  %v3639 = vrcp.pop %v3607
  %v3640 = vrcp.pop %v3608
  %v3641 = vrcp.pop %v3609
  %v3642 = vrcp.pop %v3610
  %v3643 = vrcp.pop %v3611
  %v3644 = vrcp.pop %v3612
  %v3645 = vrcp.pop %v3613
  %v3646 = vrcp.pop %v3614
  %v3647 = vrcp.pop %v3615
  %v3648 = vrcp.pop %v3616
  %v3649 = vrcp.pop %v3617
  %v3650 = vrcp.pop %v3618
  %v3651 = vrcp.pop %v3619
  %v3652 = vrcp.pop %v3620
  %v3653 = vrcp.pop %v3621
  %v3654 = vrcp.pop %v3622
  %v3655 = vrcp.pop %v3623
  %v3656 = vrcp.pop %v3624
  %v3657 = vrcp.pop %v3625
  %v3658 = vmin.f32 %v3626, 1.0
  %v3659 = vmin.f32 %v3627, 1.0
  %v3660 = vmin.f32 %v3628, 1.0
  %v3661 = vmin.f32 %v3629, 1.0
  %v3662 = vmin.f32 %v3630, 1.0
  %v3663 = vmin.f32 %v3631, 1.0
  %v3664 = vmin.f32 %v3632, 1.0
  %v3665 = vmin.f32 %v3633, 1.0
  %v3666 = vmin.f32 %v3634, 1.0
  %v3667 = vmin.f32 %v3635, 1.0
  %v3668 = vmin.f32 %v3636, 1.0
  %v3669 = vmin.f32 %v3637, 1.0
  %v3670 = vmin.f32 %v3638, 1.0
  %v3671 = vmin.f32 %v3639, 1.0
  %v3672 = vmin.f32 %v3640, 1.0
  %v3673 = vmin.f32 %v3641, 1.0
  %v3674 = vmin.f32 %v3642, 1.0
  %v3675 = vmin.f32 %v3643, 1.0
  %v3676 = vmin.f32 %v3644, 1.0
  %v3677 = vmin.f32 %v3645, 1.0
  %v3678 = vmin.f32 %v3646, 1.0
  %v3679 = vmin.f32 %v3647, 1.0
  %v3680 = vmin.f32 %v3648, 1.0
  %v3681 = vmin.f32 %v3649, 1.0
  %v3682 = vmin.f32 %v3650, 1.0
  %v3683 = vmin.f32 %v3651, 1.0
  %v3684 = vmin.f32 %v3652, 1.0
  %v3685 = vmin.f32 %v3653, 1.0
  %v3686 = vmin.f32 %v3654, 1.0
  %v3687 = vmin.f32 %v3655, 1.0
  %v3688 = vmin.f32 %v3656, 1.0
  %v3689 = vmin.f32 %v3657, 1.0
  %3690 = vst [vmem:[%s9] sm:$0xff] %v3658
  %3691 = vst.msk [vmem:[%s9 + $0x8] sm:$0xff] %vm3021, %v3659
  %3692 = vst [vmem:[%s9 + $0x10] sm:$0xff] %v3660
  %3693 = vst.msk [vmem:[%s9 + $0x18] sm:$0xff] %vm3021, %v3661
  %3694 = vst [vmem:[%s9 + $0x20] sm:$0xff] %v3662
  %3695 = vst.msk [vmem:[%s9 + $0x28] sm:$0xff] %vm3021, %v3663
  %3696 = vst [vmem:[%s9 + $0x30] sm:$0xff] %v3664
  %3697 = vst.msk [vmem:[%s9 + $0x38] sm:$0xff] %vm3021, %v3665
  %3698 = vst [vmem:[%s9 + $0x40] sm:$0xff] %v3666
  %3699 = vst.msk [vmem:[%s9 + $0x48] sm:$0xff] %vm3021, %v3667
  %3700 = vst [vmem:[%s9 + $0x50] sm:$0xff] %v3668
  %3701 = vst.msk [vmem:[%s9 + $0x58] sm:$0xff] %vm3021, %v3669
  %3702 = vst [vmem:[%s9 + $0x60] sm:$0xff] %v3670
  %3703 = vst.msk [vmem:[%s9 + $0x68] sm:$0xff] %vm3021, %v3671
  %3704 = vst [vmem:[%s9 + $0x70] sm:$0xff] %v3672
  %3705 = vst.msk [vmem:[%s9 + $0x78] sm:$0xff] %vm3021, %v3673
  %3706 = vst [vmem:[%s9 + $0x80] sm:$0xff] %v3674
  %3707 = vst.msk [vmem:[%s9 + $0x88] sm:$0xff] %vm3021, %v3675
  %3708 = vst [vmem:[%s9 + $0x90] sm:$0xff] %v3676
  %3709 = vst.msk [vmem:[%s9 + $0x98] sm:$0xff] %vm3021, %v3677
  %3710 = vst [vmem:[%s9 + $0xa0] sm:$0xff] %v3678
  %3711 = vst.msk [vmem:[%s9 + $0xa8] sm:$0xff] %vm3021, %v3679
  %3712 = vst [vmem:[%s9 + $0xb0] sm:$0xff] %v3680
  %3713 = vst.msk [vmem:[%s9 + $0xb8] sm:$0xff] %vm3021, %v3681
  %3714 = vst [vmem:[%s9 + $0xc0] sm:$0xff] %v3682
  %3715 = vst.msk [vmem:[%s9 + $0xc8] sm:$0xff] %vm3021, %v3683
  %3716 = vst [vmem:[%s9 + $0xd0] sm:$0xff] %v3684
  %3717 = vst.msk [vmem:[%s9 + $0xd8] sm:$0xff] %vm3021, %v3685
  %3718 = vst [vmem:[%s9 + $0xe0] sm:$0xff] %v3686
  %3719 = vst.msk [vmem:[%s9 + $0xe8] sm:$0xff] %vm3021, %v3687
  %3720 = vst [vmem:[%s9 + $0xf0] sm:$0xff] %v3688
  %3721 = vst.msk [vmem:[%s9 + $0xf8] sm:$0xff] %vm3021, %v3689
  // Predicated region
  $region38: #{cnn_2d_1d_decoder_forward.1} parent=0 // pred_check
    _
  $region39: #{cnn_2d_1d_decoder_forward.1} parent=0 // pred_check_branch
    %3723 = sbr.rel (0) target = $region41
  $region40: #{cnn_2d_1d_decoder_forward.1} parent=0 // pred_region
    _
  $region41: #{cnn_2d_1d_decoder_forward.1} parent=0 // pred_fallthru
    _
  // Predicated region
  $region42: #{cnn_2d_1d_decoder_forward.1} parent=0 // pred_check
    _
  $region43: #{cnn_2d_1d_decoder_forward.1} parent=0 // pred_check_branch
    %3725 = sbr.rel (0) target = $region45
  $region44: #{cnn_2d_1d_decoder_forward.1} parent=0 // pred_region
    _
  $region45: #{cnn_2d_1d_decoder_forward.1} parent=0 // pred_fallthru
    _

</llo_original>
